<compile_context>
chip_gen: v7x
topology: tpu7x:2x2x1
jax: 0.10.0
libtpu: 0.0.40
codegen_flags: <defaults>
</compile_context>

<pallas_src>
import functools

import jax
import jax.numpy as jnp
from jax.experimental import pallas as pl
from jax.experimental.pallas import tpu as pltpu

NEG_SLOPE = 0.2
EPS = 1e-8


def _resl_block_kernel(x_main_ref,    # VMEM (th_lo, 2w+4, Cin)  bf16  column-doubled low-res rows
                       x_halo_ref,    # VMEM (2,     2w+4, Cin)  bf16  2-row halo below the tile
                       w1_ref,        # VMEM (9*Cin, Cout)       bf16  (wscale folded in)
                       b1_ref,        # VMEM (1, Cout)           f32
                       w2_ref,        # VMEM (9*Cout, Cout)      bf16  (wscale folded in)
                       b2_ref,        # VMEM (1, Cout)           f32
                       o_ref,         # VMEM (Th, W, Cout)       f32   output row tile
                       mid_ref):      # VMEM scratch (Th+2, W+2, Cout) f32
    Th, W, Cout = o_ref.shape
    Cin = x_main_ref.shape[-1]

    r = pl.program_id(1)
    H = pl.num_programs(1) * Th        # total output rows
    R0 = r * Th                        # first output row of this tile

    # ---- in-VMEM 2x nearest upsample (row doubling) of the low-res window ------
    # x_win covers padded-low-res rows [r*th_lo, r*th_lo + th_lo + 2): the tile's
    # rows plus a 2-row halo fetched via the second BlockSpec on the same array.
    # Columns were already doubled (and zero-padded by 2 on each side) in the
    # wrapper, so du is the 2x-upsampled tile with a 2-px zero border.
    x_win = jnp.concatenate([x_main_ref[...], x_halo_ref[...]], axis=0)
    x_win = x_win.astype(jnp.float32)                     # (th_lo+2, W+4, Cin)
    du = jnp.repeat(x_win, 2, axis=0)                     # (Th+4,   W+4, Cin)

    # ---- conv1: 3x3 / pad 1, as 9 shifted matmuls (bf16 operands, f32 acc) -----
    # Conv1 output is computed for rows R0-1 .. R0+Th (a 1-row halo each side,
    # needed by conv2) and the W interior columns.
    M1 = (Th + 2) * W
    acc1 = jnp.zeros((M1, Cout), jnp.float32)
    for dy in range(3):
        for dx in range(3):
            patch = du[dy:dy + Th + 2, dx + 1:dx + 1 + W, :].reshape(M1, Cin)
            wk = w1_ref[(dy * 3 + dx) * Cin:(dy * 3 + dx + 1) * Cin, :]
            acc1 += jnp.dot(patch.astype(jnp.bfloat16), wk,
                            preferred_element_type=jnp.float32)
    acc1 += b1_ref[...]

    # PixelWiseNorm over channels (lane axis) + LeakyReLU(0.2), in f32.
    msq = jnp.mean(acc1 * acc1, axis=-1, keepdims=True)
    act1 = acc1 * jax.lax.rsqrt(msq + EPS)
    act1 = jnp.where(act1 >= 0, act1, NEG_SLOPE * act1)
    act1 = act1.reshape(Th + 2, W, Cout)

    # Halo rows that fall outside the image belong to conv2's zero padding:
    # mask them (branchless, safe under any grid sharding).
    row_g = jax.lax.broadcasted_iota(jnp.int32, (Th + 2, 1, 1), 0) + (R0 - 1)
    act1 = jnp.where((row_g >= 0) & (row_g < H), act1, 0.0)

    # Re-pad columns for conv2: write only the two 1-px border columns + interior
    # (no full-scratch zeroing).
    mid_ref[:, 0:1, :] = jnp.zeros((Th + 2, 1, Cout), jnp.float32)
    mid_ref[:, W + 1:W + 2, :] = jnp.zeros((Th + 2, 1, Cout), jnp.float32)
    mid_ref[:, 1:W + 1, :] = act1

    # ---- conv2: 3x3 / pad 1 ----------------------------------------------------
    M2 = Th * W
    acc2 = jnp.zeros((M2, Cout), jnp.float32)
    for dy in range(3):
        for dx in range(3):
            patch = mid_ref[dy:dy + Th, dx:dx + W, :].reshape(M2, Cout)
            wk = w2_ref[(dy * 3 + dx) * Cout:(dy * 3 + dx + 1) * Cout, :]
            acc2 += jnp.dot(patch.astype(jnp.bfloat16), wk,
                            preferred_element_type=jnp.float32)
    acc2 += b2_ref[...]

    msq2 = jnp.mean(acc2 * acc2, axis=-1, keepdims=True)
    act2 = acc2 * jax.lax.rsqrt(msq2 + EPS)
    act2 = jnp.where(act2 >= 0, act2, NEG_SLOPE * act2)
    o_ref[...] = act2.reshape(Th, W, Cout)


def _pick_row_tile(h, w, cin, cout, budget_bytes=12 * 1024 * 1024):
    """Largest even divisor of h whose per-tile VMEM estimate fits the budget."""
    assert h % 2 == 0, "low-res height must be even"
    W = 2 * w
    candidates = [t for t in range(h, 1, -1) if h % t == 0 and t % 2 == 0]
    for t in candidates:
        Th = 2 * t
        est = (2 * 2 * (t + 2) * (W + 4) * cin        # bf16 input blocks (double-buffered)
               + (Th + 4) * (W + 4) * cin * 4         # upsampled f32 tile
               + (Th + 2) * (W + 2) * cout * 4        # mid scratch
               + 2 * (Th + 2) * W * cout * 4          # conv accumulators
               + 2 * Th * W * cout * 4)               # output block (double-buffered)
        if est <= budget_bytes:
            return t
    return candidates[-1]


@functools.partial(jax.jit, static_argnames=("row_tile",))
def resl_block_forward(x_nchw, w1, b1, s1, w2, b2, s2, row_tile=None):
    """x_nchw: (B, Cin, h, w) f32.  Returns (B, Cout, 2h, 2w) f32."""
    B, Cin, h, w = x_nchw.shape
    Cout = w1.shape[0]
    H, W = 2 * h, 2 * w

    th_lo = _pick_row_tile(h, w, Cin, Cout) if row_tile is None else row_tile
    assert h % th_lo == 0 and th_lo % 2 == 0, (h, th_lo)
    R = h // th_lo                    # row tiles
    Th = 2 * th_lo                    # output rows per tile
    half = th_lo // 2                 # halo block index stride
    W4 = 2 * w + 4                    # column-doubled width (2-px zero border)

    # Glue on the LOW-RES tensor only (cheap): NCHW->NHWC, 1px zero pad,
    # 2x column doubling, bf16.  Row doubling happens inside the kernel.
    x_nhwc = jnp.transpose(x_nchw, (0, 2, 3, 1))                    # (B, h, w, Cin)
    xp = jnp.pad(x_nhwc, ((0, 0), (1, 1), (1, 1), (0, 0)))          # (B, h+2, w+2, Cin)
    xcol = jnp.repeat(xp, 2, axis=2).astype(jnp.bfloat16)           # (B, h+2, W4, Cin)

    # Conv weights OIHW -> (ky,kx,ci)-major x co, wscale folded in, bf16.
    w1f = (jnp.transpose(w1, (2, 3, 1, 0)).reshape(9 * Cin, Cout) * s1).astype(jnp.bfloat16)
    w2f = (jnp.transpose(w2, (2, 3, 1, 0)).reshape(9 * Cout, Cout) * s2).astype(jnp.bfloat16)
    b1_2d = b1.reshape(1, Cout).astype(jnp.float32)
    b2_2d = b2.reshape(1, Cout).astype(jnp.float32)

    out_nhwc = pl.pallas_call(
        _resl_block_kernel,
        out_shape=jax.ShapeDtypeStruct((B, H, W, Cout), jnp.float32),
        grid=(B, R),
        in_specs=[
            # main th_lo rows of the (padded, column-doubled) low-res input
            pl.BlockSpec((pl.Squeezed(), th_lo, W4, Cin),
                         lambda b, r: (b, r, 0, 0)),
            # 2-row halo just below the tile (same array, block row size 2)
            pl.BlockSpec((pl.Squeezed(), 2, W4, Cin),
                         lambda b, r: (b, (r + 1) * half, 0, 0)),
            pl.BlockSpec((9 * Cin, Cout), lambda b, r: (0, 0)),     # w1
            pl.BlockSpec((1, Cout), lambda b, r: (0, 0)),           # b1
            pl.BlockSpec((9 * Cout, Cout), lambda b, r: (0, 0)),    # w2
            pl.BlockSpec((1, Cout), lambda b, r: (0, 0)),           # b2
        ],
        out_specs=pl.BlockSpec((pl.Squeezed(), Th, W, Cout),
                               lambda b, r: (b, r, 0, 0)),
        scratch_shapes=[pltpu.VMEM((Th + 2, W + 2, Cout), jnp.float32)],
        compiler_params=pltpu.CompilerParams(
            dimension_semantics=("parallel", "parallel"),
            vmem_limit_bytes=48 * 1024 * 1024),
    )(xcol, xcol, w1f, b1_2d, w2f, b2_2d)

    # TODO(synk): for W>=128 / small Cout, write the output channel-major from the
    # kernel (lane-dense stores) and drop this transpose.
    return jnp.transpose(out_nhwc, (0, 3, 1, 2))


def init_equalized_conv(key, out_c, in_c):
    """Kaiming-normal init (relu gain) + EqualizedLR reparameterisation."""
    fan_in = in_c * 3 * 3
    std = (2.0 / fan_in) ** 0.5
    w = std * jax.random.normal(key, (out_c, in_c, 3, 3), dtype=jnp.float32)
    wscale = jnp.sqrt(jnp.mean(w * w))
    w = w / wscale
    b = jnp.zeros((out_c,), jnp.float32)
    return w, b, wscale


def reference_forward(x_nchw, w1, b1, s1, w2, b2, s2, match_kernel_precision=False):
    """Pure-JAX reference mirroring the PyTorch module (NCHW).

    With match_kernel_precision=True the conv operands are rounded to bf16
    (same precision choice as the kernel's MXU path); accumulation, bias,
    PixelWiseNorm and LeakyReLU stay in f32 either way.
    """
    up = jnp.repeat(jnp.repeat(x_nchw, 2, axis=2), 2, axis=3)

    def conv(x, w, b, s):
        if match_kernel_precision:
            lhs = x.astype(jnp.bfloat16)
            rhs = (w * s).astype(jnp.bfloat16)
        else:
            lhs = x * s
            rhs = w
        y = jax.lax.conv_general_dilated(
            lhs, rhs, window_strides=(1, 1), padding="SAME",
            dimension_numbers=("NCHW", "OIHW", "NCHW"),
            preferred_element_type=jnp.float32)
        return y + b[None, :, None, None]

    def pixnorm(x):
        m = jnp.mean(x * x, axis=1, keepdims=True)
        return x * jax.lax.rsqrt(m + EPS)

    def lrelu(x):
        return jnp.where(x >= 0, x, NEG_SLOPE * x)

    h = lrelu(pixnorm(conv(up, w1, b1, s1)))
    h = lrelu(pixnorm(conv(h, w2, b2, s2)))
    return h


if __name__ == "__main__":
    # Small deterministic config (like the resl=1024 head: Cin=32, Cout=16).
    in_c, out_c = 32, 16
    B, h, w = 2, 8, 8                 # 8x8 input -> 16x16 output

    key = jax.random.PRNGKey(0)
    kx, k1, k2 = jax.random.split(key, 3)

    x = jax.random.normal(kx, (B, in_c, h, w), dtype=jnp.float32)
    w1, b1, s1 = init_equalized_conv(k1, out_c, in_c)
    w2, b2, s2 = init_equalized_conv(k2, out_c, out_c)

    # row_tile=4 -> 2 row tiles per image: exercises the halo / boundary logic.
    out = resl_block_forward(x, w1, b1, s1, w2, b2, s2, row_tile=4)
    out = jax.block_until_ready(out)
    assert out.shape == (B, out_c, 2 * h, 2 * w), out.shape

    # Tight check vs a reference using the same bf16 MXU-operand precision.
    ref_bf16 = reference_forward(x, w1, b1, s1, w2, b2, s2,
                                 match_kernel_precision=True)
    # Looser sanity check vs the pure-f32 module semantics.
    ref_f32 = reference_forward(x, w1, b1, s1, w2, b2, s2,
                                match_kernel_precision=False)
    ref_bf16, ref_f32 = jax.block_until_ready((ref_bf16, ref_f32))

    assert jnp.allclose(out, ref_bf16, rtol=1e-2, atol=1e-2), float(
        jnp.max(jnp.abs(out - ref_bf16)))
    assert jnp.allclose(out, ref_f32, rtol=5e-2, atol=5e-2), float(
        jnp.max(jnp.abs(out - ref_f32)))

    print("KERNEL_OK")
</pallas_src>

<mosaic_0001>
module attributes {stable_mosaic.version = 11 : i64} {
  func.func @_resl_block_kernel(%arg0: i32, %arg1: i32, %arg2: memref<1x4x20x32xbf16, #tpu.memory_space<vmem>>, %arg3: memref<1x2x20x32xbf16, #tpu.memory_space<vmem>>, %arg4: memref<288x16xbf16, #tpu.memory_space<vmem>>, %arg5: memref<1x16xf32, #tpu.memory_space<vmem>>, %arg6: memref<144x16xbf16, #tpu.memory_space<vmem>>, %arg7: memref<1x16xf32, #tpu.memory_space<vmem>>, %arg8: memref<1x8x16x16xf32, #tpu.memory_space<vmem>>, %arg9: memref<10x18x16xf32, #tpu.memory_space<vmem>>) attributes {dimension_semantics = [#tpu.dimension_semantics<parallel>, #tpu.dimension_semantics<parallel>], iteration_bounds = array<i64: 2, 2>, scalar_prefetch = 0 : i64, scratch_operands = 1 : i64, tpu.core_type = #tpu.core_type<tc>, window_params = [{transform_indices = @transform_0, window_bounds = array<i64: 1, 4, 20, 32>}, {transform_indices = @transform_1, window_bounds = array<i64: 1, 2, 20, 32>}, {pipeline_mode = #tpu.pipeline_mode<synchronous>, transform_indices = @transform_2, window_bounds = array<i64: 288, 16>}, {pipeline_mode = #tpu.pipeline_mode<synchronous>, transform_indices = @transform_3, window_bounds = array<i64: 1, 16>}, {pipeline_mode = #tpu.pipeline_mode<synchronous>, transform_indices = @transform_4, window_bounds = array<i64: 144, 16>}, {pipeline_mode = #tpu.pipeline_mode<synchronous>, transform_indices = @transform_5, window_bounds = array<i64: 1, 16>}, {transform_indices = @transform_6, window_bounds = array<i64: 1, 8, 16, 16>}]} {
    %c8_i32 = arith.constant 8 : i32
    %0 = arith.muli %arg1, %c8_i32 : i32
    %c0 = arith.constant 0 : index
    %c0_0 = arith.constant 0 : index
    %c0_1 = arith.constant 0 : index
    %c0_2 = arith.constant 0 : index
    %1 = vector.load %arg2[%c0, %c0_0, %c0_1, %c0_2] : memref<1x4x20x32xbf16, #tpu.memory_space<vmem>>, vector<1x4x20x32xbf16>
    %2 = vector.shape_cast %1 : vector<1x4x20x32xbf16> to vector<4x20x32xbf16>
    %c0_3 = arith.constant 0 : index
    %c0_4 = arith.constant 0 : index
    %c0_5 = arith.constant 0 : index
    %c0_6 = arith.constant 0 : index
    %3 = vector.load %arg3[%c0_3, %c0_4, %c0_5, %c0_6] : memref<1x2x20x32xbf16, #tpu.memory_space<vmem>>, vector<1x2x20x32xbf16>
    %4 = vector.shape_cast %3 : vector<1x2x20x32xbf16> to vector<2x20x32xbf16>
    %5 = tpu.concatenate %2, %4 in 0 : vector<4x20x32xbf16>, vector<2x20x32xbf16> -> vector<6x20x32xbf16>
    %6 = arith.extf %5 : vector<6x20x32xbf16> to vector<6x20x32xf32>
    %7 = vector.shape_cast %6 : vector<6x20x32xf32> to vector<6x1x20x32xf32>
    %8 = vector.broadcast %7 : vector<6x1x20x32xf32> to vector<6x2x20x32xf32>
    %9 = vector.shape_cast %8 : vector<6x2x20x32xf32> to vector<12x20x32xf32>
    %cst = arith.constant 0.000000e+00 : f32
    %10 = vector.broadcast %cst : f32 to vector<160x16xf32>
    %11 = vector.extract_strided_slice %9 {offsets = [0, 1, 0], sizes = [10, 16, 32], strides = [1, 1, 1]} : vector<12x20x32xf32> to vector<10x16x32xf32>
    %12 = vector.shape_cast %11 : vector<10x16x32xf32> to vector<160x32xf32>
    %c0_7 = arith.constant 0 : index
    %c0_8 = arith.constant 0 : index
    %13 = vector.load %arg4[%c0_7, %c0_8] : memref<288x16xbf16, #tpu.memory_space<vmem>>, vector<32x16xbf16>
    %14 = arith.truncf %12 : vector<160x32xf32> to vector<160x32xbf16>
    %cst_9 = arith.constant dense<0.000000e+00> : vector<160x16xf32>
    %15 = tpu.matmul %14, %13, %cst_9 {dimension_numbers = #tpu.dot_dimension_numbers<[1], [0], [0], [1], [0, 0, 1, 1], [], []>} : vector<160x32xbf16>, vector<32x16xbf16>, vector<160x16xf32> -> vector<160x16xf32>
    %16 = arith.addf %10, %15 : vector<160x16xf32>
    %17 = vector.extract_strided_slice %9 {offsets = [0, 2, 0], sizes = [10, 16, 32], strides = [1, 1, 1]} : vector<12x20x32xf32> to vector<10x16x32xf32>
    %18 = vector.shape_cast %17 : vector<10x16x32xf32> to vector<160x32xf32>
    %c32 = arith.constant 32 : index
    %c0_10 = arith.constant 0 : index
    %19 = vector.load %arg4[%c32, %c0_10] : memref<288x16xbf16, #tpu.memory_space<vmem>>, vector<32x16xbf16>
    %20 = arith.truncf %18 : vector<160x32xf32> to vector<160x32xbf16>
    %cst_11 = arith.constant dense<0.000000e+00> : vector<160x16xf32>
    %21 = tpu.matmul %20, %19, %cst_11 {dimension_numbers = #tpu.dot_dimension_numbers<[1], [0], [0], [1], [0, 0, 1, 1], [], []>} : vector<160x32xbf16>, vector<32x16xbf16>, vector<160x16xf32> -> vector<160x16xf32>
    %22 = arith.addf %16, %21 : vector<160x16xf32>
    %23 = vector.extract_strided_slice %9 {offsets = [0, 3, 0], sizes = [10, 16, 32], strides = [1, 1, 1]} : vector<12x20x32xf32> to vector<10x16x32xf32>
    %24 = vector.shape_cast %23 : vector<10x16x32xf32> to vector<160x32xf32>
    %c64 = arith.constant 64 : index
    %c0_12 = arith.constant 0 : index
    %25 = vector.load %arg4[%c64, %c0_12] : memref<288x16xbf16, #tpu.memory_space<vmem>>, vector<32x16xbf16>
    %26 = arith.truncf %24 : vector<160x32xf32> to vector<160x32xbf16>
    %cst_13 = arith.constant dense<0.000000e+00> : vector<160x16xf32>
    %27 = tpu.matmul %26, %25, %cst_13 {dimension_numbers = #tpu.dot_dimension_numbers<[1], [0], [0], [1], [0, 0, 1, 1], [], []>} : vector<160x32xbf16>, vector<32x16xbf16>, vector<160x16xf32> -> vector<160x16xf32>
    %28 = arith.addf %22, %27 : vector<160x16xf32>
    %29 = vector.extract_strided_slice %9 {offsets = [1, 1, 0], sizes = [10, 16, 32], strides = [1, 1, 1]} : vector<12x20x32xf32> to vector<10x16x32xf32>
    %30 = vector.shape_cast %29 : vector<10x16x32xf32> to vector<160x32xf32>
    %c96 = arith.constant 96 : index
    %c0_14 = arith.constant 0 : index
    %31 = vector.load %arg4[%c96, %c0_14] : memref<288x16xbf16, #tpu.memory_space<vmem>>, vector<32x16xbf16>
    %32 = arith.truncf %30 : vector<160x32xf32> to vector<160x32xbf16>
    %cst_15 = arith.constant dense<0.000000e+00> : vector<160x16xf32>
    %33 = tpu.matmul %32, %31, %cst_15 {dimension_numbers = #tpu.dot_dimension_numbers<[1], [0], [0], [1], [0, 0, 1, 1], [], []>} : vector<160x32xbf16>, vector<32x16xbf16>, vector<160x16xf32> -> vector<160x16xf32>
    %34 = arith.addf %28, %33 : vector<160x16xf32>
    %35 = vector.extract_strided_slice %9 {offsets = [1, 2, 0], sizes = [10, 16, 32], strides = [1, 1, 1]} : vector<12x20x32xf32> to vector<10x16x32xf32>
    %36 = vector.shape_cast %35 : vector<10x16x32xf32> to vector<160x32xf32>
    %c128 = arith.constant 128 : index
    %c0_16 = arith.constant 0 : index
    %37 = vector.load %arg4[%c128, %c0_16] : memref<288x16xbf16, #tpu.memory_space<vmem>>, vector<32x16xbf16>
    %38 = arith.truncf %36 : vector<160x32xf32> to vector<160x32xbf16>
    %cst_17 = arith.constant dense<0.000000e+00> : vector<160x16xf32>
    %39 = tpu.matmul %38, %37, %cst_17 {dimension_numbers = #tpu.dot_dimension_numbers<[1], [0], [0], [1], [0, 0, 1, 1], [], []>} : vector<160x32xbf16>, vector<32x16xbf16>, vector<160x16xf32> -> vector<160x16xf32>
    %40 = arith.addf %34, %39 : vector<160x16xf32>
    %41 = vector.extract_strided_slice %9 {offsets = [1, 3, 0], sizes = [10, 16, 32], strides = [1, 1, 1]} : vector<12x20x32xf32> to vector<10x16x32xf32>
    %42 = vector.shape_cast %41 : vector<10x16x32xf32> to vector<160x32xf32>
    %c160 = arith.constant 160 : index
    %c0_18 = arith.constant 0 : index
    %43 = vector.load %arg4[%c160, %c0_18] : memref<288x16xbf16, #tpu.memory_space<vmem>>, vector<32x16xbf16>
    %44 = arith.truncf %42 : vector<160x32xf32> to vector<160x32xbf16>
    %cst_19 = arith.constant dense<0.000000e+00> : vector<160x16xf32>
    %45 = tpu.matmul %44, %43, %cst_19 {dimension_numbers = #tpu.dot_dimension_numbers<[1], [0], [0], [1], [0, 0, 1, 1], [], []>} : vector<160x32xbf16>, vector<32x16xbf16>, vector<160x16xf32> -> vector<160x16xf32>
    %46 = arith.addf %40, %45 : vector<160x16xf32>
    %47 = vector.extract_strided_slice %9 {offsets = [2, 1, 0], sizes = [10, 16, 32], strides = [1, 1, 1]} : vector<12x20x32xf32> to vector<10x16x32xf32>
    %48 = vector.shape_cast %47 : vector<10x16x32xf32> to vector<160x32xf32>
    %c192 = arith.constant 192 : index
    %c0_20 = arith.constant 0 : index
    %49 = vector.load %arg4[%c192, %c0_20] : memref<288x16xbf16, #tpu.memory_space<vmem>>, vector<32x16xbf16>
    %50 = arith.truncf %48 : vector<160x32xf32> to vector<160x32xbf16>
    %cst_21 = arith.constant dense<0.000000e+00> : vector<160x16xf32>
    %51 = tpu.matmul %50, %49, %cst_21 {dimension_numbers = #tpu.dot_dimension_numbers<[1], [0], [0], [1], [0, 0, 1, 1], [], []>} : vector<160x32xbf16>, vector<32x16xbf16>, vector<160x16xf32> -> vector<160x16xf32>
    %52 = arith.addf %46, %51 : vector<160x16xf32>
    %53 = vector.extract_strided_slice %9 {offsets = [2, 2, 0], sizes = [10, 16, 32], strides = [1, 1, 1]} : vector<12x20x32xf32> to vector<10x16x32xf32>
    %54 = vector.shape_cast %53 : vector<10x16x32xf32> to vector<160x32xf32>
    %c224 = arith.constant 224 : index
    %c0_22 = arith.constant 0 : index
    %55 = vector.load %arg4[%c224, %c0_22] : memref<288x16xbf16, #tpu.memory_space<vmem>>, vector<32x16xbf16>
    %56 = arith.truncf %54 : vector<160x32xf32> to vector<160x32xbf16>
    %cst_23 = arith.constant dense<0.000000e+00> : vector<160x16xf32>
    %57 = tpu.matmul %56, %55, %cst_23 {dimension_numbers = #tpu.dot_dimension_numbers<[1], [0], [0], [1], [0, 0, 1, 1], [], []>} : vector<160x32xbf16>, vector<32x16xbf16>, vector<160x16xf32> -> vector<160x16xf32>
    %58 = arith.addf %52, %57 : vector<160x16xf32>
    %59 = vector.extract_strided_slice %9 {offsets = [2, 3, 0], sizes = [10, 16, 32], strides = [1, 1, 1]} : vector<12x20x32xf32> to vector<10x16x32xf32>
    %60 = vector.shape_cast %59 : vector<10x16x32xf32> to vector<160x32xf32>
    %c256 = arith.constant 256 : index
    %c0_24 = arith.constant 0 : index
    %61 = vector.load %arg4[%c256, %c0_24] : memref<288x16xbf16, #tpu.memory_space<vmem>>, vector<32x16xbf16>
    %62 = arith.truncf %60 : vector<160x32xf32> to vector<160x32xbf16>
    %cst_25 = arith.constant dense<0.000000e+00> : vector<160x16xf32>
    %63 = tpu.matmul %62, %61, %cst_25 {dimension_numbers = #tpu.dot_dimension_numbers<[1], [0], [0], [1], [0, 0, 1, 1], [], []>} : vector<160x32xbf16>, vector<32x16xbf16>, vector<160x16xf32> -> vector<160x16xf32>
    %64 = arith.addf %58, %63 : vector<160x16xf32>
    %c0_26 = arith.constant 0 : index
    %c0_27 = arith.constant 0 : index
    %65 = vector.load %arg5[%c0_26, %c0_27] : memref<1x16xf32, #tpu.memory_space<vmem>>, vector<1x16xf32>
    %66 = vector.broadcast %65 : vector<1x16xf32> to vector<160x16xf32>
    %67 = arith.addf %64, %66 : vector<160x16xf32>
    %68 = arith.mulf %67, %67 : vector<160x16xf32>
    %cst_28 = arith.constant dense<0.000000e+00> : vector<160xf32>
    %69 = vector.multi_reduction <add>, %68, %cst_28 [1] : vector<160x16xf32> to vector<160xf32>
    %70 = vector.shape_cast %69 : vector<160xf32> to vector<160x1xf32>
    %cst_29 = arith.constant 1.600000e+01 : f32
    %71 = vector.broadcast %cst_29 : f32 to vector<160x1xf32>
    %72 = arith.divf %70, %71 : vector<160x1xf32>
    %cst_30 = arith.constant 9.99999993E-9 : f32
    %73 = vector.broadcast %cst_30 : f32 to vector<160x1xf32>
    %74 = arith.addf %72, %73 : vector<160x1xf32>
    %75 = math.rsqrt %74 : vector<160x1xf32>
    %76 = vector.broadcast %75 : vector<160x1xf32> to vector<160x16xf32>
    %77 = arith.mulf %67, %76 : vector<160x16xf32>
    %cst_31 = arith.constant 0.000000e+00 : f32
    %78 = vector.broadcast %cst_31 : f32 to vector<160x16xf32>
    %79 = arith.cmpf oge, %77, %78 : vector<160x16xf32>
    %cst_32 = arith.constant 2.000000e-01 : f32
    %80 = vector.broadcast %cst_32 : f32 to vector<160x16xf32>
    %81 = arith.mulf %80, %77 : vector<160x16xf32>
    %82 = arith.select %79, %77, %81 : vector<160x16xi1>, vector<160x16xf32>
    %83 = vector.shape_cast %82 : vector<160x16xf32> to vector<10x16x16xf32>
    %84 = tpu.iota {dimensions = array<i32: 0>} : vector<10x1x1xi32>
    %c1_i32 = arith.constant 1 : i32
    %85 = arith.subi %0, %c1_i32 : i32
    %86 = vector.broadcast %85 : i32 to vector<10x1x1xi32>
    %87 = arith.addi %84, %86 : vector<10x1x1xi32>
    %c0_i32 = arith.constant 0 : i32
    %88 = vector.broadcast %c0_i32 : i32 to vector<10x1x1xi32>
    %89 = arith.cmpi sge, %87, %88 : vector<10x1x1xi32>
    %c16_i32 = arith.constant 16 : i32
    %90 = vector.broadcast %c16_i32 : i32 to vector<10x1x1xi32>
    %91 = arith.cmpi slt, %87, %90 : vector<10x1x1xi32>
    %92 = arith.andi %89, %91 : vector<10x1x1xi1>
    %cst_33 = arith.constant 0.000000e+00 : f32
    %93 = vector.shape_cast %92 : vector<10x1x1xi1> to vector<10x1x1xi1>
    %94 = vector.broadcast %93 : vector<10x1x1xi1> to vector<10x16x16xi1>
    %95 = vector.broadcast %cst_33 : f32 to vector<10x16x16xf32>
    %96 = arith.select %94, %83, %95 : vector<10x16x16xi1>, vector<10x16x16xf32>
    %cst_34 = arith.constant 0.000000e+00 : f32
    %97 = vector.broadcast %cst_34 : f32 to vector<10x1x16xf32>
    %c0_35 = arith.constant 0 : index
    %c0_36 = arith.constant 0 : index
    %c0_37 = arith.constant 0 : index
    %98 = vector.load %arg9[%c0_35, %c0_36, %c0_37] : memref<10x18x16xf32, #tpu.memory_space<vmem>>, vector<10x1x16xf32>
    tpu.vector_store %arg9[%c0_35, %c0_36, %c0_37], %97 {strides = array<i32>} : memref<10x18x16xf32, #tpu.memory_space<vmem>>, vector<10x1x16xf32>,
    %cst_38 = arith.constant 0.000000e+00 : f32
    %99 = vector.broadcast %cst_38 : f32 to vector<10x1x16xf32>
    %c0_39 = arith.constant 0 : index
    %c17 = arith.constant 17 : index
    %c0_40 = arith.constant 0 : index
    %100 = vector.load %arg9[%c0_39, %c17, %c0_40] : memref<10x18x16xf32, #tpu.memory_space<vmem>>, vector<10x1x16xf32>
    tpu.vector_store %arg9[%c0_39, %c17, %c0_40], %99 {strides = array<i32>} : memref<10x18x16xf32, #tpu.memory_space<vmem>>, vector<10x1x16xf32>,
    %c0_41 = arith.constant 0 : index
    %c1 = arith.constant 1 : index
    %c0_42 = arith.constant 0 : index
    %101 = vector.load %arg9[%c0_41, %c1, %c0_42] : memref<10x18x16xf32, #tpu.memory_space<vmem>>, vector<10x16x16xf32>
    tpu.vector_store %arg9[%c0_41, %c1, %c0_42], %96 {strides = array<i32>} : memref<10x18x16xf32, #tpu.memory_space<vmem>>, vector<10x16x16xf32>,
    %cst_43 = arith.constant 0.000000e+00 : f32
    %102 = vector.broadcast %cst_43 : f32 to vector<128x16xf32>
    %c0_44 = arith.constant 0 : index
    %c0_45 = arith.constant 0 : index
    %c0_46 = arith.constant 0 : index
    %103 = vector.load %arg9[%c0_44, %c0_45, %c0_46] : memref<10x18x16xf32, #tpu.memory_space<vmem>>, vector<8x16x16xf32>
    %104 = vector.shape_cast %103 : vector<8x16x16xf32> to vector<128x16xf32>
    %c0_47 = arith.constant 0 : index
    %c0_48 = arith.constant 0 : index
    %105 = vector.load %arg6[%c0_47, %c0_48] : memref<144x16xbf16, #tpu.memory_space<vmem>>, vector<16x16xbf16>
    %106 = arith.truncf %104 : vector<128x16xf32> to vector<128x16xbf16>
    %cst_49 = arith.constant dense<0.000000e+00> : vector<128x16xf32>
    %107 = tpu.matmul %106, %105, %cst_49 {dimension_numbers = #tpu.dot_dimension_numbers<[1], [0], [0], [1], [0, 0, 1, 1], [], []>} : vector<128x16xbf16>, vector<16x16xbf16>, vector<128x16xf32> -> vector<128x16xf32>
    %108 = arith.addf %102, %107 : vector<128x16xf32>
    %c0_50 = arith.constant 0 : index
    %c1_51 = arith.constant 1 : index
    %c0_52 = arith.constant 0 : index
    %109 = vector.load %arg9[%c0_50, %c1_51, %c0_52] : memref<10x18x16xf32, #tpu.memory_space<vmem>>, vector<8x16x16xf32>
    %110 = vector.shape_cast %109 : vector<8x16x16xf32> to vector<128x16xf32>
    %c16 = arith.constant 16 : index
    %c0_53 = arith.constant 0 : index
    %111 = vector.load %arg6[%c16, %c0_53] : memref<144x16xbf16, #tpu.memory_space<vmem>>, vector<16x16xbf16>
    %112 = arith.truncf %110 : vector<128x16xf32> to vector<128x16xbf16>
    %cst_54 = arith.constant dense<0.000000e+00> : vector<128x16xf32>
    %113 = tpu.matmul %112, %111, %cst_54 {dimension_numbers = #tpu.dot_dimension_numbers<[1], [0], [0], [1], [0, 0, 1, 1], [], []>} : vector<128x16xbf16>, vector<16x16xbf16>, vector<128x16xf32> -> vector<128x16xf32>
    %114 = arith.addf %108, %113 : vector<128x16xf32>
    %c0_55 = arith.constant 0 : index
    %c2 = arith.constant 2 : index
    %c0_56 = arith.constant 0 : index
    %115 = vector.load %arg9[%c0_55, %c2, %c0_56] : memref<10x18x16xf32, #tpu.memory_space<vmem>>, vector<8x16x16xf32>
    %116 = vector.shape_cast %115 : vector<8x16x16xf32> to vector<128x16xf32>
    %c32_57 = arith.constant 32 : index
    %c0_58 = arith.constant 0 : index
    %117 = vector.load %arg6[%c32_57, %c0_58] : memref<144x16xbf16, #tpu.memory_space<vmem>>, vector<16x16xbf16>
    %118 = arith.truncf %116 : vector<128x16xf32> to vector<128x16xbf16>
    %cst_59 = arith.constant dense<0.000000e+00> : vector<128x16xf32>
    %119 = tpu.matmul %118, %117, %cst_59 {dimension_numbers = #tpu.dot_dimension_numbers<[1], [0], [0], [1], [0, 0, 1, 1], [], []>} : vector<128x16xbf16>, vector<16x16xbf16>, vector<128x16xf32> -> vector<128x16xf32>
    %120 = arith.addf %114, %119 : vector<128x16xf32>
    %c1_60 = arith.constant 1 : index
    %c0_61 = arith.constant 0 : index
    %c0_62 = arith.constant 0 : index
    %121 = vector.load %arg9[%c1_60, %c0_61, %c0_62] : memref<10x18x16xf32, #tpu.memory_space<vmem>>, vector<8x16x16xf32>
    %122 = vector.shape_cast %121 : vector<8x16x16xf32> to vector<128x16xf32>
    %c48 = arith.constant 48 : index
    %c0_63 = arith.constant 0 : index
    %123 = vector.load %arg6[%c48, %c0_63] : memref<144x16xbf16, #tpu.memory_space<vmem>>, vector<16x16xbf16>
    %124 = arith.truncf %122 : vector<128x16xf32> to vector<128x16xbf16>
    %cst_64 = arith.constant dense<0.000000e+00> : vector<128x16xf32>
    %125 = tpu.matmul %124, %123, %cst_64 {dimension_numbers = #tpu.dot_dimension_numbers<[1], [0], [0], [1], [0, 0, 1, 1], [], []>} : vector<128x16xbf16>, vector<16x16xbf16>, vector<128x16xf32> -> vector<128x16xf32>
    %126 = arith.addf %120, %125 : vector<128x16xf32>
    %c1_65 = arith.constant 1 : index
    %c1_66 = arith.constant 1 : index
    %c0_67 = arith.constant 0 : index
    %127 = vector.load %arg9[%c1_65, %c1_66, %c0_67] : memref<10x18x16xf32, #tpu.memory_space<vmem>>, vector<8x16x16xf32>
    %128 = vector.shape_cast %127 : vector<8x16x16xf32> to vector<128x16xf32>
    %c64_68 = arith.constant 64 : index
    %c0_69 = arith.constant 0 : index
    %129 = vector.load %arg6[%c64_68, %c0_69] : memref<144x16xbf16, #tpu.memory_space<vmem>>, vector<16x16xbf16>
    %130 = arith.truncf %128 : vector<128x16xf32> to vector<128x16xbf16>
    %cst_70 = arith.constant dense<0.000000e+00> : vector<128x16xf32>
    %131 = tpu.matmul %130, %129, %cst_70 {dimension_numbers = #tpu.dot_dimension_numbers<[1], [0], [0], [1], [0, 0, 1, 1], [], []>} : vector<128x16xbf16>, vector<16x16xbf16>, vector<128x16xf32> -> vector<128x16xf32>
    %132 = arith.addf %126, %131 : vector<128x16xf32>
    %c1_71 = arith.constant 1 : index
    %c2_72 = arith.constant 2 : index
    %c0_73 = arith.constant 0 : index
    %133 = vector.load %arg9[%c1_71, %c2_72, %c0_73] : memref<10x18x16xf32, #tpu.memory_space<vmem>>, vector<8x16x16xf32>
    %134 = vector.shape_cast %133 : vector<8x16x16xf32> to vector<128x16xf32>
    %c80 = arith.constant 80 : index
    %c0_74 = arith.constant 0 : index
    %135 = vector.load %arg6[%c80, %c0_74] : memref<144x16xbf16, #tpu.memory_space<vmem>>, vector<16x16xbf16>
    %136 = arith.truncf %134 : vector<128x16xf32> to vector<128x16xbf16>
    %cst_75 = arith.constant dense<0.000000e+00> : vector<128x16xf32>
    %137 = tpu.matmul %136, %135, %cst_75 {dimension_numbers = #tpu.dot_dimension_numbers<[1], [0], [0], [1], [0, 0, 1, 1], [], []>} : vector<128x16xbf16>, vector<16x16xbf16>, vector<128x16xf32> -> vector<128x16xf32>
    %138 = arith.addf %132, %137 : vector<128x16xf32>
    %c2_76 = arith.constant 2 : index
    %c0_77 = arith.constant 0 : index
    %c0_78 = arith.constant 0 : index
    %139 = vector.load %arg9[%c2_76, %c0_77, %c0_78] : memref<10x18x16xf32, #tpu.memory_space<vmem>>, vector<8x16x16xf32>
    %140 = vector.shape_cast %139 : vector<8x16x16xf32> to vector<128x16xf32>
    %c96_79 = arith.constant 96 : index
    %c0_80 = arith.constant 0 : index
    %141 = vector.load %arg6[%c96_79, %c0_80] : memref<144x16xbf16, #tpu.memory_space<vmem>>, vector<16x16xbf16>
    %142 = arith.truncf %140 : vector<128x16xf32> to vector<128x16xbf16>
    %cst_81 = arith.constant dense<0.000000e+00> : vector<128x16xf32>
    %143 = tpu.matmul %142, %141, %cst_81 {dimension_numbers = #tpu.dot_dimension_numbers<[1], [0], [0], [1], [0, 0, 1, 1], [], []>} : vector<128x16xbf16>, vector<16x16xbf16>, vector<128x16xf32> -> vector<128x16xf32>
    %144 = arith.addf %138, %143 : vector<128x16xf32>
    %c2_82 = arith.constant 2 : index
    %c1_83 = arith.constant 1 : index
    %c0_84 = arith.constant 0 : index
    %145 = vector.load %arg9[%c2_82, %c1_83, %c0_84] : memref<10x18x16xf32, #tpu.memory_space<vmem>>, vector<8x16x16xf32>
    %146 = vector.shape_cast %145 : vector<8x16x16xf32> to vector<128x16xf32>
    %c112 = arith.constant 112 : index
    %c0_85 = arith.constant 0 : index
    %147 = vector.load %arg6[%c112, %c0_85] : memref<144x16xbf16, #tpu.memory_space<vmem>>, vector<16x16xbf16>
    %148 = arith.truncf %146 : vector<128x16xf32> to vector<128x16xbf16>
    %cst_86 = arith.constant dense<0.000000e+00> : vector<128x16xf32>
    %149 = tpu.matmul %148, %147, %cst_86 {dimension_numbers = #tpu.dot_dimension_numbers<[1], [0], [0], [1], [0, 0, 1, 1], [], []>} : vector<128x16xbf16>, vector<16x16xbf16>, vector<128x16xf32> -> vector<128x16xf32>
    %150 = arith.addf %144, %149 : vector<128x16xf32>
    %c2_87 = arith.constant 2 : index
    %c2_88 = arith.constant 2 : index
    %c0_89 = arith.constant 0 : index
    %151 = vector.load %arg9[%c2_87, %c2_88, %c0_89] : memref<10x18x16xf32, #tpu.memory_space<vmem>>, vector<8x16x16xf32>
    %152 = vector.shape_cast %151 : vector<8x16x16xf32> to vector<128x16xf32>
    %c128_90 = arith.constant 128 : index
    %c0_91 = arith.constant 0 : index
    %153 = vector.load %arg6[%c128_90, %c0_91] : memref<144x16xbf16, #tpu.memory_space<vmem>>, vector<16x16xbf16>
    %154 = arith.truncf %152 : vector<128x16xf32> to vector<128x16xbf16>
    %cst_92 = arith.constant dense<0.000000e+00> : vector<128x16xf32>
    %155 = tpu.matmul %154, %153, %cst_92 {dimension_numbers = #tpu.dot_dimension_numbers<[1], [0], [0], [1], [0, 0, 1, 1], [], []>} : vector<128x16xbf16>, vector<16x16xbf16>, vector<128x16xf32> -> vector<128x16xf32>
    %156 = arith.addf %150, %155 : vector<128x16xf32>
    %c0_93 = arith.constant 0 : index
    %c0_94 = arith.constant 0 : index
    %157 = vector.load %arg7[%c0_93, %c0_94] : memref<1x16xf32, #tpu.memory_space<vmem>>, vector<1x16xf32>
    %158 = vector.broadcast %157 : vector<1x16xf32> to vector<128x16xf32>
    %159 = arith.addf %156, %158 : vector<128x16xf32>
    %160 = arith.mulf %159, %159 : vector<128x16xf32>
    %cst_95 = arith.constant dense<0.000000e+00> : vector<128xf32>
    %161 = vector.multi_reduction <add>, %160, %cst_95 [1] : vector<128x16xf32> to vector<128xf32>
    %162 = vector.shape_cast %161 : vector<128xf32> to vector<128x1xf32>
    %cst_96 = arith.constant 1.600000e+01 : f32
    %163 = vector.broadcast %cst_96 : f32 to vector<128x1xf32>
    %164 = arith.divf %162, %163 : vector<128x1xf32>
    %cst_97 = arith.constant 9.99999993E-9 : f32
    %165 = vector.broadcast %cst_97 : f32 to vector<128x1xf32>
    %166 = arith.addf %164, %165 : vector<128x1xf32>
    %167 = math.rsqrt %166 : vector<128x1xf32>
    %168 = vector.broadcast %167 : vector<128x1xf32> to vector<128x16xf32>
    %169 = arith.mulf %159, %168 : vector<128x16xf32>
    %cst_98 = arith.constant 0.000000e+00 : f32
    %170 = vector.broadcast %cst_98 : f32 to vector<128x16xf32>
    %171 = arith.cmpf oge, %169, %170 : vector<128x16xf32>
    %cst_99 = arith.constant 2.000000e-01 : f32
    %172 = vector.broadcast %cst_99 : f32 to vector<128x16xf32>
    %173 = arith.mulf %172, %169 : vector<128x16xf32>
    %174 = arith.select %171, %169, %173 : vector<128x16xi1>, vector<128x16xf32>
    %175 = vector.shape_cast %174 : vector<128x16xf32> to vector<8x16x16xf32>
    %c0_100 = arith.constant 0 : index
    %c0_101 = arith.constant 0 : index
    %c0_102 = arith.constant 0 : index
    %c0_103 = arith.constant 0 : index
    %176 = vector.load %arg8[%c0_100, %c0_101, %c0_102, %c0_103] : memref<1x8x16x16xf32, #tpu.memory_space<vmem>>, vector<1x8x16x16xf32>
    %177 = vector.shape_cast %176 : vector<1x8x16x16xf32> to vector<8x16x16xf32>
    %178 = vector.shape_cast %175 : vector<8x16x16xf32> to vector<1x8x16x16xf32>
    tpu.vector_store %arg8[%c0_100, %c0_101, %c0_102, %c0_103], %178 {strides = array<i32>} : memref<1x8x16x16xf32, #tpu.memory_space<vmem>>, vector<1x8x16x16xf32>,
    return
  }
  func.func @transform_0(%arg0: i32, %arg1: i32) -> (i32, i32, i32, i32) {
    %c0_i32 = arith.constant 0 : i32
    %c0_i32_0 = arith.constant 0 : i32
    %c0_i32_1 = arith.constant 0 : i32
    return %arg0, %arg1, %c0_i32, %c0_i32_0 : i32, i32, i32, i32
  }
  func.func @transform_1(%arg0: i32, %arg1: i32) -> (i32, i32, i32, i32) {
    %c1_i32 = arith.constant 1 : i32
    %0 = arith.addi %arg1, %c1_i32 : i32
    %c2_i32 = arith.constant 2 : i32
    %1 = arith.muli %0, %c2_i32 : i32
    %c0_i32 = arith.constant 0 : i32
    %c0_i32_0 = arith.constant 0 : i32
    %c0_i32_1 = arith.constant 0 : i32
    return %arg0, %1, %c0_i32, %c0_i32_0 : i32, i32, i32, i32
  }
  func.func @transform_2(%arg0: i32, %arg1: i32) -> (i32, i32) {
    %c0_i32 = arith.constant 0 : i32
    %c0_i32_0 = arith.constant 0 : i32
    %c0_i32_1 = arith.constant 0 : i32
    return %c0_i32, %c0_i32_0 : i32, i32
  }
  func.func @transform_3(%arg0: i32, %arg1: i32) -> (i32, i32) {
    %c0_i32 = arith.constant 0 : i32
    %c0_i32_0 = arith.constant 0 : i32
    %c0_i32_1 = arith.constant 0 : i32
    return %c0_i32, %c0_i32_0 : i32, i32
  }
  func.func @transform_4(%arg0: i32, %arg1: i32) -> (i32, i32) {
    %c0_i32 = arith.constant 0 : i32
    %c0_i32_0 = arith.constant 0 : i32
    %c0_i32_1 = arith.constant 0 : i32
    return %c0_i32, %c0_i32_0 : i32, i32
  }
  func.func @transform_5(%arg0: i32, %arg1: i32) -> (i32, i32) {
    %c0_i32 = arith.constant 0 : i32
    %c0_i32_0 = arith.constant 0 : i32
    %c0_i32_1 = arith.constant 0 : i32
    return %c0_i32, %c0_i32_0 : i32, i32
  }
  func.func @transform_6(%arg0: i32, %arg1: i32) -> (i32, i32, i32, i32) {
    %c0_i32 = arith.constant 0 : i32
    %c0_i32_0 = arith.constant 0 : i32
    %c0_i32_1 = arith.constant 0 : i32
    return %arg0, %arg1, %c0_i32, %c0_i32_0 : i32, i32, i32, i32
  }
}

</mosaic_0001>

<llo_original>
// kernel: resl_block_forward.1
$region0: #{resl_block_forward.1}
  #allocation0 [shape = 'u32[]', space=smem, size = 0x4, offset = 0x4, fixed_abs, tag = 'smem constant byte address 0x4 - core index']
  #allocation1 [shape = 'u32[144,128]{1,0:T(1,128)}', space=vmem, size = 0x12000, scoped, tag = 'internal scratch']
  #allocation2 [shape = 'f32[10,18,16]{2,1,0:T(8,128)}', space=vmem, size = 0x1e000, scoped, tag = 'scratch operand']
  %s0 = inlined_call_operand.vmem [shape: bf16[2,10,20,32], index: 0, kind: input, shape index: {}, may-alias: {0,1}]
  %s1 = inlined_call_operand.vmem [shape: bf16[2,10,20,32], index: 1, kind: input, shape index: {}, may-alias: {0,1}]
  %s2 = inlined_call_operand.vmem [shape: bf16[288,16], index: 2, kind: input, shape index: {}]
  %s3 = inlined_call_operand.vmem [shape: f32[1,16], index: 3, kind: input, shape index: {}]
  %s4 = inlined_call_operand.vmem [shape: bf16[144,16], index: 4, kind: input, shape index: {}]
  %s5 = inlined_call_operand.vmem [shape: f32[1,16], index: 5, kind: input, shape index: {}]
  %s6 = inlined_call_operand.vmem [shape: f32[2,16,16,16], index: 6, kind: output, shape index: {}]
  %s7 = sld [smem:[#allocation0]]
  $region57: #{resl_block_forward.1} parent=0
    _
  %s9 = ssub.s32 1, %s7
  %s10 = scalar_select 0, %s9, %s7
  loop: start=0, step=1, limit=6
  $region2: #{resl_block_forward.1} parent=0 // loop_pre_header
    _
  $region3: #{resl_block_forward.1} parent=0 // loop_header
    %s12 = sphi 0, %s16
    %p13 = scmp.ge.s32.totalorder %s12, 6
    %s19 = sphi 0, %s31
    %s20 = sphi 0, %s27
    %s21 = sphi 0, %s19
    %s22 = sphi 0, %s20
    %s23 = sphi 0, %s21
    %s24 = sphi 0, %s22
    %s36 = sphi 0, %s38
    %s39 = sphi 0, %s36
    %s40 = sphi 0, %s39
    %s56 = sphi 0, %s40
    %s68 = sphi 0, %s70
    %s71 = sphi 0, %s68
    %s72 = sphi 0, %s71
    %s88 = sphi 0, %s72
    %s92 = sphi 0, %s92
    %s94 = sphi 0, %s92
    %s95 = sphi 0, %s94
    %s109 = sphi 0, %s95
    %s113 = sphi 0, %s113
    %s115 = sphi 0, %s113
    %s116 = sphi 0, %s115
    %s130 = sphi 0, %s116
    %s134 = sphi 0, %s134
    %s136 = sphi 0, %s134
    %s137 = sphi 0, %s136
    %s151 = sphi 0, %s137
    %s155 = sphi 0, %s155
    %s157 = sphi 0, %s155
    %s158 = sphi 0, %s157
    %s172 = sphi 0, %s158
    %s180 = sphi 0, %s182
    %s183 = sphi 0, %s180
    %s184 = sphi 0, %s183
    %s200 = sphi 0, %s184
  $region4: #{resl_block_forward.1} parent=0 // loop_header_branch
    %15 = sbr.rel (%p13) target = $region8
  $region5: #{resl_block_forward.1} parent=0 // loop_body
    %s17 = ssub.s32 %s12, 1
    %s18 = ssub.s32 %s12, 2
    %s25 = sadd.s32 1, %s20
    %p26 = scmp.ge.s32.totalorder %s25, 2
    %s27 = scalar_select %p26, 0, %s25
    %s28 = sadd.s32 1, %s19
    %s29 = scalar_select %p26, %s28, %s19
    %p30 = scmp.ge.s32.totalorder %s29, 2
    %s31 = scalar_select %p30, 0, %s29
    %s32 = ssub.s32 %s19, %s31
    %s33 = ssub.s32 %s20, %s27
    %s34 = sor.u32 %s32, %s33
    %p35 = scmp.eq.s32.totalorder %s34, 0
    %s37 = sadd.s32 %s36, 1
    %s38 = scalar_select %p35, %s36, %s37
    %p41 = pneg %p35
    %p42 = scmp.eq.s32.totalorder %s12, 3
    %p43 = por %p41, %p42
    %p44 = scmp.ne.s32.totalorder %s36, %s39
    %p45 = scmp.eq.s32.totalorder %s12, 0
    %p46 = por %p44, %p45
    %p47 = scmp.ne.s32.totalorder %s36, %s39
    %p48 = scmp.eq.s32.totalorder %s17, 3
    %p49 = por %p47, %p48
    %p50 = scmp.ne.s32.totalorder %s39, %s40
    %p51 = scmp.eq.s32.totalorder %s17, 0
    %p52 = por %p50, %p51
    %p53 = scmp.ne.s32.totalorder %s39, %s40
    %p54 = scmp.eq.s32.totalorder %s18, 3
    %p55 = por %p53, %p54
    %p57 = scmp.ne.s32.totalorder %s40, %s56
    %p58 = scmp.eq.s32.totalorder %s18, 0
    %p59 = por %p57, %p58
    %s60 = sadd.s32 %s20, 1
    %s61 = smul.u32 %s60, 2
    %s62 = sadd.s32 %s27, 1
    %s63 = smul.u32 %s62, 2
    %s64 = ssub.s32 %s19, %s31
    %s65 = ssub.s32 %s61, %s63
    %s66 = sor.u32 %s64, %s65
    %p67 = scmp.eq.s32.totalorder %s66, 0
    %s69 = sadd.s32 %s68, 1
    %s70 = scalar_select %p67, %s68, %s69
    %p73 = pneg %p67
    %p74 = scmp.eq.s32.totalorder %s12, 3
    %p75 = por %p73, %p74
    %p76 = scmp.ne.s32.totalorder %s68, %s71
    %p77 = scmp.eq.s32.totalorder %s12, 0
    %p78 = por %p76, %p77
    %p79 = scmp.ne.s32.totalorder %s68, %s71
    %p80 = scmp.eq.s32.totalorder %s17, 3
    %p81 = por %p79, %p80
    %p82 = scmp.ne.s32.totalorder %s71, %s72
    %p83 = scmp.eq.s32.totalorder %s17, 0
    %p84 = por %p82, %p83
    %p85 = scmp.ne.s32.totalorder %s71, %s72
    %p86 = scmp.eq.s32.totalorder %s18, 3
    %p87 = por %p85, %p86
    %p89 = scmp.ne.s32.totalorder %s72, %s88
    %p90 = scmp.eq.s32.totalorder %s18, 0
    %p91 = por %p89, %p90
    %s93 = sadd.s32 %s92, 1
    %p96 = scmp.eq.s32.totalorder %s12, 3
    %p97 = scmp.ne.s32.totalorder %s92, %s94
    %p98 = scmp.eq.s32.totalorder %s12, 0
    %p99 = por %p97, %p98
    %p100 = scmp.ne.s32.totalorder %s92, %s94
    %p101 = scmp.eq.s32.totalorder %s17, 3
    %p102 = por %p100, %p101
    %p103 = scmp.ne.s32.totalorder %s94, %s95
    %p104 = scmp.eq.s32.totalorder %s17, 0
    %p105 = por %p103, %p104
    %p106 = scmp.ne.s32.totalorder %s94, %s95
    %p107 = scmp.eq.s32.totalorder %s18, 3
    %p108 = por %p106, %p107
    %p110 = scmp.ne.s32.totalorder %s95, %s109
    %p111 = scmp.eq.s32.totalorder %s18, 0
    %p112 = por %p110, %p111
    %s114 = sadd.s32 %s113, 1
    %p117 = scmp.eq.s32.totalorder %s12, 3
    %p118 = scmp.ne.s32.totalorder %s113, %s115
    %p119 = scmp.eq.s32.totalorder %s12, 0
    %p120 = por %p118, %p119
    %p121 = scmp.ne.s32.totalorder %s113, %s115
    %p122 = scmp.eq.s32.totalorder %s17, 3
    %p123 = por %p121, %p122
    %p124 = scmp.ne.s32.totalorder %s115, %s116
    %p125 = scmp.eq.s32.totalorder %s17, 0
    %p126 = por %p124, %p125
    %p127 = scmp.ne.s32.totalorder %s115, %s116
    %p128 = scmp.eq.s32.totalorder %s18, 3
    %p129 = por %p127, %p128
    %p131 = scmp.ne.s32.totalorder %s116, %s130
    %p132 = scmp.eq.s32.totalorder %s18, 0
    %p133 = por %p131, %p132
    %s135 = sadd.s32 %s134, 1
    %p138 = scmp.eq.s32.totalorder %s12, 3
    %p139 = scmp.ne.s32.totalorder %s134, %s136
    %p140 = scmp.eq.s32.totalorder %s12, 0
    %p141 = por %p139, %p140
    %p142 = scmp.ne.s32.totalorder %s134, %s136
    %p143 = scmp.eq.s32.totalorder %s17, 3
    %p144 = por %p142, %p143
    %p145 = scmp.ne.s32.totalorder %s136, %s137
    %p146 = scmp.eq.s32.totalorder %s17, 0
    %p147 = por %p145, %p146
    %p148 = scmp.ne.s32.totalorder %s136, %s137
    %p149 = scmp.eq.s32.totalorder %s18, 3
    %p150 = por %p148, %p149
    %p152 = scmp.ne.s32.totalorder %s137, %s151
    %p153 = scmp.eq.s32.totalorder %s18, 0
    %p154 = por %p152, %p153
    %s156 = sadd.s32 %s155, 1
    %p159 = scmp.eq.s32.totalorder %s12, 3
    %p160 = scmp.ne.s32.totalorder %s155, %s157
    %p161 = scmp.eq.s32.totalorder %s12, 0
    %p162 = por %p160, %p161
    %p163 = scmp.ne.s32.totalorder %s155, %s157
    %p164 = scmp.eq.s32.totalorder %s17, 3
    %p165 = por %p163, %p164
    %p166 = scmp.ne.s32.totalorder %s157, %s158
    %p167 = scmp.eq.s32.totalorder %s17, 0
    %p168 = por %p166, %p167
    %p169 = scmp.ne.s32.totalorder %s157, %s158
    %p170 = scmp.eq.s32.totalorder %s18, 3
    %p171 = por %p169, %p170
    %p173 = scmp.ne.s32.totalorder %s158, %s172
    %p174 = scmp.eq.s32.totalorder %s18, 0
    %p175 = por %p173, %p174
    %s176 = ssub.s32 %s19, %s31
    %s177 = ssub.s32 %s20, %s27
    %s178 = sor.u32 %s176, %s177
    %p179 = scmp.eq.s32.totalorder %s178, 0
    %s181 = sadd.s32 %s180, 1
    %s182 = scalar_select %p179, %s180, %s181
    %p185 = pneg %p179
    %p186 = scmp.eq.s32.totalorder %s12, 3
    %p187 = por %p185, %p186
    %p188 = scmp.ne.s32.totalorder %s180, %s183
    %p189 = scmp.eq.s32.totalorder %s12, 0
    %p190 = por %p188, %p189
    %p191 = scmp.ne.s32.totalorder %s180, %s183
    %p192 = scmp.eq.s32.totalorder %s17, 3
    %p193 = por %p191, %p192
    %p194 = scmp.ne.s32.totalorder %s183, %s184
    %p195 = scmp.eq.s32.totalorder %s17, 0
    %p196 = por %p194, %p195
    %p197 = scmp.ne.s32.totalorder %s183, %s184
    %p198 = scmp.eq.s32.totalorder %s18, 3
    %p199 = por %p197, %p198
    %p201 = scmp.ne.s32.totalorder %s184, %s200
    %p202 = scmp.eq.s32.totalorder %s18, 0
    %p203 = por %p201, %p202
    %p204 = scmp.le.s32.totalorder 1, %s12
    %p205 = scmp.lt.s32.totalorder %s12, 5
    %p206 = pnand %p204, %p205
    %p207 = pneg %p206
    // Predicated region
    $region9: #{resl_block_forward.1} parent=5 // pred_check
      _
    $region10: #{resl_block_forward.1} parent=5 // pred_check_branch
      %209 = sbr.rel (%p206) target = $region12
    $region11: #{resl_block_forward.1} parent=5 // pred_region
      %s210 = ssub.s32 %s12, 1
      // Predicated region
      $region13: #{resl_block_forward.1} parent=11 // pred_check
        %p211 = pneg %p105
      $region14: #{resl_block_forward.1} parent=11 // pred_check_branch
        %213 = sbr.rel (%p211) target = $region16
      $region15: #{resl_block_forward.1} parent=11 // pred_region
        _
      $region16: #{resl_block_forward.1} parent=11 // pred_fallthru
        _
      // Predicated region
      $region17: #{resl_block_forward.1} parent=11 // pred_check
        %p214 = pneg %p126
      $region18: #{resl_block_forward.1} parent=11 // pred_check_branch
        %216 = sbr.rel (%p214) target = $region20
      $region19: #{resl_block_forward.1} parent=11 // pred_region
        _
      $region20: #{resl_block_forward.1} parent=11 // pred_fallthru
        _
      // Predicated region
      $region21: #{resl_block_forward.1} parent=11 // pred_check
        %p217 = pneg %p147
      $region22: #{resl_block_forward.1} parent=11 // pred_check_branch
        %219 = sbr.rel (%p217) target = $region24
      $region23: #{resl_block_forward.1} parent=11 // pred_region
        _
      $region24: #{resl_block_forward.1} parent=11 // pred_fallthru
        _
      // Predicated region
      $region25: #{resl_block_forward.1} parent=11 // pred_check
        %p220 = pneg %p168
      $region26: #{resl_block_forward.1} parent=11 // pred_check_branch
        %222 = sbr.rel (%p220) target = $region28
      $region27: #{resl_block_forward.1} parent=11 // pred_region
        _
      $region28: #{resl_block_forward.1} parent=11 // pred_fallthru
        _
    $region12: #{resl_block_forward.1} parent=5 // pred_fallthru
      _
    %p223 = scmp.lt.s32.totalorder %s12, 4
    // Predicated region
    $region29: #{resl_block_forward.1} parent=5 // pred_check
      %p224 = pneg %p223
    $region30: #{resl_block_forward.1} parent=5 // pred_check_branch
      %226 = sbr.rel (%p224) target = $region32
    $region31: #{resl_block_forward.1} parent=5 // pred_region
      // Predicated region
      $region33: #{resl_block_forward.1} parent=31 // pred_check
        %p227 = pneg %p46
      $region34: #{resl_block_forward.1} parent=31 // pred_check_branch
        %229 = sbr.rel (%p227) target = $region36
      $region35: #{resl_block_forward.1} parent=31 // pred_region
        %s230 = smul.u32 4, %s20
        %s231 = ssub.s32 10, %s230
        %p232 = scmp.lt.s32.totalorder %s231, 4
        %s233 = scalar_select %p232, %s231, 4
        %s234 = smul.u32 64, %s233
        %s235 = smul.u32 %s234, 3
        %p236 = scmp.lt.s32.totalorder %s19, 1
        %s237 = scalar_select %p236, %s19, 1
        %p238 = scmp.lt.s32.totalorder %s230, 9
        %s239 = scalar_select %p238, %s230, 9
        %s240 = smul.addr %s239, 3
        %s241 = smul.addr %s237, 30
        %s242 = sadd.s32 %s240, %s241
        %s243 = smul.addr %s242, 4
        %s244 = scalar_lea.vmem %s0, %s243
        %s245 = smul.u32 4, %s20
        %s246 = ssub.s32 10, %s245
        %p247 = scmp.lt.s32.totalorder %s246, 4
        %s248 = scalar_select %p247, %s246, 4
        %s249 = smul.u32 64, %s248
        %s250 = smul.u32 %s249, 3
      $region36: #{resl_block_forward.1} parent=31 // pred_fallthru
        _
      // Predicated region
      $region37: #{resl_block_forward.1} parent=31 // pred_check
        %p251 = pneg %p78
      $region38: #{resl_block_forward.1} parent=31 // pred_check_branch
        %253 = sbr.rel (%p251) target = $region40
      $region39: #{resl_block_forward.1} parent=31 // pred_region
        %s254 = sadd.s32 %s20, 1
        %s255 = smul.u32 %s254, 2
        %s256 = smul.u32 2, %s255
        %p257 = scmp.lt.s32.totalorder %s19, 1
        %s258 = scalar_select %p257, %s19, 1
        %p259 = scmp.lt.s32.totalorder %s256, 9
        %s260 = scalar_select %p259, %s256, 9
        %s261 = smul.addr %s260, 3
        %s262 = smul.addr %s258, 30
        %s263 = sadd.s32 %s261, %s262
        %s264 = smul.addr %s263, 4
        %s265 = scalar_lea.vmem %s1, %s264
        %s266 = sadd.s32 %s20, 1
        %s267 = smul.u32 %s266, 2
        %s268 = smul.u32 2, %s267
      $region40: #{resl_block_forward.1} parent=31 // pred_fallthru
        _
    $region32: #{resl_block_forward.1} parent=5 // pred_fallthru
      _
    %p269 = scmp.le.s32.totalorder 1, %s12
    %p270 = scmp.lt.s32.totalorder %s12, 5
    %p271 = pnand %p269, %p270
    %p272 = pneg %p271
    // Predicated region
    $region41: #{resl_block_forward.1} parent=5 // pred_check
      _
    $region42: #{resl_block_forward.1} parent=5 // pred_check_branch
      %274 = sbr.rel (%p271) target = $region44
    $region43: #{resl_block_forward.1} parent=5 // pred_region
      %s275 = ssub.s32 %s12, 1
      %s276 = smul.u32 4, %s22
      %s277 = ssub.s32 10, %s276
      %p278 = scmp.lt.s32.totalorder %s277, 4
      %s279 = scalar_select %p278, %s277, 4
      %s280 = smul.u32 64, %s279
      %s281 = smul.u32 %s280, 3
      %p282 = scmp.lt.s32.totalorder %s21, 1
      %s283 = scalar_select %p282, %s21, 1
      %p284 = scmp.lt.s32.totalorder %s276, 9
      %s285 = scalar_select %p284, %s276, 9
      %s286 = smul.addr %s285, 3
      %s287 = smul.addr %s283, 30
      %s288 = sadd.s32 %s286, %s287
      %s289 = smul.addr %s288, 4
      %s290 = scalar_lea.vmem %s0, %s289
      %p291 = pneg %p52
      %p292 = pneg %p49
      %s293 = sadd.s32 %s22, 1
      %s294 = smul.u32 %s293, 2
      %s295 = smul.u32 2, %s294
      %p296 = scmp.lt.s32.totalorder %s21, 1
      %s297 = scalar_select %p296, %s21, 1
      %p298 = scmp.lt.s32.totalorder %s295, 9
      %s299 = scalar_select %p298, %s295, 9
      %s300 = smul.addr %s299, 3
      %s301 = smul.addr %s297, 30
      %s302 = sadd.s32 %s300, %s301
      %s303 = smul.addr %s302, 4
      %s304 = scalar_lea.vmem %s1, %s303
      %p305 = pneg %p84
      %p306 = pneg %p81
      %p307 = pneg %p105
      %p308 = pneg %p102
      %p309 = pneg %p126
      %p310 = pneg %p123
      %p311 = pneg %p147
      %p312 = pneg %p144
      %p313 = pneg %p168
      %p314 = pneg %p165
      %p315 = pneg %p196
      %p316 = pneg %p193
      %s317 = smul.u32 8, %s22
      %p318 = scmp.lt.s32.totalorder %s21, 1
      %s319 = scalar_select %p318, %s21, 1
      %p320 = scmp.lt.s32.totalorder %s317, 15
      %s321 = scalar_select %p320, %s317, 15
      %s322 = smul.addr %s321, 2
      %s323 = smul.addr %s319, 32
      %s324 = sadd.s32 %s322, %s323
      %s325 = smul.addr %s324, 8
      %s326 = scalar_lea.vmem %s6, %s325
      %s327 = smul.u32 4, %s22
      %s328 = ssub.s32 10, %s327
      %p329 = scmp.lt.s32.totalorder %s328, 4
      %s330 = scalar_select %p329, %s328, 4
      %s331 = smul.u32 64, %s330
      %s332 = smul.u32 %s331, 3
      %p333 = scmp.lt.s32.totalorder %s21, 1
      %s334 = scalar_select %p333, %s21, 1
      %p335 = scmp.lt.s32.totalorder %s327, 9
      %s336 = scalar_select %p335, %s327, 9
      %s337 = smul.addr %s336, 3
      %s338 = smul.addr %s334, 30
      %s339 = sadd.s32 %s337, %s338
      %s340 = smul.addr %s339, 4
      %s341 = scalar_lea.vmem %s0, %s340
      %s342 = smul.u32 4, %s22
      %s343 = ssub.s32 10, %s342
      %p344 = scmp.lt.s32.totalorder %s343, 4
      %s345 = scalar_select %p344, %s343, 4
      %s346 = smul.u32 64, %s345
      %s347 = smul.u32 %s346, 3
      %s348 = sadd.s32 %s22, 1
      %s349 = smul.u32 %s348, 2
      %s350 = smul.u32 2, %s349
      %p351 = scmp.lt.s32.totalorder %s21, 1
      %s352 = scalar_select %p351, %s21, 1
      %p353 = scmp.lt.s32.totalorder %s350, 9
      %s354 = scalar_select %p353, %s350, 9
      %s355 = smul.addr %s354, 3
      %s356 = smul.addr %s352, 30
      %s357 = sadd.s32 %s355, %s356
      %s358 = smul.addr %s357, 4
      %s359 = scalar_lea.vmem %s1, %s358
      %s360 = sadd.s32 %s22, 1
      %s361 = smul.u32 %s360, 2
      %s362 = smul.u32 2, %s361
      %s363 = smul.u32 8, %s22
      %p364 = scmp.lt.s32.totalorder %s21, 1
      %s365 = scalar_select %p364, %s21, 1
      %p366 = scmp.lt.s32.totalorder %s363, 15
      %s367 = scalar_select %p366, %s363, 15
      %s368 = smul.addr %s367, 2
      %s369 = smul.addr %s365, 32
      %s370 = sadd.s32 %s368, %s369
      %s371 = smul.addr %s370, 8
      %s372 = scalar_lea.vmem %s6, %s371
      %s373 = smul.u32 8, %s22
      %s375 = smul.u32 %s22, 8
      %v376 = vld [vmem:[%s341] sm:$0xf]
      %v377 = vld [vmem:[%s341 + $0x4] sm:$0xf]
      %v378 = vld [vmem:[%s341 + $0x8] sm:$0x3]
      %v379 = vld [vmem:[%s341 + $0xc] sm:$0xf]
      %v380 = vld [vmem:[%s341 + $0x10] sm:$0xf]
      %v381 = vld [vmem:[%s341 + $0x14] sm:$0x3]
      %v382 = vld [vmem:[%s341 + $0x18] sm:$0xf]
      %v383 = vld [vmem:[%s341 + $0x1c] sm:$0xf]
      %v384 = vld [vmem:[%s341 + $0x20] sm:$0x3]
      %v385 = vld [vmem:[%s341 + $0x24] sm:$0xf]
      %v386 = vld [vmem:[%s341 + $0x28] sm:$0xf]
      %v387 = vld [vmem:[%s341 + $0x2c] sm:$0x3]
      %v388 = vld [vmem:[%s359] sm:$0xf]
      %v389 = vld [vmem:[%s359 + $0x4] sm:$0xf]
      %v390 = vld [vmem:[%s359 + $0x8] sm:$0x3]
      %v391 = vld [vmem:[%s359 + $0xc] sm:$0xf]
      %v392 = vld [vmem:[%s359 + $0x10] sm:$0xf]
      %v393 = vld [vmem:[%s359 + $0x14] sm:$0x3]
      %v394 = vunpack.c.l.bf16 %v376
      %v395 = vunpack.c.l.bf16 %v377
      %v396 = vunpack.c.l.bf16 %v378
      %v397 = vunpack.c.l.bf16 %v379
      %v398 = vunpack.c.l.bf16 %v380
      %v399 = vunpack.c.l.bf16 %v381
      %v400 = vunpack.c.l.bf16 %v382
      %v401 = vunpack.c.l.bf16 %v383
      %v402 = vunpack.c.l.bf16 %v384
      %v403 = vunpack.c.l.bf16 %v385
      %v404 = vunpack.c.l.bf16 %v386
      %v405 = vunpack.c.l.bf16 %v387
      %v406 = vunpack.c.l.bf16 %v388
      %v407 = vunpack.c.l.bf16 %v389
      %v408 = vunpack.c.l.bf16 %v390
      %v409 = vunpack.c.l.bf16 %v391
      %v410 = vunpack.c.l.bf16 %v392
      %v411 = vunpack.c.l.bf16 %v393
      %vm427 = vcmask 1046528
      %v428 = vrot.slane %v394, 1
      %v429 = vrot.slane %v395, 1
      %v430 = vsel %vm427, %v428, %v429
      %v431 = vrot.slane %v396, 1
      %v432 = vsel %vm427, %v429, %v431
      %v433 = vrot.slane %v397, 1
      %v434 = vrot.slane %v398, 1
      %v435 = vsel %vm427, %v433, %v434
      %v436 = vrot.slane %v399, 1
      %v437 = vsel %vm427, %v434, %v436
      %v438 = vrot.slane %v400, 1
      %v439 = vrot.slane %v401, 1
      %v440 = vsel %vm427, %v438, %v439
      %v441 = vrot.slane %v402, 1
      %v442 = vsel %vm427, %v439, %v441
      %v443 = vrot.slane %v403, 1
      %v444 = vrot.slane %v404, 1
      %v445 = vsel %vm427, %v443, %v444
      %v446 = vrot.slane %v405, 1
      %v447 = vsel %vm427, %v444, %v446
      %v448 = vrot.slane %v406, 1
      %v449 = vrot.slane %v407, 1
      %v450 = vsel %vm427, %v448, %v449
      %v451 = vrot.slane %v408, 1
      %v452 = vsel %vm427, %v449, %v451
      %v463 = vld [vmem:[%s2] sm:$0xf]
      %v464 = vld [vmem:[%s2 + $0x4] sm:$0xf]
      %v465 = vld [vmem:[%s2 + $0x8] sm:$0xf]
      %v466 = vld [vmem:[%s2 + $0xc] sm:$0xf]
      %v467 = vpack.c.bf16 %v432, %v430
      %v468 = vpack.c.bf16 %v437, %v435
      %v469 = vpack.c.bf16 %v442, %v440
      %v470 = vpack.c.bf16 %v447, %v445
      %v471 = vpack.c.bf16 %v452, %v450
      %vm472 = vcmask 1045504
      %v473 = vrot.slane %v394, 2
      %v474 = vrot.slane %v395, 2
      %v475 = vsel %vm472, %v473, %v474
      %v476 = vrot.slane %v396, 2
      %v477 = vsel %vm472, %v474, %v476
      %v478 = vrot.slane %v397, 2
      %v479 = vrot.slane %v398, 2
      %v480 = vsel %vm472, %v478, %v479
      %v481 = vrot.slane %v399, 2
      %v482 = vsel %vm472, %v479, %v481
      %v483 = vrot.slane %v400, 2
      %v484 = vrot.slane %v401, 2
      %v485 = vsel %vm472, %v483, %v484
      %v486 = vrot.slane %v402, 2
      %v487 = vsel %vm472, %v484, %v486
      %v488 = vrot.slane %v403, 2
      %v489 = vrot.slane %v404, 2
      %v490 = vsel %vm472, %v488, %v489
      %v491 = vrot.slane %v405, 2
      %v492 = vsel %vm472, %v489, %v491
      %v493 = vrot.slane %v406, 2
      %v494 = vrot.slane %v407, 2
      %v495 = vsel %vm472, %v493, %v494
      %v496 = vrot.slane %v408, 2
      %v497 = vsel %vm472, %v494, %v496
      %v508 = vld [vmem:[%s2 + $0x10] sm:$0xf]
      %v509 = vld [vmem:[%s2 + $0x14] sm:$0xf]
      %v510 = vld [vmem:[%s2 + $0x18] sm:$0xf]
      %v511 = vld [vmem:[%s2 + $0x1c] sm:$0xf]
      %v512 = vpack.c.bf16 %v477, %v475
      %v513 = vpack.c.bf16 %v482, %v480
      %v514 = vpack.c.bf16 %v487, %v485
      %v515 = vpack.c.bf16 %v492, %v490
      %v516 = vpack.c.bf16 %v497, %v495
      %v521 = vunpack.c.l.b16 %v508
      %v522 = vunpack.c.l.b16 %v509
      %v523 = vunpack.c.l.b16 %v510
      %v524 = vunpack.c.l.b16 %v511
      %v525 = vpack.c.b16 %v522, %v521
      %v526 = vpack.c.b16 %v524, %v523
      %vm529 = vcmask 261120
      %v531 = vsel %vm529, %v512, 0
      %v534 = vsel %vm529, %v513, 0
      %v537 = vsel %vm529, %v514, 0
      %v540 = vsel %vm529, %v515, 0
      %v543 = vsel %vm529, %v516, 0
      %545 = vmatprep.subr.bf16.mxu0 0
      %546 = vmatpush1.bf16.msra.mxu0 %v525
      %547 = vmatprep.subr.bf16.mxu0 0
      %548 = vmatpush1.bf16.msra.mxu0 %v526
      %549 = vmatprep.subr.bf16.mxu0 0
      %550 = vmatpush1.bf16.msra.mxu0 0
      %551 = vmatprep.subr.bf16.mxu0 0
      %552 = vmatpush1.bf16.msra.mxu0 0
      %553 = vmatprep.subr.bf16.mxu0 0
      %554 = vmatpush1.bf16.msra.mxu0 0
      %555 = vmatprep.subr.bf16.mxu0 0
      %556 = vmatpush1.bf16.msra.mxu0 0
      %557 = vmatprep.subr.bf16.mxu0 0
      %558 = vmatpush1.bf16.msra.mxu0 0
      %559 = vmatprep.subr.bf16.mxu0 0
      %560 = vmatpush1.bf16.msra.mxu0 0
      %561 = vmatprep.subr.bf16.mxu0 0
      %562 = vmatpush1.bf16.msra.mxu0 0
      %563 = vmatprep.subr.bf16.mxu0 0
      %564 = vmatpush1.bf16.msra.mxu0 0
      %565 = vmatprep.subr.bf16.mxu0 0
      %566 = vmatpush1.bf16.msra.mxu0 0
      %567 = vmatprep.subr.bf16.mxu0 0
      %568 = vmatpush1.bf16.msra.mxu0 0
      %569 = vmatprep.subr.bf16.mxu0 0
      %570 = vmatpush1.bf16.msra.mxu0 0
      %571 = vmatprep.subr.bf16.mxu0 0
      %572 = vmatpush1.bf16.msra.mxu0 0
      %573 = vmatprep.subr.bf16.mxu0 0
      %574 = vmatpush1.bf16.msra.mxu0 0
      %575 = vmatprep.subr.bf16.mxu0 0
      %576 = vmatpush1.bf16.msra.mxu0 0
      %577 = vmatprep.mubr.bf16.mxu0 0
      %578 = vmatmul.mubr.bf16.gmra.mrb[0].mxu0 %v531
      %v579 = vpop.f32.mrb[0].mxu0
      %v580 = vadd.f32 0.0, %v579
      %v581 = vpop.f32.mrb[0].mxu0
      %v582 = vpop.f32.mrb[0].mxu0
      %v583 = vadd.f32 0.0, %v582
      %v584 = vpop.f32.mrb[0].mxu0
      %585 = vmatprep.mubr.bf16.mxu0 0
      %586 = vmatmul.mubr.bf16.gmra.mrb[0].mxu0 %v531
      %v587 = vpop.f32.mrb[0].mxu0
      %v588 = vadd.f32 0.0, %v587
      %v589 = vpop.f32.mrb[0].mxu0
      %v590 = vpop.f32.mrb[0].mxu0
      %v591 = vadd.f32 0.0, %v590
      %v592 = vpop.f32.mrb[0].mxu0
      %593 = vmatprep.mubr.bf16.mxu0 0
      %594 = vmatmul.mubr.bf16.gmra.mrb[0].mxu0 %v534
      %v595 = vpop.f32.mrb[0].mxu0
      %v596 = vadd.f32 0.0, %v595
      %v597 = vpop.f32.mrb[0].mxu0
      %v598 = vpop.f32.mrb[0].mxu0
      %v599 = vadd.f32 0.0, %v598
      %v600 = vpop.f32.mrb[0].mxu0
      %601 = vmatprep.mubr.bf16.mxu0 0
      %602 = vmatmul.mubr.bf16.gmra.mrb[0].mxu0 %v534
      %v603 = vpop.f32.mrb[0].mxu0
      %v604 = vadd.f32 0.0, %v603
      %v605 = vpop.f32.mrb[0].mxu0
      %v606 = vpop.f32.mrb[0].mxu0
      %v607 = vadd.f32 0.0, %v606
      %v608 = vpop.f32.mrb[0].mxu0
      %609 = vmatprep.mubr.bf16.mxu0 0
      %610 = vmatmul.mubr.bf16.gmra.mrb[0].mxu0 %v537
      %v611 = vpop.f32.mrb[0].mxu0
      %v612 = vadd.f32 0.0, %v611
      %v613 = vpop.f32.mrb[0].mxu0
      %v614 = vpop.f32.mrb[0].mxu0
      %v615 = vadd.f32 0.0, %v614
      %v616 = vpop.f32.mrb[0].mxu0
      %617 = vmatprep.mubr.bf16.mxu0 0
      %618 = vmatmul.mubr.bf16.gmra.mrb[0].mxu0 %v537
      %v619 = vpop.f32.mrb[0].mxu0
      %v620 = vadd.f32 0.0, %v619
      %v621 = vpop.f32.mrb[0].mxu0
      %v622 = vpop.f32.mrb[0].mxu0
      %v623 = vadd.f32 0.0, %v622
      %v624 = vpop.f32.mrb[0].mxu0
      %625 = vmatprep.mubr.bf16.mxu0 0
      %626 = vmatmul.mubr.bf16.gmra.mrb[0].mxu0 %v540
      %v627 = vpop.f32.mrb[0].mxu0
      %v628 = vadd.f32 0.0, %v627
      %v629 = vpop.f32.mrb[0].mxu0
      %v630 = vpop.f32.mrb[0].mxu0
      %v631 = vadd.f32 0.0, %v630
      %v632 = vpop.f32.mrb[0].mxu0
      %633 = vmatprep.mubr.bf16.mxu0 0
      %634 = vmatmul.mubr.bf16.gmra.mrb[0].mxu0 %v540
      %v635 = vpop.f32.mrb[0].mxu0
      %v636 = vadd.f32 0.0, %v635
      %v637 = vpop.f32.mrb[0].mxu0
      %v638 = vpop.f32.mrb[0].mxu0
      %v639 = vadd.f32 0.0, %v638
      %v640 = vpop.f32.mrb[0].mxu0
      %641 = vmatprep.mubr.bf16.mxu0 0
      %642 = vmatmul.mubr.bf16.gmra.mrb[0].mxu0 %v543
      %v643 = vpop.f32.mrb[0].mxu0
      %v644 = vadd.f32 0.0, %v643
      %v645 = vpop.f32.mrb[0].mxu0
      %v646 = vpop.f32.mrb[0].mxu0
      %v647 = vadd.f32 0.0, %v646
      %v648 = vpop.f32.mrb[0].mxu0
      %649 = vmatprep.mubr.bf16.mxu0 0
      %650 = vmatmul.mubr.bf16.gmra.mrb[0].mxu0 %v543
      %v651 = vpop.f32.mrb[0].mxu0
      %v652 = vadd.f32 0.0, %v651
      %v653 = vpop.f32.mrb[0].mxu0
      %v654 = vpop.f32.mrb[0].mxu0
      %v655 = vadd.f32 0.0, %v654
      %v656 = vpop.f32.mrb[0].mxu0
      %657 = vdwg.mxu0
      %v662 = vunpack.c.l.b16 %v463
      %v663 = vunpack.c.l.b16 %v464
      %v664 = vunpack.c.l.b16 %v465
      %v665 = vunpack.c.l.b16 %v466
      %v666 = vpack.c.b16 %v663, %v662
      %v667 = vpack.c.b16 %v665, %v664
      %v671 = vsel %vm529, %v467, 0
      %v674 = vsel %vm529, %v468, 0
      %v677 = vsel %vm529, %v469, 0
      %v680 = vsel %vm529, %v470, 0
      %v683 = vsel %vm529, %v471, 0
      %685 = vmatprep.subr.bf16.mxu0 0
      %686 = vmatpush1.bf16.msra.mxu0 %v666
      %687 = vmatprep.subr.bf16.mxu0 0
      %688 = vmatpush1.bf16.msra.mxu0 %v667
      %689 = vmatprep.subr.bf16.mxu0 0
      %690 = vmatpush1.bf16.msra.mxu0 0
      %691 = vmatprep.subr.bf16.mxu0 0
      %692 = vmatpush1.bf16.msra.mxu0 0
      %693 = vmatprep.subr.bf16.mxu0 0
      %694 = vmatpush1.bf16.msra.mxu0 0
      %695 = vmatprep.subr.bf16.mxu0 0
      %696 = vmatpush1.bf16.msra.mxu0 0
      %697 = vmatprep.subr.bf16.mxu0 0
      %698 = vmatpush1.bf16.msra.mxu0 0
      %699 = vmatprep.subr.bf16.mxu0 0
      %700 = vmatpush1.bf16.msra.mxu0 0
      %701 = vmatprep.subr.bf16.mxu0 0
      %702 = vmatpush1.bf16.msra.mxu0 0
      %703 = vmatprep.subr.bf16.mxu0 0
      %704 = vmatpush1.bf16.msra.mxu0 0
      %705 = vmatprep.subr.bf16.mxu0 0
      %706 = vmatpush1.bf16.msra.mxu0 0
      %707 = vmatprep.subr.bf16.mxu0 0
      %708 = vmatpush1.bf16.msra.mxu0 0
      %709 = vmatprep.subr.bf16.mxu0 0
      %710 = vmatpush1.bf16.msra.mxu0 0
      %711 = vmatprep.subr.bf16.mxu0 0
      %712 = vmatpush1.bf16.msra.mxu0 0
      %713 = vmatprep.subr.bf16.mxu0 0
      %714 = vmatpush1.bf16.msra.mxu0 0
      %715 = vmatprep.subr.bf16.mxu0 0
      %716 = vmatpush1.bf16.msra.mxu0 0
      %717 = vmatprep.mubr.bf16.mxu0 0
      %718 = vmatmul.mubr.bf16.gmra.mrb[0].mxu0 %v671
      %v719 = vpop.f32.mrb[0].mxu0
      %v720 = vadd.f32 %v580, %v719
      %v721 = vpop.f32.mrb[0].mxu0
      %v722 = vpop.f32.mrb[0].mxu0
      %v723 = vadd.f32 %v583, %v722
      %v724 = vpop.f32.mrb[0].mxu0
      %725 = vmatprep.mubr.bf16.mxu0 0
      %726 = vmatmul.mubr.bf16.gmra.mrb[0].mxu0 %v671
      %v727 = vpop.f32.mrb[0].mxu0
      %v728 = vadd.f32 %v588, %v727
      %v729 = vpop.f32.mrb[0].mxu0
      %v730 = vpop.f32.mrb[0].mxu0
      %v731 = vadd.f32 %v591, %v730
      %v732 = vpop.f32.mrb[0].mxu0
      %733 = vmatprep.mubr.bf16.mxu0 0
      %734 = vmatmul.mubr.bf16.gmra.mrb[0].mxu0 %v674
      %v735 = vpop.f32.mrb[0].mxu0
      %v736 = vadd.f32 %v596, %v735
      %v737 = vpop.f32.mrb[0].mxu0
      %v738 = vpop.f32.mrb[0].mxu0
      %v739 = vadd.f32 %v599, %v738
      %v740 = vpop.f32.mrb[0].mxu0
      %741 = vmatprep.mubr.bf16.mxu0 0
      %742 = vmatmul.mubr.bf16.gmra.mrb[0].mxu0 %v674
      %v743 = vpop.f32.mrb[0].mxu0
      %v744 = vadd.f32 %v604, %v743
      %v745 = vpop.f32.mrb[0].mxu0
      %v746 = vpop.f32.mrb[0].mxu0
      %v747 = vadd.f32 %v607, %v746
      %v748 = vpop.f32.mrb[0].mxu0
      %749 = vmatprep.mubr.bf16.mxu0 0
      %750 = vmatmul.mubr.bf16.gmra.mrb[0].mxu0 %v677
      %v751 = vpop.f32.mrb[0].mxu0
      %v752 = vadd.f32 %v612, %v751
      %v753 = vpop.f32.mrb[0].mxu0
      %v754 = vpop.f32.mrb[0].mxu0
      %v755 = vadd.f32 %v615, %v754
      %v756 = vpop.f32.mrb[0].mxu0
      %757 = vmatprep.mubr.bf16.mxu0 0
      %758 = vmatmul.mubr.bf16.gmra.mrb[0].mxu0 %v677
      %v759 = vpop.f32.mrb[0].mxu0
      %v760 = vadd.f32 %v620, %v759
      %v761 = vpop.f32.mrb[0].mxu0
      %v762 = vpop.f32.mrb[0].mxu0
      %v763 = vadd.f32 %v623, %v762
      %v764 = vpop.f32.mrb[0].mxu0
      %765 = vmatprep.mubr.bf16.mxu0 0
      %766 = vmatmul.mubr.bf16.gmra.mrb[0].mxu0 %v680
      %v767 = vpop.f32.mrb[0].mxu0
      %v768 = vadd.f32 %v628, %v767
      %v769 = vpop.f32.mrb[0].mxu0
      %v770 = vpop.f32.mrb[0].mxu0
      %v771 = vadd.f32 %v631, %v770
      %v772 = vpop.f32.mrb[0].mxu0
      %773 = vmatprep.mubr.bf16.mxu0 0
      %774 = vmatmul.mubr.bf16.gmra.mrb[0].mxu0 %v680
      %v775 = vpop.f32.mrb[0].mxu0
      %v776 = vadd.f32 %v636, %v775
      %v777 = vpop.f32.mrb[0].mxu0
      %v778 = vpop.f32.mrb[0].mxu0
      %v779 = vadd.f32 %v639, %v778
      %v780 = vpop.f32.mrb[0].mxu0
      %781 = vmatprep.mubr.bf16.mxu0 0
      %782 = vmatmul.mubr.bf16.gmra.mrb[0].mxu0 %v683
      %v783 = vpop.f32.mrb[0].mxu0
      %v784 = vadd.f32 %v644, %v783
      %v785 = vpop.f32.mrb[0].mxu0
      %v786 = vpop.f32.mrb[0].mxu0
      %v787 = vadd.f32 %v647, %v786
      %v788 = vpop.f32.mrb[0].mxu0
      %789 = vmatprep.mubr.bf16.mxu0 0
      %790 = vmatmul.mubr.bf16.gmra.mrb[0].mxu0 %v683
      %v791 = vpop.f32.mrb[0].mxu0
      %v792 = vadd.f32 %v652, %v791
      %v793 = vpop.f32.mrb[0].mxu0
      %v794 = vpop.f32.mrb[0].mxu0
      %v795 = vadd.f32 %v655, %v794
      %v796 = vpop.f32.mrb[0].mxu0
      %797 = vdwg.mxu0
      %vm798 = vcmask 1044480
      %v799 = vrot.slane %v394, 3
      %v800 = vrot.slane %v395, 3
      %v801 = vsel %vm798, %v799, %v800
      %v802 = vrot.slane %v396, 3
      %v803 = vsel %vm798, %v800, %v802
      %v804 = vrot.slane %v397, 3
      %v805 = vrot.slane %v398, 3
      %v806 = vsel %vm798, %v804, %v805
      %v807 = vrot.slane %v399, 3
      %v808 = vsel %vm798, %v805, %v807
      %v809 = vrot.slane %v400, 3
      %v810 = vrot.slane %v401, 3
      %v811 = vsel %vm798, %v809, %v810
      %v812 = vrot.slane %v402, 3
      %v813 = vsel %vm798, %v810, %v812
      %v814 = vrot.slane %v403, 3
      %v815 = vrot.slane %v404, 3
      %v816 = vsel %vm798, %v814, %v815
      %v817 = vrot.slane %v405, 3
      %v818 = vsel %vm798, %v815, %v817
      %v819 = vrot.slane %v406, 3
      %v820 = vrot.slane %v407, 3
      %v821 = vsel %vm798, %v819, %v820
      %v822 = vrot.slane %v408, 3
      %v823 = vsel %vm798, %v820, %v822
      %v834 = vld [vmem:[%s2 + $0x20] sm:$0xf]
      %v835 = vld [vmem:[%s2 + $0x24] sm:$0xf]
      %v836 = vld [vmem:[%s2 + $0x28] sm:$0xf]
      %v837 = vld [vmem:[%s2 + $0x2c] sm:$0xf]
      %v838 = vpack.c.bf16 %v803, %v801
      %v839 = vpack.c.bf16 %v808, %v806
      %v840 = vpack.c.bf16 %v813, %v811
      %v841 = vpack.c.bf16 %v818, %v816
      %v842 = vpack.c.bf16 %v823, %v821
      %v847 = vunpack.c.l.b16 %v834
      %v848 = vunpack.c.l.b16 %v835
      %v849 = vunpack.c.l.b16 %v836
      %v850 = vunpack.c.l.b16 %v837
      %v851 = vpack.c.b16 %v848, %v847
      %v852 = vpack.c.b16 %v850, %v849
      %v856 = vsel %vm529, %v838, 0
      %v859 = vsel %vm529, %v839, 0
      %v862 = vsel %vm529, %v840, 0
      %v865 = vsel %vm529, %v841, 0
      %v868 = vsel %vm529, %v842, 0
      %870 = vmatprep.subr.bf16.mxu0 0
      %871 = vmatpush1.bf16.msra.mxu0 %v851
      %872 = vmatprep.subr.bf16.mxu0 0
      %873 = vmatpush1.bf16.msra.mxu0 %v852
      %874 = vmatprep.subr.bf16.mxu0 0
      %875 = vmatpush1.bf16.msra.mxu0 0
      %876 = vmatprep.subr.bf16.mxu0 0
      %877 = vmatpush1.bf16.msra.mxu0 0
      %878 = vmatprep.subr.bf16.mxu0 0
      %879 = vmatpush1.bf16.msra.mxu0 0
      %880 = vmatprep.subr.bf16.mxu0 0
      %881 = vmatpush1.bf16.msra.mxu0 0
      %882 = vmatprep.subr.bf16.mxu0 0
      %883 = vmatpush1.bf16.msra.mxu0 0
      %884 = vmatprep.subr.bf16.mxu0 0
      %885 = vmatpush1.bf16.msra.mxu0 0
      %886 = vmatprep.subr.bf16.mxu0 0
      %887 = vmatpush1.bf16.msra.mxu0 0
      %888 = vmatprep.subr.bf16.mxu0 0
      %889 = vmatpush1.bf16.msra.mxu0 0
      %890 = vmatprep.subr.bf16.mxu0 0
      %891 = vmatpush1.bf16.msra.mxu0 0
      %892 = vmatprep.subr.bf16.mxu0 0
      %893 = vmatpush1.bf16.msra.mxu0 0
      %894 = vmatprep.subr.bf16.mxu0 0
      %895 = vmatpush1.bf16.msra.mxu0 0
      %896 = vmatprep.subr.bf16.mxu0 0
      %897 = vmatpush1.bf16.msra.mxu0 0
      %898 = vmatprep.subr.bf16.mxu0 0
      %899 = vmatpush1.bf16.msra.mxu0 0
      %900 = vmatprep.subr.bf16.mxu0 0
      %901 = vmatpush1.bf16.msra.mxu0 0
      %902 = vmatprep.mubr.bf16.mxu0 0
      %903 = vmatmul.mubr.bf16.gmra.mrb[0].mxu0 %v856
      %v904 = vpop.f32.mrb[0].mxu0
      %v905 = vadd.f32 0.0, %v904
      %v906 = vpop.f32.mrb[0].mxu0
      %v907 = vpop.f32.mrb[0].mxu0
      %v908 = vadd.f32 0.0, %v907
      %v909 = vpop.f32.mrb[0].mxu0
      %910 = vmatprep.mubr.bf16.mxu0 0
      %911 = vmatmul.mubr.bf16.gmra.mrb[0].mxu0 %v856
      %v912 = vpop.f32.mrb[0].mxu0
      %v913 = vadd.f32 0.0, %v912
      %v914 = vpop.f32.mrb[0].mxu0
      %v915 = vpop.f32.mrb[0].mxu0
      %v916 = vadd.f32 0.0, %v915
      %v917 = vpop.f32.mrb[0].mxu0
      %918 = vmatprep.mubr.bf16.mxu0 0
      %919 = vmatmul.mubr.bf16.gmra.mrb[0].mxu0 %v859
      %v920 = vpop.f32.mrb[0].mxu0
      %v921 = vadd.f32 0.0, %v920
      %v922 = vpop.f32.mrb[0].mxu0
      %v923 = vpop.f32.mrb[0].mxu0
      %v924 = vadd.f32 0.0, %v923
      %v925 = vpop.f32.mrb[0].mxu0
      %926 = vmatprep.mubr.bf16.mxu0 0
      %927 = vmatmul.mubr.bf16.gmra.mrb[0].mxu0 %v859
      %v928 = vpop.f32.mrb[0].mxu0
      %v929 = vadd.f32 0.0, %v928
      %v930 = vpop.f32.mrb[0].mxu0
      %v931 = vpop.f32.mrb[0].mxu0
      %v932 = vadd.f32 0.0, %v931
      %v933 = vpop.f32.mrb[0].mxu0
      %934 = vmatprep.mubr.bf16.mxu0 0
      %935 = vmatmul.mubr.bf16.gmra.mrb[0].mxu0 %v862
      %v936 = vpop.f32.mrb[0].mxu0
      %v937 = vadd.f32 0.0, %v936
      %v938 = vpop.f32.mrb[0].mxu0
      %v939 = vpop.f32.mrb[0].mxu0
      %v940 = vadd.f32 0.0, %v939
      %v941 = vpop.f32.mrb[0].mxu0
      %942 = vmatprep.mubr.bf16.mxu0 0
      %943 = vmatmul.mubr.bf16.gmra.mrb[0].mxu0 %v862
      %v944 = vpop.f32.mrb[0].mxu0
      %v945 = vadd.f32 0.0, %v944
      %v946 = vpop.f32.mrb[0].mxu0
      %v947 = vpop.f32.mrb[0].mxu0
      %v948 = vadd.f32 0.0, %v947
      %v949 = vpop.f32.mrb[0].mxu0
      %950 = vmatprep.mubr.bf16.mxu0 0
      %951 = vmatmul.mubr.bf16.gmra.mrb[0].mxu0 %v865
      %v952 = vpop.f32.mrb[0].mxu0
      %v953 = vadd.f32 0.0, %v952
      %v954 = vpop.f32.mrb[0].mxu0
      %v955 = vpop.f32.mrb[0].mxu0
      %v956 = vadd.f32 0.0, %v955
      %v957 = vpop.f32.mrb[0].mxu0
      %958 = vmatprep.mubr.bf16.mxu0 0
      %959 = vmatmul.mubr.bf16.gmra.mrb[0].mxu0 %v865
      %v960 = vpop.f32.mrb[0].mxu0
      %v961 = vadd.f32 0.0, %v960
      %v962 = vpop.f32.mrb[0].mxu0
      %v963 = vpop.f32.mrb[0].mxu0
      %v964 = vadd.f32 0.0, %v963
      %v965 = vpop.f32.mrb[0].mxu0
      %966 = vmatprep.mubr.bf16.mxu0 0
      %967 = vmatmul.mubr.bf16.gmra.mrb[0].mxu0 %v868
      %v968 = vpop.f32.mrb[0].mxu0
      %v969 = vadd.f32 0.0, %v968
      %v970 = vpop.f32.mrb[0].mxu0
      %v971 = vpop.f32.mrb[0].mxu0
      %v972 = vadd.f32 0.0, %v971
      %v973 = vpop.f32.mrb[0].mxu0
      %974 = vmatprep.mubr.bf16.mxu0 0
      %975 = vmatmul.mubr.bf16.gmra.mrb[0].mxu0 %v868
      %v976 = vpop.f32.mrb[0].mxu0
      %v977 = vadd.f32 0.0, %v976
      %v978 = vpop.f32.mrb[0].mxu0
      %v979 = vpop.f32.mrb[0].mxu0
      %v980 = vadd.f32 0.0, %v979
      %v981 = vpop.f32.mrb[0].mxu0
      %982 = vdwg.mxu0
      %v983 = vadd.f32 %v720, %v905
      %v984 = vadd.f32 %v723, %v908
      %v985 = vadd.f32 %v728, %v913
      %v986 = vadd.f32 %v731, %v916
      %v987 = vadd.f32 %v736, %v921
      %v988 = vadd.f32 %v739, %v924
      %v989 = vadd.f32 %v744, %v929
      %v990 = vadd.f32 %v747, %v932
      %v991 = vadd.f32 %v752, %v937
      %v992 = vadd.f32 %v755, %v940
      %v993 = vadd.f32 %v760, %v945
      %v994 = vadd.f32 %v763, %v948
      %v995 = vadd.f32 %v768, %v953
      %v996 = vadd.f32 %v771, %v956
      %v997 = vadd.f32 %v776, %v961
      %v998 = vadd.f32 %v779, %v964
      %v999 = vadd.f32 %v784, %v969
      %v1000 = vadd.f32 %v787, %v972
      %v1001 = vadd.f32 %v792, %v977
      %v1002 = vadd.f32 %v795, %v980
      %v1006 = vrot.slane %v409, 1
      %v1007 = vrot.slane %v410, 1
      %v1008 = vsel %vm427, %v1006, %v1007
      %v1009 = vrot.slane %v411, 1
      %v1010 = vsel %vm427, %v1007, %v1009
      %v1013 = vld [vmem:[%s2 + $0x30] sm:$0xf]
      %v1014 = vld [vmem:[%s2 + $0x34] sm:$0xf]
      %v1015 = vld [vmem:[%s2 + $0x38] sm:$0xf]
      %v1016 = vld [vmem:[%s2 + $0x3c] sm:$0xf]
      %v1017 = vpack.c.bf16 %v1010, %v1008
      %v1022 = vunpack.c.l.b16 %v1013
      %v1023 = vunpack.c.l.b16 %v1014
      %v1024 = vunpack.c.l.b16 %v1015
      %v1025 = vunpack.c.l.b16 %v1016
      %v1026 = vpack.c.b16 %v1023, %v1022
      %v1027 = vpack.c.b16 %v1025, %v1024
      %v1031 = vsel %vm529, %v1017, 0
      %1033 = vmatprep.subr.bf16.mxu0 0
      %1034 = vmatpush1.bf16.msra.mxu0 %v1026
      %1035 = vmatprep.subr.bf16.mxu0 0
      %1036 = vmatpush1.bf16.msra.mxu0 %v1027
      %1037 = vmatprep.subr.bf16.mxu0 0
      %1038 = vmatpush1.bf16.msra.mxu0 0
      %1039 = vmatprep.subr.bf16.mxu0 0
      %1040 = vmatpush1.bf16.msra.mxu0 0
      %1041 = vmatprep.subr.bf16.mxu0 0
      %1042 = vmatpush1.bf16.msra.mxu0 0
      %1043 = vmatprep.subr.bf16.mxu0 0
      %1044 = vmatpush1.bf16.msra.mxu0 0
      %1045 = vmatprep.subr.bf16.mxu0 0
      %1046 = vmatpush1.bf16.msra.mxu0 0
      %1047 = vmatprep.subr.bf16.mxu0 0
      %1048 = vmatpush1.bf16.msra.mxu0 0
      %1049 = vmatprep.subr.bf16.mxu0 0
      %1050 = vmatpush1.bf16.msra.mxu0 0
      %1051 = vmatprep.subr.bf16.mxu0 0
      %1052 = vmatpush1.bf16.msra.mxu0 0
      %1053 = vmatprep.subr.bf16.mxu0 0
      %1054 = vmatpush1.bf16.msra.mxu0 0
      %1055 = vmatprep.subr.bf16.mxu0 0
      %1056 = vmatpush1.bf16.msra.mxu0 0
      %1057 = vmatprep.subr.bf16.mxu0 0
      %1058 = vmatpush1.bf16.msra.mxu0 0
      %1059 = vmatprep.subr.bf16.mxu0 0
      %1060 = vmatpush1.bf16.msra.mxu0 0
      %1061 = vmatprep.subr.bf16.mxu0 0
      %1062 = vmatpush1.bf16.msra.mxu0 0
      %1063 = vmatprep.subr.bf16.mxu0 0
      %1064 = vmatpush1.bf16.msra.mxu0 0
      %1065 = vmatprep.mubr.bf16.mxu0 0
      %1066 = vmatmul.mubr.bf16.gmra.mrb[0].mxu0 %v671
      %v1067 = vpop.f32.mrb[0].mxu0
      %v1068 = vadd.f32 0.0, %v1067
      %v1069 = vpop.f32.mrb[0].mxu0
      %v1070 = vpop.f32.mrb[0].mxu0
      %v1071 = vadd.f32 0.0, %v1070
      %v1072 = vpop.f32.mrb[0].mxu0
      %1073 = vmatprep.mubr.bf16.mxu0 0
      %1074 = vmatmul.mubr.bf16.gmra.mrb[0].mxu0 %v674
      %v1075 = vpop.f32.mrb[0].mxu0
      %v1076 = vadd.f32 0.0, %v1075
      %v1077 = vpop.f32.mrb[0].mxu0
      %v1078 = vpop.f32.mrb[0].mxu0
      %v1079 = vadd.f32 0.0, %v1078
      %v1080 = vpop.f32.mrb[0].mxu0
      %1081 = vmatprep.mubr.bf16.mxu0 0
      %1082 = vmatmul.mubr.bf16.gmra.mrb[0].mxu0 %v674
      %v1083 = vpop.f32.mrb[0].mxu0
      %v1084 = vadd.f32 0.0, %v1083
      %v1085 = vpop.f32.mrb[0].mxu0
      %v1086 = vpop.f32.mrb[0].mxu0
      %v1087 = vadd.f32 0.0, %v1086
      %v1088 = vpop.f32.mrb[0].mxu0
      %1089 = vmatprep.mubr.bf16.mxu0 0
      %1090 = vmatmul.mubr.bf16.gmra.mrb[0].mxu0 %v677
      %v1091 = vpop.f32.mrb[0].mxu0
      %v1092 = vadd.f32 0.0, %v1091
      %v1093 = vpop.f32.mrb[0].mxu0
      %v1094 = vpop.f32.mrb[0].mxu0
      %v1095 = vadd.f32 0.0, %v1094
      %v1096 = vpop.f32.mrb[0].mxu0
      %1097 = vmatprep.mubr.bf16.mxu0 0
      %1098 = vmatmul.mubr.bf16.gmra.mrb[0].mxu0 %v677
      %v1099 = vpop.f32.mrb[0].mxu0
      %v1100 = vadd.f32 0.0, %v1099
      %v1101 = vpop.f32.mrb[0].mxu0
      %v1102 = vpop.f32.mrb[0].mxu0
      %v1103 = vadd.f32 0.0, %v1102
      %v1104 = vpop.f32.mrb[0].mxu0
      %1105 = vmatprep.mubr.bf16.mxu0 0
      %1106 = vmatmul.mubr.bf16.gmra.mrb[0].mxu0 %v680
      %v1107 = vpop.f32.mrb[0].mxu0
      %v1108 = vadd.f32 0.0, %v1107
      %v1109 = vpop.f32.mrb[0].mxu0
      %v1110 = vpop.f32.mrb[0].mxu0
      %v1111 = vadd.f32 0.0, %v1110
      %v1112 = vpop.f32.mrb[0].mxu0
      %1113 = vmatprep.mubr.bf16.mxu0 0
      %1114 = vmatmul.mubr.bf16.gmra.mrb[0].mxu0 %v680
      %v1115 = vpop.f32.mrb[0].mxu0
      %v1116 = vadd.f32 0.0, %v1115
      %v1117 = vpop.f32.mrb[0].mxu0
      %v1118 = vpop.f32.mrb[0].mxu0
      %v1119 = vadd.f32 0.0, %v1118
      %v1120 = vpop.f32.mrb[0].mxu0
      %1121 = vmatprep.mubr.bf16.mxu0 0
      %1122 = vmatmul.mubr.bf16.gmra.mrb[0].mxu0 %v683
      %v1123 = vpop.f32.mrb[0].mxu0
      %v1124 = vadd.f32 0.0, %v1123
      %v1125 = vpop.f32.mrb[0].mxu0
      %v1126 = vpop.f32.mrb[0].mxu0
      %v1127 = vadd.f32 0.0, %v1126
      %v1128 = vpop.f32.mrb[0].mxu0
      %1129 = vmatprep.mubr.bf16.mxu0 0
      %1130 = vmatmul.mubr.bf16.gmra.mrb[0].mxu0 %v683
      %v1131 = vpop.f32.mrb[0].mxu0
      %v1132 = vadd.f32 0.0, %v1131
      %v1133 = vpop.f32.mrb[0].mxu0
      %v1134 = vpop.f32.mrb[0].mxu0
      %v1135 = vadd.f32 0.0, %v1134
      %v1136 = vpop.f32.mrb[0].mxu0
      %1137 = vmatprep.mubr.bf16.mxu0 0
      %1138 = vmatmul.mubr.bf16.gmra.mrb[0].mxu0 %v1031
      %v1139 = vpop.f32.mrb[0].mxu0
      %v1140 = vadd.f32 0.0, %v1139
      %v1141 = vpop.f32.mrb[0].mxu0
      %v1142 = vpop.f32.mrb[0].mxu0
      %v1143 = vadd.f32 0.0, %v1142
      %v1144 = vpop.f32.mrb[0].mxu0
      %1145 = vdwg.mxu0
      %v1146 = vadd.f32 %v983, %v1068
      %v1147 = vadd.f32 %v984, %v1071
      %v1148 = vadd.f32 %v985, %v1076
      %v1149 = vadd.f32 %v986, %v1079
      %v1150 = vadd.f32 %v987, %v1084
      %v1151 = vadd.f32 %v988, %v1087
      %v1152 = vadd.f32 %v989, %v1092
      %v1153 = vadd.f32 %v990, %v1095
      %v1154 = vadd.f32 %v991, %v1100
      %v1155 = vadd.f32 %v992, %v1103
      %v1156 = vadd.f32 %v993, %v1108
      %v1157 = vadd.f32 %v994, %v1111
      %v1158 = vadd.f32 %v995, %v1116
      %v1159 = vadd.f32 %v996, %v1119
      %v1160 = vadd.f32 %v997, %v1124
      %v1161 = vadd.f32 %v998, %v1127
      %v1162 = vadd.f32 %v999, %v1132
      %v1163 = vadd.f32 %v1000, %v1135
      %v1164 = vadd.f32 %v1001, %v1140
      %v1165 = vadd.f32 %v1002, %v1143
      %v1166 = vrot.slane %v409, 2
      %v1167 = vrot.slane %v410, 2
      %v1168 = vsel %vm472, %v1166, %v1167
      %v1169 = vrot.slane %v411, 2
      %v1170 = vsel %vm472, %v1167, %v1169
      %v1173 = vld [vmem:[%s2 + $0x40] sm:$0xf]
      %v1174 = vld [vmem:[%s2 + $0x44] sm:$0xf]
      %v1175 = vld [vmem:[%s2 + $0x48] sm:$0xf]
      %v1176 = vld [vmem:[%s2 + $0x4c] sm:$0xf]
      %v1177 = vpack.c.bf16 %v1170, %v1168
      %v1182 = vunpack.c.l.b16 %v1173
      %v1183 = vunpack.c.l.b16 %v1174
      %v1184 = vunpack.c.l.b16 %v1175
      %v1185 = vunpack.c.l.b16 %v1176
      %v1186 = vpack.c.b16 %v1183, %v1182
      %v1187 = vpack.c.b16 %v1185, %v1184
      %v1191 = vsel %vm529, %v1177, 0
      %1193 = vmatprep.subr.bf16.mxu0 0
      %1194 = vmatpush1.bf16.msra.mxu0 %v1186
      %1195 = vmatprep.subr.bf16.mxu0 0
      %1196 = vmatpush1.bf16.msra.mxu0 %v1187
      %1197 = vmatprep.subr.bf16.mxu0 0
      %1198 = vmatpush1.bf16.msra.mxu0 0
      %1199 = vmatprep.subr.bf16.mxu0 0
      %1200 = vmatpush1.bf16.msra.mxu0 0
      %1201 = vmatprep.subr.bf16.mxu0 0
      %1202 = vmatpush1.bf16.msra.mxu0 0
      %1203 = vmatprep.subr.bf16.mxu0 0
      %1204 = vmatpush1.bf16.msra.mxu0 0
      %1205 = vmatprep.subr.bf16.mxu0 0
      %1206 = vmatpush1.bf16.msra.mxu0 0
      %1207 = vmatprep.subr.bf16.mxu0 0
      %1208 = vmatpush1.bf16.msra.mxu0 0
      %1209 = vmatprep.subr.bf16.mxu0 0
      %1210 = vmatpush1.bf16.msra.mxu0 0
      %1211 = vmatprep.subr.bf16.mxu0 0
      %1212 = vmatpush1.bf16.msra.mxu0 0
      %1213 = vmatprep.subr.bf16.mxu0 0
      %1214 = vmatpush1.bf16.msra.mxu0 0
      %1215 = vmatprep.subr.bf16.mxu0 0
      %1216 = vmatpush1.bf16.msra.mxu0 0
      %1217 = vmatprep.subr.bf16.mxu0 0
      %1218 = vmatpush1.bf16.msra.mxu0 0
      %1219 = vmatprep.subr.bf16.mxu0 0
      %1220 = vmatpush1.bf16.msra.mxu0 0
      %1221 = vmatprep.subr.bf16.mxu0 0
      %1222 = vmatpush1.bf16.msra.mxu0 0
      %1223 = vmatprep.subr.bf16.mxu0 0
      %1224 = vmatpush1.bf16.msra.mxu0 0
      %1225 = vmatprep.mubr.bf16.mxu0 0
      %1226 = vmatmul.mubr.bf16.gmra.mrb[0].mxu0 %v531
      %v1227 = vpop.f32.mrb[0].mxu0
      %v1228 = vadd.f32 0.0, %v1227
      %v1229 = vpop.f32.mrb[0].mxu0
      %v1230 = vpop.f32.mrb[0].mxu0
      %v1231 = vadd.f32 0.0, %v1230
      %v1232 = vpop.f32.mrb[0].mxu0
      %1233 = vmatprep.mubr.bf16.mxu0 0
      %1234 = vmatmul.mubr.bf16.gmra.mrb[0].mxu0 %v534
      %v1235 = vpop.f32.mrb[0].mxu0
      %v1236 = vadd.f32 0.0, %v1235
      %v1237 = vpop.f32.mrb[0].mxu0
      %v1238 = vpop.f32.mrb[0].mxu0
      %v1239 = vadd.f32 0.0, %v1238
      %v1240 = vpop.f32.mrb[0].mxu0
      %1241 = vmatprep.mubr.bf16.mxu0 0
      %1242 = vmatmul.mubr.bf16.gmra.mrb[0].mxu0 %v534
      %v1243 = vpop.f32.mrb[0].mxu0
      %v1244 = vadd.f32 0.0, %v1243
      %v1245 = vpop.f32.mrb[0].mxu0
      %v1246 = vpop.f32.mrb[0].mxu0
      %v1247 = vadd.f32 0.0, %v1246
      %v1248 = vpop.f32.mrb[0].mxu0
      %1249 = vmatprep.mubr.bf16.mxu0 0
      %1250 = vmatmul.mubr.bf16.gmra.mrb[0].mxu0 %v537
      %v1251 = vpop.f32.mrb[0].mxu0
      %v1252 = vadd.f32 0.0, %v1251
      %v1253 = vpop.f32.mrb[0].mxu0
      %v1254 = vpop.f32.mrb[0].mxu0
      %v1255 = vadd.f32 0.0, %v1254
      %v1256 = vpop.f32.mrb[0].mxu0
      %1257 = vmatprep.mubr.bf16.mxu0 0
      %1258 = vmatmul.mubr.bf16.gmra.mrb[0].mxu0 %v537
      %v1259 = vpop.f32.mrb[0].mxu0
      %v1260 = vadd.f32 0.0, %v1259
      %v1261 = vpop.f32.mrb[0].mxu0
      %v1262 = vpop.f32.mrb[0].mxu0
      %v1263 = vadd.f32 0.0, %v1262
      %v1264 = vpop.f32.mrb[0].mxu0
      %1265 = vmatprep.mubr.bf16.mxu0 0
      %1266 = vmatmul.mubr.bf16.gmra.mrb[0].mxu0 %v540
      %v1267 = vpop.f32.mrb[0].mxu0
      %v1268 = vadd.f32 0.0, %v1267
      %v1269 = vpop.f32.mrb[0].mxu0
      %v1270 = vpop.f32.mrb[0].mxu0
      %v1271 = vadd.f32 0.0, %v1270
      %v1272 = vpop.f32.mrb[0].mxu0
      %1273 = vmatprep.mubr.bf16.mxu0 0
      %1274 = vmatmul.mubr.bf16.gmra.mrb[0].mxu0 %v540
      %v1275 = vpop.f32.mrb[0].mxu0
      %v1276 = vadd.f32 0.0, %v1275
      %v1277 = vpop.f32.mrb[0].mxu0
      %v1278 = vpop.f32.mrb[0].mxu0
      %v1279 = vadd.f32 0.0, %v1278
      %v1280 = vpop.f32.mrb[0].mxu0
      %1281 = vmatprep.mubr.bf16.mxu0 0
      %1282 = vmatmul.mubr.bf16.gmra.mrb[0].mxu0 %v543
      %v1283 = vpop.f32.mrb[0].mxu0
      %v1284 = vadd.f32 0.0, %v1283
      %v1285 = vpop.f32.mrb[0].mxu0
      %v1286 = vpop.f32.mrb[0].mxu0
      %v1287 = vadd.f32 0.0, %v1286
      %v1288 = vpop.f32.mrb[0].mxu0
      %1289 = vmatprep.mubr.bf16.mxu0 0
      %1290 = vmatmul.mubr.bf16.gmra.mrb[0].mxu0 %v543
      %v1291 = vpop.f32.mrb[0].mxu0
      %v1292 = vadd.f32 0.0, %v1291
      %v1293 = vpop.f32.mrb[0].mxu0
      %v1294 = vpop.f32.mrb[0].mxu0
      %v1295 = vadd.f32 0.0, %v1294
      %v1296 = vpop.f32.mrb[0].mxu0
      %1297 = vmatprep.mubr.bf16.mxu0 0
      %1298 = vmatmul.mubr.bf16.gmra.mrb[0].mxu0 %v1191
      %v1299 = vpop.f32.mrb[0].mxu0
      %v1300 = vadd.f32 0.0, %v1299
      %v1301 = vpop.f32.mrb[0].mxu0
      %v1302 = vpop.f32.mrb[0].mxu0
      %v1303 = vadd.f32 0.0, %v1302
      %v1304 = vpop.f32.mrb[0].mxu0
      %1305 = vdwg.mxu0
      %v1306 = vadd.f32 %v1146, %v1228
      %v1307 = vadd.f32 %v1147, %v1231
      %v1308 = vadd.f32 %v1148, %v1236
      %v1309 = vadd.f32 %v1149, %v1239
      %v1310 = vadd.f32 %v1150, %v1244
      %v1311 = vadd.f32 %v1151, %v1247
      %v1312 = vadd.f32 %v1152, %v1252
      %v1313 = vadd.f32 %v1153, %v1255
      %v1314 = vadd.f32 %v1154, %v1260
      %v1315 = vadd.f32 %v1155, %v1263
      %v1316 = vadd.f32 %v1156, %v1268
      %v1317 = vadd.f32 %v1157, %v1271
      %v1318 = vadd.f32 %v1158, %v1276
      %v1319 = vadd.f32 %v1159, %v1279
      %v1320 = vadd.f32 %v1160, %v1284
      %v1321 = vadd.f32 %v1161, %v1287
      %v1322 = vadd.f32 %v1162, %v1292
      %v1323 = vadd.f32 %v1163, %v1295
      %v1324 = vadd.f32 %v1164, %v1300
      %v1325 = vadd.f32 %v1165, %v1303
      %v1326 = vrot.slane %v409, 3
      %v1327 = vrot.slane %v410, 3
      %v1328 = vsel %vm798, %v1326, %v1327
      %v1329 = vrot.slane %v411, 3
      %v1330 = vsel %vm798, %v1327, %v1329
      %v1333 = vld [vmem:[%s2 + $0x50] sm:$0xf]
      %v1334 = vld [vmem:[%s2 + $0x54] sm:$0xf]
      %v1335 = vld [vmem:[%s2 + $0x58] sm:$0xf]
      %v1336 = vld [vmem:[%s2 + $0x5c] sm:$0xf]
      %v1337 = vpack.c.bf16 %v1330, %v1328
      %v1342 = vunpack.c.l.b16 %v1333
      %v1343 = vunpack.c.l.b16 %v1334
      %v1344 = vunpack.c.l.b16 %v1335
      %v1345 = vunpack.c.l.b16 %v1336
      %v1346 = vpack.c.b16 %v1343, %v1342
      %v1347 = vpack.c.b16 %v1345, %v1344
      %v1351 = vsel %vm529, %v1337, 0
      %1353 = vmatprep.subr.bf16.mxu0 0
      %1354 = vmatpush1.bf16.msra.mxu0 %v1346
      %1355 = vmatprep.subr.bf16.mxu0 0
      %1356 = vmatpush1.bf16.msra.mxu0 %v1347
      %1357 = vmatprep.subr.bf16.mxu0 0
      %1358 = vmatpush1.bf16.msra.mxu0 0
      %1359 = vmatprep.subr.bf16.mxu0 0
      %1360 = vmatpush1.bf16.msra.mxu0 0
      %1361 = vmatprep.subr.bf16.mxu0 0
      %1362 = vmatpush1.bf16.msra.mxu0 0
      %1363 = vmatprep.subr.bf16.mxu0 0
      %1364 = vmatpush1.bf16.msra.mxu0 0
      %1365 = vmatprep.subr.bf16.mxu0 0
      %1366 = vmatpush1.bf16.msra.mxu0 0
      %1367 = vmatprep.subr.bf16.mxu0 0
      %1368 = vmatpush1.bf16.msra.mxu0 0
      %1369 = vmatprep.subr.bf16.mxu0 0
      %1370 = vmatpush1.bf16.msra.mxu0 0
      %1371 = vmatprep.subr.bf16.mxu0 0
      %1372 = vmatpush1.bf16.msra.mxu0 0
      %1373 = vmatprep.subr.bf16.mxu0 0
      %1374 = vmatpush1.bf16.msra.mxu0 0
      %1375 = vmatprep.subr.bf16.mxu0 0
      %1376 = vmatpush1.bf16.msra.mxu0 0
      %1377 = vmatprep.subr.bf16.mxu0 0
      %1378 = vmatpush1.bf16.msra.mxu0 0
      %1379 = vmatprep.subr.bf16.mxu0 0
      %1380 = vmatpush1.bf16.msra.mxu0 0
      %1381 = vmatprep.subr.bf16.mxu0 0
      %1382 = vmatpush1.bf16.msra.mxu0 0
      %1383 = vmatprep.subr.bf16.mxu0 0
      %1384 = vmatpush1.bf16.msra.mxu0 0
      %1385 = vmatprep.mubr.bf16.mxu0 0
      %1386 = vmatmul.mubr.bf16.gmra.mrb[0].mxu0 %v856
      %v1387 = vpop.f32.mrb[0].mxu0
      %v1388 = vadd.f32 0.0, %v1387
      %v1389 = vpop.f32.mrb[0].mxu0
      %v1390 = vpop.f32.mrb[0].mxu0
      %v1391 = vadd.f32 0.0, %v1390
      %v1392 = vpop.f32.mrb[0].mxu0
      %1393 = vmatprep.mubr.bf16.mxu0 0
      %1394 = vmatmul.mubr.bf16.gmra.mrb[0].mxu0 %v859
      %v1395 = vpop.f32.mrb[0].mxu0
      %v1396 = vadd.f32 0.0, %v1395
      %v1397 = vpop.f32.mrb[0].mxu0
      %v1398 = vpop.f32.mrb[0].mxu0
      %v1399 = vadd.f32 0.0, %v1398
      %v1400 = vpop.f32.mrb[0].mxu0
      %1401 = vmatprep.mubr.bf16.mxu0 0
      %1402 = vmatmul.mubr.bf16.gmra.mrb[0].mxu0 %v859
      %v1403 = vpop.f32.mrb[0].mxu0
      %v1404 = vadd.f32 0.0, %v1403
      %v1405 = vpop.f32.mrb[0].mxu0
      %v1406 = vpop.f32.mrb[0].mxu0
      %v1407 = vadd.f32 0.0, %v1406
      %v1408 = vpop.f32.mrb[0].mxu0
      %1409 = vmatprep.mubr.bf16.mxu0 0
      %1410 = vmatmul.mubr.bf16.gmra.mrb[0].mxu0 %v862
      %v1411 = vpop.f32.mrb[0].mxu0
      %v1412 = vadd.f32 0.0, %v1411
      %v1413 = vpop.f32.mrb[0].mxu0
      %v1414 = vpop.f32.mrb[0].mxu0
      %v1415 = vadd.f32 0.0, %v1414
      %v1416 = vpop.f32.mrb[0].mxu0
      %1417 = vmatprep.mubr.bf16.mxu0 0
      %1418 = vmatmul.mubr.bf16.gmra.mrb[0].mxu0 %v862
      %v1419 = vpop.f32.mrb[0].mxu0
      %v1420 = vadd.f32 0.0, %v1419
      %v1421 = vpop.f32.mrb[0].mxu0
      %v1422 = vpop.f32.mrb[0].mxu0
      %v1423 = vadd.f32 0.0, %v1422
      %v1424 = vpop.f32.mrb[0].mxu0
      %1425 = vmatprep.mubr.bf16.mxu0 0
      %1426 = vmatmul.mubr.bf16.gmra.mrb[0].mxu0 %v865
      %v1427 = vpop.f32.mrb[0].mxu0
      %v1428 = vadd.f32 0.0, %v1427
      %v1429 = vpop.f32.mrb[0].mxu0
      %v1430 = vpop.f32.mrb[0].mxu0
      %v1431 = vadd.f32 0.0, %v1430
      %v1432 = vpop.f32.mrb[0].mxu0
      %1433 = vmatprep.mubr.bf16.mxu0 0
      %1434 = vmatmul.mubr.bf16.gmra.mrb[0].mxu0 %v865
      %v1435 = vpop.f32.mrb[0].mxu0
      %v1436 = vadd.f32 0.0, %v1435
      %v1437 = vpop.f32.mrb[0].mxu0
      %v1438 = vpop.f32.mrb[0].mxu0
      %v1439 = vadd.f32 0.0, %v1438
      %v1440 = vpop.f32.mrb[0].mxu0
      %1441 = vmatprep.mubr.bf16.mxu0 0
      %1442 = vmatmul.mubr.bf16.gmra.mrb[0].mxu0 %v868
      %v1443 = vpop.f32.mrb[0].mxu0
      %v1444 = vadd.f32 0.0, %v1443
      %v1445 = vpop.f32.mrb[0].mxu0
      %v1446 = vpop.f32.mrb[0].mxu0
      %v1447 = vadd.f32 0.0, %v1446
      %v1448 = vpop.f32.mrb[0].mxu0
      %1449 = vmatprep.mubr.bf16.mxu0 0
      %1450 = vmatmul.mubr.bf16.gmra.mrb[0].mxu0 %v868
      %v1451 = vpop.f32.mrb[0].mxu0
      %v1452 = vadd.f32 0.0, %v1451
      %v1453 = vpop.f32.mrb[0].mxu0
      %v1454 = vpop.f32.mrb[0].mxu0
      %v1455 = vadd.f32 0.0, %v1454
      %v1456 = vpop.f32.mrb[0].mxu0
      %1457 = vmatprep.mubr.bf16.mxu0 0
      %1458 = vmatmul.mubr.bf16.gmra.mrb[0].mxu0 %v1351
      %v1459 = vpop.f32.mrb[0].mxu0
      %v1460 = vadd.f32 0.0, %v1459
      %v1461 = vpop.f32.mrb[0].mxu0
      %v1462 = vpop.f32.mrb[0].mxu0
      %v1463 = vadd.f32 0.0, %v1462
      %v1464 = vpop.f32.mrb[0].mxu0
      %1465 = vdwg.mxu0
      %v1466 = vadd.f32 %v1306, %v1388
      %v1467 = vadd.f32 %v1307, %v1391
      %v1468 = vadd.f32 %v1308, %v1396
      %v1469 = vadd.f32 %v1309, %v1399
      %v1470 = vadd.f32 %v1310, %v1404
      %v1471 = vadd.f32 %v1311, %v1407
      %v1472 = vadd.f32 %v1312, %v1412
      %v1473 = vadd.f32 %v1313, %v1415
      %v1474 = vadd.f32 %v1314, %v1420
      %v1475 = vadd.f32 %v1315, %v1423
      %v1476 = vadd.f32 %v1316, %v1428
      %v1477 = vadd.f32 %v1317, %v1431
      %v1478 = vadd.f32 %v1318, %v1436
      %v1479 = vadd.f32 %v1319, %v1439
      %v1480 = vadd.f32 %v1320, %v1444
      %v1481 = vadd.f32 %v1321, %v1447
      %v1482 = vadd.f32 %v1322, %v1452
      %v1483 = vadd.f32 %v1323, %v1455
      %v1484 = vadd.f32 %v1324, %v1460
      %v1485 = vadd.f32 %v1325, %v1463
      %v1486 = vld [vmem:[%s2 + $0x60] sm:$0xf]
      %v1487 = vld [vmem:[%s2 + $0x64] sm:$0xf]
      %v1488 = vld [vmem:[%s2 + $0x68] sm:$0xf]
      %v1489 = vld [vmem:[%s2 + $0x6c] sm:$0xf]
      %v1494 = vunpack.c.l.b16 %v1486
      %v1495 = vunpack.c.l.b16 %v1487
      %v1496 = vunpack.c.l.b16 %v1488
      %v1497 = vunpack.c.l.b16 %v1489
      %v1498 = vpack.c.b16 %v1495, %v1494
      %v1499 = vpack.c.b16 %v1497, %v1496
      %1502 = vmatprep.subr.bf16.mxu0 0
      %1503 = vmatpush1.bf16.msra.mxu0 %v1498
      %1504 = vmatprep.subr.bf16.mxu0 0
      %1505 = vmatpush1.bf16.msra.mxu0 %v1499
      %1506 = vmatprep.subr.bf16.mxu0 0
      %1507 = vmatpush1.bf16.msra.mxu0 0
      %1508 = vmatprep.subr.bf16.mxu0 0
      %1509 = vmatpush1.bf16.msra.mxu0 0
      %1510 = vmatprep.subr.bf16.mxu0 0
      %1511 = vmatpush1.bf16.msra.mxu0 0
      %1512 = vmatprep.subr.bf16.mxu0 0
      %1513 = vmatpush1.bf16.msra.mxu0 0
      %1514 = vmatprep.subr.bf16.mxu0 0
      %1515 = vmatpush1.bf16.msra.mxu0 0
      %1516 = vmatprep.subr.bf16.mxu0 0
      %1517 = vmatpush1.bf16.msra.mxu0 0
      %1518 = vmatprep.subr.bf16.mxu0 0
      %1519 = vmatpush1.bf16.msra.mxu0 0
      %1520 = vmatprep.subr.bf16.mxu0 0
      %1521 = vmatpush1.bf16.msra.mxu0 0
      %1522 = vmatprep.subr.bf16.mxu0 0
      %1523 = vmatpush1.bf16.msra.mxu0 0
      %1524 = vmatprep.subr.bf16.mxu0 0
      %1525 = vmatpush1.bf16.msra.mxu0 0
      %1526 = vmatprep.subr.bf16.mxu0 0
      %1527 = vmatpush1.bf16.msra.mxu0 0
      %1528 = vmatprep.subr.bf16.mxu0 0
      %1529 = vmatpush1.bf16.msra.mxu0 0
      %1530 = vmatprep.subr.bf16.mxu0 0
      %1531 = vmatpush1.bf16.msra.mxu0 0
      %1532 = vmatprep.subr.bf16.mxu0 0
      %1533 = vmatpush1.bf16.msra.mxu0 0
      %1534 = vmatprep.mubr.bf16.mxu0 0
      %1535 = vmatmul.mubr.bf16.gmra.mrb[0].mxu0 %v674
      %v1536 = vpop.f32.mrb[0].mxu0
      %v1537 = vadd.f32 0.0, %v1536
      %v1538 = vpop.f32.mrb[0].mxu0
      %v1539 = vpop.f32.mrb[0].mxu0
      %v1540 = vadd.f32 0.0, %v1539
      %v1541 = vpop.f32.mrb[0].mxu0
      %1542 = vmatprep.mubr.bf16.mxu0 0
      %1543 = vmatmul.mubr.bf16.gmra.mrb[0].mxu0 %v674
      %v1544 = vpop.f32.mrb[0].mxu0
      %v1545 = vadd.f32 0.0, %v1544
      %v1546 = vpop.f32.mrb[0].mxu0
      %v1547 = vpop.f32.mrb[0].mxu0
      %v1548 = vadd.f32 0.0, %v1547
      %v1549 = vpop.f32.mrb[0].mxu0
      %1550 = vmatprep.mubr.bf16.mxu0 0
      %1551 = vmatmul.mubr.bf16.gmra.mrb[0].mxu0 %v677
      %v1552 = vpop.f32.mrb[0].mxu0
      %v1553 = vadd.f32 0.0, %v1552
      %v1554 = vpop.f32.mrb[0].mxu0
      %v1555 = vpop.f32.mrb[0].mxu0
      %v1556 = vadd.f32 0.0, %v1555
      %v1557 = vpop.f32.mrb[0].mxu0
      %1558 = vmatprep.mubr.bf16.mxu0 0
      %1559 = vmatmul.mubr.bf16.gmra.mrb[0].mxu0 %v677
      %v1560 = vpop.f32.mrb[0].mxu0
      %v1561 = vadd.f32 0.0, %v1560
      %v1562 = vpop.f32.mrb[0].mxu0
      %v1563 = vpop.f32.mrb[0].mxu0
      %v1564 = vadd.f32 0.0, %v1563
      %v1565 = vpop.f32.mrb[0].mxu0
      %1566 = vmatprep.mubr.bf16.mxu0 0
      %1567 = vmatmul.mubr.bf16.gmra.mrb[0].mxu0 %v680
      %v1568 = vpop.f32.mrb[0].mxu0
      %v1569 = vadd.f32 0.0, %v1568
      %v1570 = vpop.f32.mrb[0].mxu0
      %v1571 = vpop.f32.mrb[0].mxu0
      %v1572 = vadd.f32 0.0, %v1571
      %v1573 = vpop.f32.mrb[0].mxu0
      %1574 = vmatprep.mubr.bf16.mxu0 0
      %1575 = vmatmul.mubr.bf16.gmra.mrb[0].mxu0 %v680
      %v1576 = vpop.f32.mrb[0].mxu0
      %v1577 = vadd.f32 0.0, %v1576
      %v1578 = vpop.f32.mrb[0].mxu0
      %v1579 = vpop.f32.mrb[0].mxu0
      %v1580 = vadd.f32 0.0, %v1579
      %v1581 = vpop.f32.mrb[0].mxu0
      %1582 = vmatprep.mubr.bf16.mxu0 0
      %1583 = vmatmul.mubr.bf16.gmra.mrb[0].mxu0 %v683
      %v1584 = vpop.f32.mrb[0].mxu0
      %v1585 = vadd.f32 0.0, %v1584
      %v1586 = vpop.f32.mrb[0].mxu0
      %v1587 = vpop.f32.mrb[0].mxu0
      %v1588 = vadd.f32 0.0, %v1587
      %v1589 = vpop.f32.mrb[0].mxu0
      %1590 = vmatprep.mubr.bf16.mxu0 0
      %1591 = vmatmul.mubr.bf16.gmra.mrb[0].mxu0 %v683
      %v1592 = vpop.f32.mrb[0].mxu0
      %v1593 = vadd.f32 0.0, %v1592
      %v1594 = vpop.f32.mrb[0].mxu0
      %v1595 = vpop.f32.mrb[0].mxu0
      %v1596 = vadd.f32 0.0, %v1595
      %v1597 = vpop.f32.mrb[0].mxu0
      %1598 = vmatprep.mubr.bf16.mxu0 0
      %1599 = vmatmul.mubr.bf16.gmra.mrb[0].mxu0 %v1031
      %v1600 = vpop.f32.mrb[0].mxu0
      %v1601 = vadd.f32 0.0, %v1600
      %v1602 = vpop.f32.mrb[0].mxu0
      %v1603 = vpop.f32.mrb[0].mxu0
      %v1604 = vadd.f32 0.0, %v1603
      %v1605 = vpop.f32.mrb[0].mxu0
      %1606 = vmatprep.mubr.bf16.mxu0 0
      %1607 = vmatmul.mubr.bf16.gmra.mrb[0].mxu0 %v1031
      %v1608 = vpop.f32.mrb[0].mxu0
      %v1609 = vadd.f32 0.0, %v1608
      %v1610 = vpop.f32.mrb[0].mxu0
      %v1611 = vpop.f32.mrb[0].mxu0
      %v1612 = vadd.f32 0.0, %v1611
      %v1613 = vpop.f32.mrb[0].mxu0
      %1614 = vdwg.mxu0
      %v1615 = vadd.f32 %v1466, %v1537
      %v1616 = vadd.f32 %v1467, %v1540
      %v1617 = vadd.f32 %v1468, %v1545
      %v1618 = vadd.f32 %v1469, %v1548
      %v1619 = vadd.f32 %v1470, %v1553
      %v1620 = vadd.f32 %v1471, %v1556
      %v1621 = vadd.f32 %v1472, %v1561
      %v1622 = vadd.f32 %v1473, %v1564
      %v1623 = vadd.f32 %v1474, %v1569
      %v1624 = vadd.f32 %v1475, %v1572
      %v1625 = vadd.f32 %v1476, %v1577
      %v1626 = vadd.f32 %v1477, %v1580
      %v1627 = vadd.f32 %v1478, %v1585
      %v1628 = vadd.f32 %v1479, %v1588
      %v1629 = vadd.f32 %v1480, %v1593
      %v1630 = vadd.f32 %v1481, %v1596
      %v1631 = vadd.f32 %v1482, %v1601
      %v1632 = vadd.f32 %v1483, %v1604
      %v1633 = vadd.f32 %v1484, %v1609
      %v1634 = vadd.f32 %v1485, %v1612
      %v1635 = vld [vmem:[%s2 + $0x70] sm:$0xf]
      %v1636 = vld [vmem:[%s2 + $0x74] sm:$0xf]
      %v1637 = vld [vmem:[%s2 + $0x78] sm:$0xf]
      %v1638 = vld [vmem:[%s2 + $0x7c] sm:$0xf]
      %v1643 = vunpack.c.l.b16 %v1635
      %v1644 = vunpack.c.l.b16 %v1636
      %v1645 = vunpack.c.l.b16 %v1637
      %v1646 = vunpack.c.l.b16 %v1638
      %v1647 = vpack.c.b16 %v1644, %v1643
      %v1648 = vpack.c.b16 %v1646, %v1645
      %1651 = vmatprep.subr.bf16.mxu0 0
      %1652 = vmatpush1.bf16.msra.mxu0 %v1647
      %1653 = vmatprep.subr.bf16.mxu0 0
      %1654 = vmatpush1.bf16.msra.mxu0 %v1648
      %1655 = vmatprep.subr.bf16.mxu0 0
      %1656 = vmatpush1.bf16.msra.mxu0 0
      %1657 = vmatprep.subr.bf16.mxu0 0
      %1658 = vmatpush1.bf16.msra.mxu0 0
      %1659 = vmatprep.subr.bf16.mxu0 0
      %1660 = vmatpush1.bf16.msra.mxu0 0
      %1661 = vmatprep.subr.bf16.mxu0 0
      %1662 = vmatpush1.bf16.msra.mxu0 0
      %1663 = vmatprep.subr.bf16.mxu0 0
      %1664 = vmatpush1.bf16.msra.mxu0 0
      %1665 = vmatprep.subr.bf16.mxu0 0
      %1666 = vmatpush1.bf16.msra.mxu0 0
      %1667 = vmatprep.subr.bf16.mxu0 0
      %1668 = vmatpush1.bf16.msra.mxu0 0
      %1669 = vmatprep.subr.bf16.mxu0 0
      %1670 = vmatpush1.bf16.msra.mxu0 0
      %1671 = vmatprep.subr.bf16.mxu0 0
      %1672 = vmatpush1.bf16.msra.mxu0 0
      %1673 = vmatprep.subr.bf16.mxu0 0
      %1674 = vmatpush1.bf16.msra.mxu0 0
      %1675 = vmatprep.subr.bf16.mxu0 0
      %1676 = vmatpush1.bf16.msra.mxu0 0
      %1677 = vmatprep.subr.bf16.mxu0 0
      %1678 = vmatpush1.bf16.msra.mxu0 0
      %1679 = vmatprep.subr.bf16.mxu0 0
      %1680 = vmatpush1.bf16.msra.mxu0 0
      %1681 = vmatprep.subr.bf16.mxu0 0
      %1682 = vmatpush1.bf16.msra.mxu0 0
      %1683 = vmatprep.mubr.bf16.mxu0 0
      %1684 = vmatmul.mubr.bf16.gmra.mrb[0].mxu0 %v534
      %v1685 = vpop.f32.mrb[0].mxu0
      %v1686 = vadd.f32 0.0, %v1685
      %v1687 = vpop.f32.mrb[0].mxu0
      %v1688 = vpop.f32.mrb[0].mxu0
      %v1689 = vadd.f32 0.0, %v1688
      %v1690 = vpop.f32.mrb[0].mxu0
      %1691 = vmatprep.mubr.bf16.mxu0 0
      %1692 = vmatmul.mubr.bf16.gmra.mrb[0].mxu0 %v534
      %v1693 = vpop.f32.mrb[0].mxu0
      %v1694 = vadd.f32 0.0, %v1693
      %v1695 = vpop.f32.mrb[0].mxu0
      %v1696 = vpop.f32.mrb[0].mxu0
      %v1697 = vadd.f32 0.0, %v1696
      %v1698 = vpop.f32.mrb[0].mxu0
      %1699 = vmatprep.mubr.bf16.mxu0 0
      %1700 = vmatmul.mubr.bf16.gmra.mrb[0].mxu0 %v537
      %v1701 = vpop.f32.mrb[0].mxu0
      %v1702 = vadd.f32 0.0, %v1701
      %v1703 = vpop.f32.mrb[0].mxu0
      %v1704 = vpop.f32.mrb[0].mxu0
      %v1705 = vadd.f32 0.0, %v1704
      %v1706 = vpop.f32.mrb[0].mxu0
      %1707 = vmatprep.mubr.bf16.mxu0 0
      %1708 = vmatmul.mubr.bf16.gmra.mrb[0].mxu0 %v537
      %v1709 = vpop.f32.mrb[0].mxu0
      %v1710 = vadd.f32 0.0, %v1709
      %v1711 = vpop.f32.mrb[0].mxu0
      %v1712 = vpop.f32.mrb[0].mxu0
      %v1713 = vadd.f32 0.0, %v1712
      %v1714 = vpop.f32.mrb[0].mxu0
      %1715 = vmatprep.mubr.bf16.mxu0 0
      %1716 = vmatmul.mubr.bf16.gmra.mrb[0].mxu0 %v540
      %v1717 = vpop.f32.mrb[0].mxu0
      %v1718 = vadd.f32 0.0, %v1717
      %v1719 = vpop.f32.mrb[0].mxu0
      %v1720 = vpop.f32.mrb[0].mxu0
      %v1721 = vadd.f32 0.0, %v1720
      %v1722 = vpop.f32.mrb[0].mxu0
      %1723 = vmatprep.mubr.bf16.mxu0 0
      %1724 = vmatmul.mubr.bf16.gmra.mrb[0].mxu0 %v540
      %v1725 = vpop.f32.mrb[0].mxu0
      %v1726 = vadd.f32 0.0, %v1725
      %v1727 = vpop.f32.mrb[0].mxu0
      %v1728 = vpop.f32.mrb[0].mxu0
      %v1729 = vadd.f32 0.0, %v1728
      %v1730 = vpop.f32.mrb[0].mxu0
      %1731 = vmatprep.mubr.bf16.mxu0 0
      %1732 = vmatmul.mubr.bf16.gmra.mrb[0].mxu0 %v543
      %v1733 = vpop.f32.mrb[0].mxu0
      %v1734 = vadd.f32 0.0, %v1733
      %v1735 = vpop.f32.mrb[0].mxu0
      %v1736 = vpop.f32.mrb[0].mxu0
      %v1737 = vadd.f32 0.0, %v1736
      %v1738 = vpop.f32.mrb[0].mxu0
      %1739 = vmatprep.mubr.bf16.mxu0 0
      %1740 = vmatmul.mubr.bf16.gmra.mrb[0].mxu0 %v543
      %v1741 = vpop.f32.mrb[0].mxu0
      %v1742 = vadd.f32 0.0, %v1741
      %v1743 = vpop.f32.mrb[0].mxu0
      %v1744 = vpop.f32.mrb[0].mxu0
      %v1745 = vadd.f32 0.0, %v1744
      %v1746 = vpop.f32.mrb[0].mxu0
      %1747 = vmatprep.mubr.bf16.mxu0 0
      %1748 = vmatmul.mubr.bf16.gmra.mrb[0].mxu0 %v1191
      %v1749 = vpop.f32.mrb[0].mxu0
      %v1750 = vadd.f32 0.0, %v1749
      %v1751 = vpop.f32.mrb[0].mxu0
      %v1752 = vpop.f32.mrb[0].mxu0
      %v1753 = vadd.f32 0.0, %v1752
      %v1754 = vpop.f32.mrb[0].mxu0
      %1755 = vmatprep.mubr.bf16.mxu0 0
      %1756 = vmatmul.mubr.bf16.gmra.mrb[0].mxu0 %v1191
      %v1757 = vpop.f32.mrb[0].mxu0
      %v1758 = vadd.f32 0.0, %v1757
      %v1759 = vpop.f32.mrb[0].mxu0
      %v1760 = vpop.f32.mrb[0].mxu0
      %v1761 = vadd.f32 0.0, %v1760
      %v1762 = vpop.f32.mrb[0].mxu0
      %1763 = vdwg.mxu0
      %v1764 = vadd.f32 %v1615, %v1686
      %v1765 = vadd.f32 %v1616, %v1689
      %v1766 = vadd.f32 %v1617, %v1694
      %v1767 = vadd.f32 %v1618, %v1697
      %v1768 = vadd.f32 %v1619, %v1702
      %v1769 = vadd.f32 %v1620, %v1705
      %v1770 = vadd.f32 %v1621, %v1710
      %v1771 = vadd.f32 %v1622, %v1713
      %v1772 = vadd.f32 %v1623, %v1718
      %v1773 = vadd.f32 %v1624, %v1721
      %v1774 = vadd.f32 %v1625, %v1726
      %v1775 = vadd.f32 %v1626, %v1729
      %v1776 = vadd.f32 %v1627, %v1734
      %v1777 = vadd.f32 %v1628, %v1737
      %v1778 = vadd.f32 %v1629, %v1742
      %v1779 = vadd.f32 %v1630, %v1745
      %v1780 = vadd.f32 %v1631, %v1750
      %v1781 = vadd.f32 %v1632, %v1753
      %v1782 = vadd.f32 %v1633, %v1758
      %v1783 = vadd.f32 %v1634, %v1761
      %v1784 = vld [vmem:[%s2 + $0x80] sm:$0xf]
      %v1785 = vld [vmem:[%s2 + $0x84] sm:$0xf]
      %v1786 = vld [vmem:[%s2 + $0x88] sm:$0xf]
      %v1787 = vld [vmem:[%s2 + $0x8c] sm:$0xf]
      %v1792 = vunpack.c.l.b16 %v1784
      %v1793 = vunpack.c.l.b16 %v1785
      %v1794 = vunpack.c.l.b16 %v1786
      %v1795 = vunpack.c.l.b16 %v1787
      %v1796 = vpack.c.b16 %v1793, %v1792
      %v1797 = vpack.c.b16 %v1795, %v1794
      %1800 = vmatprep.subr.bf16.mxu0 0
      %1801 = vmatpush1.bf16.msra.mxu0 %v1796
      %1802 = vmatprep.subr.bf16.mxu0 0
      %1803 = vmatpush1.bf16.msra.mxu0 %v1797
      %1804 = vmatprep.subr.bf16.mxu0 0
      %1805 = vmatpush1.bf16.msra.mxu0 0
      %1806 = vmatprep.subr.bf16.mxu0 0
      %1807 = vmatpush1.bf16.msra.mxu0 0
      %1808 = vmatprep.subr.bf16.mxu0 0
      %1809 = vmatpush1.bf16.msra.mxu0 0
      %1810 = vmatprep.subr.bf16.mxu0 0
      %1811 = vmatpush1.bf16.msra.mxu0 0
      %1812 = vmatprep.subr.bf16.mxu0 0
      %1813 = vmatpush1.bf16.msra.mxu0 0
      %1814 = vmatprep.subr.bf16.mxu0 0
      %1815 = vmatpush1.bf16.msra.mxu0 0
      %1816 = vmatprep.subr.bf16.mxu0 0
      %1817 = vmatpush1.bf16.msra.mxu0 0
      %1818 = vmatprep.subr.bf16.mxu0 0
      %1819 = vmatpush1.bf16.msra.mxu0 0
      %1820 = vmatprep.subr.bf16.mxu0 0
      %1821 = vmatpush1.bf16.msra.mxu0 0
      %1822 = vmatprep.subr.bf16.mxu0 0
      %1823 = vmatpush1.bf16.msra.mxu0 0
      %1824 = vmatprep.subr.bf16.mxu0 0
      %1825 = vmatpush1.bf16.msra.mxu0 0
      %1826 = vmatprep.subr.bf16.mxu0 0
      %1827 = vmatpush1.bf16.msra.mxu0 0
      %1828 = vmatprep.subr.bf16.mxu0 0
      %1829 = vmatpush1.bf16.msra.mxu0 0
      %1830 = vmatprep.subr.bf16.mxu0 0
      %1831 = vmatpush1.bf16.msra.mxu0 0
      %1832 = vmatprep.mubr.bf16.mxu0 0
      %1833 = vmatmul.mubr.bf16.gmra.mrb[0].mxu0 %v859
      %v1834 = vpop.f32.mrb[0].mxu0
      %v1835 = vadd.f32 0.0, %v1834
      %v1836 = vpop.f32.mrb[0].mxu0
      %v1837 = vpop.f32.mrb[0].mxu0
      %v1838 = vadd.f32 0.0, %v1837
      %v1839 = vpop.f32.mrb[0].mxu0
      %1840 = vmatprep.mubr.bf16.mxu0 0
      %1841 = vmatmul.mubr.bf16.gmra.mrb[0].mxu0 %v859
      %v1842 = vpop.f32.mrb[0].mxu0
      %v1843 = vadd.f32 0.0, %v1842
      %v1844 = vpop.f32.mrb[0].mxu0
      %v1845 = vpop.f32.mrb[0].mxu0
      %v1846 = vadd.f32 0.0, %v1845
      %v1847 = vpop.f32.mrb[0].mxu0
      %1848 = vmatprep.mubr.bf16.mxu0 0
      %1849 = vmatmul.mubr.bf16.gmra.mrb[0].mxu0 %v862
      %v1850 = vpop.f32.mrb[0].mxu0
      %v1851 = vadd.f32 0.0, %v1850
      %v1852 = vpop.f32.mrb[0].mxu0
      %v1853 = vpop.f32.mrb[0].mxu0
      %v1854 = vadd.f32 0.0, %v1853
      %v1855 = vpop.f32.mrb[0].mxu0
      %1856 = vmatprep.mubr.bf16.mxu0 0
      %1857 = vmatmul.mubr.bf16.gmra.mrb[0].mxu0 %v862
      %v1858 = vpop.f32.mrb[0].mxu0
      %v1859 = vadd.f32 0.0, %v1858
      %v1860 = vpop.f32.mrb[0].mxu0
      %v1861 = vpop.f32.mrb[0].mxu0
      %v1862 = vadd.f32 0.0, %v1861
      %v1863 = vpop.f32.mrb[0].mxu0
      %1864 = vmatprep.mubr.bf16.mxu0 0
      %1865 = vmatmul.mubr.bf16.gmra.mrb[0].mxu0 %v865
      %v1866 = vpop.f32.mrb[0].mxu0
      %v1867 = vadd.f32 0.0, %v1866
      %v1868 = vpop.f32.mrb[0].mxu0
      %v1869 = vpop.f32.mrb[0].mxu0
      %v1870 = vadd.f32 0.0, %v1869
      %v1871 = vpop.f32.mrb[0].mxu0
      %1872 = vmatprep.mubr.bf16.mxu0 0
      %1873 = vmatmul.mubr.bf16.gmra.mrb[0].mxu0 %v865
      %v1874 = vpop.f32.mrb[0].mxu0
      %v1875 = vadd.f32 0.0, %v1874
      %v1876 = vpop.f32.mrb[0].mxu0
      %v1877 = vpop.f32.mrb[0].mxu0
      %v1878 = vadd.f32 0.0, %v1877
      %v1879 = vpop.f32.mrb[0].mxu0
      %1880 = vmatprep.mubr.bf16.mxu0 0
      %1881 = vmatmul.mubr.bf16.gmra.mrb[0].mxu0 %v868
      %v1882 = vpop.f32.mrb[0].mxu0
      %v1883 = vadd.f32 0.0, %v1882
      %v1884 = vpop.f32.mrb[0].mxu0
      %v1885 = vpop.f32.mrb[0].mxu0
      %v1886 = vadd.f32 0.0, %v1885
      %v1887 = vpop.f32.mrb[0].mxu0
      %1888 = vmatprep.mubr.bf16.mxu0 0
      %1889 = vmatmul.mubr.bf16.gmra.mrb[0].mxu0 %v868
      %v1890 = vpop.f32.mrb[0].mxu0
      %v1891 = vadd.f32 0.0, %v1890
      %v1892 = vpop.f32.mrb[0].mxu0
      %v1893 = vpop.f32.mrb[0].mxu0
      %v1894 = vadd.f32 0.0, %v1893
      %v1895 = vpop.f32.mrb[0].mxu0
      %1896 = vmatprep.mubr.bf16.mxu0 0
      %1897 = vmatmul.mubr.bf16.gmra.mrb[0].mxu0 %v1351
      %v1898 = vpop.f32.mrb[0].mxu0
      %v1899 = vadd.f32 0.0, %v1898
      %v1900 = vpop.f32.mrb[0].mxu0
      %v1901 = vpop.f32.mrb[0].mxu0
      %v1902 = vadd.f32 0.0, %v1901
      %v1903 = vpop.f32.mrb[0].mxu0
      %1904 = vmatprep.mubr.bf16.mxu0 0
      %1905 = vmatmul.mubr.bf16.gmra.mrb[0].mxu0 %v1351
      %v1906 = vpop.f32.mrb[0].mxu0
      %v1907 = vadd.f32 0.0, %v1906
      %v1908 = vpop.f32.mrb[0].mxu0
      %v1909 = vpop.f32.mrb[0].mxu0
      %v1910 = vadd.f32 0.0, %v1909
      %v1911 = vpop.f32.mrb[0].mxu0
      %1912 = vdwg.mxu0
      %v1913 = vadd.f32 %v1764, %v1835
      %v1914 = vadd.f32 %v1765, %v1838
      %v1915 = vadd.f32 %v1766, %v1843
      %v1916 = vadd.f32 %v1767, %v1846
      %v1917 = vadd.f32 %v1768, %v1851
      %v1918 = vadd.f32 %v1769, %v1854
      %v1919 = vadd.f32 %v1770, %v1859
      %v1920 = vadd.f32 %v1771, %v1862
      %v1921 = vadd.f32 %v1772, %v1867
      %v1922 = vadd.f32 %v1773, %v1870
      %v1923 = vadd.f32 %v1774, %v1875
      %v1924 = vadd.f32 %v1775, %v1878
      %v1925 = vadd.f32 %v1776, %v1883
      %v1926 = vadd.f32 %v1777, %v1886
      %v1927 = vadd.f32 %v1778, %v1891
      %v1928 = vadd.f32 %v1779, %v1894
      %v1929 = vadd.f32 %v1780, %v1899
      %v1930 = vadd.f32 %v1781, %v1902
      %v1931 = vadd.f32 %v1782, %v1907
      %v1932 = vadd.f32 %v1783, %v1910
      %v1933 = vld [vmem:[%s3] sm:$0x1]
      %v1935 = vlaneseq
      %v1936 = vshrl.u32 %v1935, 7
      %v1937 = vsub.s32 0, %v1936
      %v1938 = vrot.slane %v1933, %v1937
      %v1940 = vadd.f32 %v1913, %v1938
      %v1941 = vadd.f32 %v1914, %v1938
      %v1942 = vadd.f32 %v1915, %v1938
      %v1943 = vadd.f32 %v1916, %v1938
      %v1944 = vadd.f32 %v1917, %v1938
      %v1945 = vadd.f32 %v1918, %v1938
      %v1946 = vadd.f32 %v1919, %v1938
      %v1947 = vadd.f32 %v1920, %v1938
      %v1948 = vadd.f32 %v1921, %v1938
      %v1949 = vadd.f32 %v1922, %v1938
      %v1950 = vadd.f32 %v1923, %v1938
      %v1951 = vadd.f32 %v1924, %v1938
      %v1952 = vadd.f32 %v1925, %v1938
      %v1953 = vadd.f32 %v1926, %v1938
      %v1954 = vadd.f32 %v1927, %v1938
      %v1955 = vadd.f32 %v1928, %v1938
      %v1956 = vadd.f32 %v1929, %v1938
      %v1957 = vadd.f32 %v1930, %v1938
      %v1958 = vadd.f32 %v1931, %v1938
      %v1959 = vadd.f32 %v1932, %v1938
      %v1960 = vmul.f32 %v1940, %v1940
      %v1961 = vmul.f32 %v1941, %v1941
      %v1962 = vmul.f32 %v1942, %v1942
      %v1963 = vmul.f32 %v1943, %v1943
      %v1964 = vmul.f32 %v1944, %v1944
      %v1965 = vmul.f32 %v1945, %v1945
      %v1966 = vmul.f32 %v1946, %v1946
      %v1967 = vmul.f32 %v1947, %v1947
      %v1968 = vmul.f32 %v1948, %v1948
      %v1969 = vmul.f32 %v1949, %v1949
      %v1970 = vmul.f32 %v1950, %v1950
      %v1971 = vmul.f32 %v1951, %v1951
      %v1972 = vmul.f32 %v1952, %v1952
      %v1973 = vmul.f32 %v1953, %v1953
      %v1974 = vmul.f32 %v1954, %v1954
      %v1975 = vmul.f32 %v1955, %v1955
      %v1976 = vmul.f32 %v1956, %v1956
      %v1977 = vmul.f32 %v1957, %v1957
      %v1978 = vmul.f32 %v1958, %v1958
      %v1979 = vmul.f32 %v1959, %v1959
      %vm1980 = vcmask 130048
      %v1981 = vsel %vm1980, %v1960, 0.0
      %1982 = vadd.xlane.f32.xlu0 %v1981
      %v1983 = vpop.xlane.xlu0 %1982
      %v1984 = vsel %vm1980, %v1961, 0.0
      %1985 = vadd.xlane.f32.xlu0 %v1984
      %v1986 = vpop.xlane.xlu0 %1985
      %v1987 = vsel %vm1980, %v1962, 0.0
      %1988 = vadd.xlane.f32.xlu0 %v1987
      %v1989 = vpop.xlane.xlu0 %1988
      %v1990 = vsel %vm1980, %v1963, 0.0
      %1991 = vadd.xlane.f32.xlu0 %v1990
      %v1992 = vpop.xlane.xlu0 %1991
      %v1993 = vsel %vm1980, %v1964, 0.0
      %1994 = vadd.xlane.f32.xlu0 %v1993
      %v1995 = vpop.xlane.xlu0 %1994
      %v1996 = vsel %vm1980, %v1965, 0.0
      %1997 = vadd.xlane.f32.xlu0 %v1996
      %v1998 = vpop.xlane.xlu0 %1997
      %v1999 = vsel %vm1980, %v1966, 0.0
      %2000 = vadd.xlane.f32.xlu0 %v1999
      %v2001 = vpop.xlane.xlu0 %2000
      %v2002 = vsel %vm1980, %v1967, 0.0
      %2003 = vadd.xlane.f32.xlu0 %v2002
      %v2004 = vpop.xlane.xlu0 %2003
      %v2005 = vsel %vm1980, %v1968, 0.0
      %2006 = vadd.xlane.f32.xlu0 %v2005
      %v2007 = vpop.xlane.xlu0 %2006
      %v2008 = vsel %vm1980, %v1969, 0.0
      %2009 = vadd.xlane.f32.xlu0 %v2008
      %v2010 = vpop.xlane.xlu0 %2009
      %v2011 = vsel %vm1980, %v1970, 0.0
      %2012 = vadd.xlane.f32.xlu0 %v2011
      %v2013 = vpop.xlane.xlu0 %2012
      %v2014 = vsel %vm1980, %v1971, 0.0
      %2015 = vadd.xlane.f32.xlu0 %v2014
      %v2016 = vpop.xlane.xlu0 %2015
      %v2017 = vsel %vm1980, %v1972, 0.0
      %2018 = vadd.xlane.f32.xlu0 %v2017
      %v2019 = vpop.xlane.xlu0 %2018
      %v2020 = vsel %vm1980, %v1973, 0.0
      %2021 = vadd.xlane.f32.xlu0 %v2020
      %v2022 = vpop.xlane.xlu0 %2021
      %v2023 = vsel %vm1980, %v1974, 0.0
      %2024 = vadd.xlane.f32.xlu0 %v2023
      %v2025 = vpop.xlane.xlu0 %2024
      %v2026 = vsel %vm1980, %v1975, 0.0
      %2027 = vadd.xlane.f32.xlu0 %v2026
      %v2028 = vpop.xlane.xlu0 %2027
      %v2029 = vsel %vm1980, %v1976, 0.0
      %2030 = vadd.xlane.f32.xlu0 %v2029
      %v2031 = vpop.xlane.xlu0 %2030
      %v2032 = vsel %vm1980, %v1977, 0.0
      %2033 = vadd.xlane.f32.xlu0 %v2032
      %v2034 = vpop.xlane.xlu0 %2033
      %v2035 = vsel %vm1980, %v1978, 0.0
      %2036 = vadd.xlane.f32.xlu0 %v2035
      %v2037 = vpop.xlane.xlu0 %2036
      %v2038 = vsel %vm1980, %v1979, 0.0
      %2039 = vadd.xlane.f32.xlu0 %v2038
      %v2040 = vpop.xlane.xlu0 %2039
      %v2041 = vrcp.pop 16.0
      %v2042 = vmul.f32 %v1983, %v2041
      %v2043 = vmul.f32 %v1986, %v2041
      %v2044 = vmul.f32 %v1989, %v2041
      %v2045 = vmul.f32 %v1992, %v2041
      %v2046 = vmul.f32 %v1995, %v2041
      %v2047 = vmul.f32 %v1998, %v2041
      %v2048 = vmul.f32 %v2001, %v2041
      %v2049 = vmul.f32 %v2004, %v2041
      %v2050 = vmul.f32 %v2007, %v2041
      %v2051 = vmul.f32 %v2010, %v2041
      %v2052 = vmul.f32 %v2013, %v2041
      %v2053 = vmul.f32 %v2016, %v2041
      %v2054 = vmul.f32 %v2019, %v2041
      %v2055 = vmul.f32 %v2022, %v2041
      %v2056 = vmul.f32 %v2025, %v2041
      %v2057 = vmul.f32 %v2028, %v2041
      %v2058 = vmul.f32 %v2031, %v2041
      %v2059 = vmul.f32 %v2034, %v2041
      %v2060 = vmul.f32 %v2037, %v2041
      %v2061 = vmul.f32 %v2040, %v2041
      %v2062 = vadd.f32 %v2042, 1e-08
      %v2063 = vadd.f32 %v2043, 1e-08
      %v2064 = vadd.f32 %v2044, 1e-08
      %v2065 = vadd.f32 %v2045, 1e-08
      %v2066 = vadd.f32 %v2046, 1e-08
      %v2067 = vadd.f32 %v2047, 1e-08
      %v2068 = vadd.f32 %v2048, 1e-08
      %v2069 = vadd.f32 %v2049, 1e-08
      %v2070 = vadd.f32 %v2050, 1e-08
      %v2071 = vadd.f32 %v2051, 1e-08
      %v2072 = vadd.f32 %v2052, 1e-08
      %v2073 = vadd.f32 %v2053, 1e-08
      %v2074 = vadd.f32 %v2054, 1e-08
      %v2075 = vadd.f32 %v2055, 1e-08
      %v2076 = vadd.f32 %v2056, 1e-08
      %v2077 = vadd.f32 %v2057, 1e-08
      %v2078 = vadd.f32 %v2058, 1e-08
      %v2079 = vadd.f32 %v2059, 1e-08
      %v2080 = vadd.f32 %v2060, 1e-08
      %v2081 = vadd.f32 %v2061, 1e-08
      %v2082 = vrsqrt.pop %v2062
      %v2083 = vrsqrt.pop %v2063
      %v2084 = vrsqrt.pop %v2064
      %v2085 = vrsqrt.pop %v2065
      %v2086 = vrsqrt.pop %v2066
      %v2087 = vrsqrt.pop %v2067
      %v2088 = vrsqrt.pop %v2068
      %v2089 = vrsqrt.pop %v2069
      %v2090 = vrsqrt.pop %v2070
      %v2091 = vrsqrt.pop %v2071
      %v2092 = vrsqrt.pop %v2072
      %v2093 = vrsqrt.pop %v2073
      %v2094 = vrsqrt.pop %v2074
      %v2095 = vrsqrt.pop %v2075
      %v2096 = vrsqrt.pop %v2076
      %v2097 = vrsqrt.pop %v2077
      %v2098 = vrsqrt.pop %v2078
      %v2099 = vrsqrt.pop %v2079
      %v2100 = vrsqrt.pop %v2080
      %v2101 = vrsqrt.pop %v2081
      %v2102 = vmul.f32 %v1940, %v2082
      %v2103 = vmul.f32 %v1941, %v2083
      %v2104 = vmul.f32 %v1942, %v2084
      %v2105 = vmul.f32 %v1943, %v2085
      %v2106 = vmul.f32 %v1944, %v2086
      %v2107 = vmul.f32 %v1945, %v2087
      %v2108 = vmul.f32 %v1946, %v2088
      %v2109 = vmul.f32 %v1947, %v2089
      %v2110 = vmul.f32 %v1948, %v2090
      %v2111 = vmul.f32 %v1949, %v2091
      %v2112 = vmul.f32 %v1950, %v2092
      %v2113 = vmul.f32 %v1951, %v2093
      %v2114 = vmul.f32 %v1952, %v2094
      %v2115 = vmul.f32 %v1953, %v2095
      %v2116 = vmul.f32 %v1954, %v2096
      %v2117 = vmul.f32 %v1955, %v2097
      %v2118 = vmul.f32 %v1956, %v2098
      %v2119 = vmul.f32 %v1957, %v2099
      %v2120 = vmul.f32 %v1958, %v2100
      %v2121 = vmul.f32 %v1959, %v2101
      %vm2122 = vcmp.ge.f32.partialorder %v2102, 0.0
      %vm2123 = vcmp.ge.f32.partialorder %v2103, 0.0
      %vm2124 = vcmp.ge.f32.partialorder %v2104, 0.0
      %vm2125 = vcmp.ge.f32.partialorder %v2105, 0.0
      %vm2126 = vcmp.ge.f32.partialorder %v2106, 0.0
      %vm2127 = vcmp.ge.f32.partialorder %v2107, 0.0
      %vm2128 = vcmp.ge.f32.partialorder %v2108, 0.0
      %vm2129 = vcmp.ge.f32.partialorder %v2109, 0.0
      %vm2130 = vcmp.ge.f32.partialorder %v2110, 0.0
      %vm2131 = vcmp.ge.f32.partialorder %v2111, 0.0
      %vm2132 = vcmp.ge.f32.partialorder %v2112, 0.0
      %vm2133 = vcmp.ge.f32.partialorder %v2113, 0.0
      %vm2134 = vcmp.ge.f32.partialorder %v2114, 0.0
      %vm2135 = vcmp.ge.f32.partialorder %v2115, 0.0
      %vm2136 = vcmp.ge.f32.partialorder %v2116, 0.0
      %vm2137 = vcmp.ge.f32.partialorder %v2117, 0.0
      %vm2138 = vcmp.ge.f32.partialorder %v2118, 0.0
      %vm2139 = vcmp.ge.f32.partialorder %v2119, 0.0
      %vm2140 = vcmp.ge.f32.partialorder %v2120, 0.0
      %vm2141 = vcmp.ge.f32.partialorder %v2121, 0.0
      %v2142 = vmul.f32 %v2102, 0.2
      %v2143 = vmul.f32 %v2103, 0.2
      %v2144 = vmul.f32 %v2104, 0.2
      %v2145 = vmul.f32 %v2105, 0.2
      %v2146 = vmul.f32 %v2106, 0.2
      %v2147 = vmul.f32 %v2107, 0.2
      %v2148 = vmul.f32 %v2108, 0.2
      %v2149 = vmul.f32 %v2109, 0.2
      %v2150 = vmul.f32 %v2110, 0.2
      %v2151 = vmul.f32 %v2111, 0.2
      %v2152 = vmul.f32 %v2112, 0.2
      %v2153 = vmul.f32 %v2113, 0.2
      %v2154 = vmul.f32 %v2114, 0.2
      %v2155 = vmul.f32 %v2115, 0.2
      %v2156 = vmul.f32 %v2116, 0.2
      %v2157 = vmul.f32 %v2117, 0.2
      %v2158 = vmul.f32 %v2118, 0.2
      %v2159 = vmul.f32 %v2119, 0.2
      %v2160 = vmul.f32 %v2120, 0.2
      %v2161 = vmul.f32 %v2121, 0.2
      %v2162 = vsel %vm2122, %v2102, %v2142
      %v2163 = vsel %vm2123, %v2103, %v2143
      %v2164 = vsel %vm2124, %v2104, %v2144
      %v2165 = vsel %vm2125, %v2105, %v2145
      %v2166 = vsel %vm2126, %v2106, %v2146
      %v2167 = vsel %vm2127, %v2107, %v2147
      %v2168 = vsel %vm2128, %v2108, %v2148
      %v2169 = vsel %vm2129, %v2109, %v2149
      %v2170 = vsel %vm2130, %v2110, %v2150
      %v2171 = vsel %vm2131, %v2111, %v2151
      %v2172 = vsel %vm2132, %v2112, %v2152
      %v2173 = vsel %vm2133, %v2113, %v2153
      %v2174 = vsel %vm2134, %v2114, %v2154
      %v2175 = vsel %vm2135, %v2115, %v2155
      %v2176 = vsel %vm2136, %v2116, %v2156
      %v2177 = vsel %vm2137, %v2117, %v2157
      %v2178 = vsel %vm2138, %v2118, %v2158
      %v2179 = vsel %vm2139, %v2119, %v2159
      %v2180 = vsel %vm2140, %v2120, %v2160
      %v2181 = vsel %vm2141, %v2121, %v2161
      %s2182 = ssub.s32 %s375, 1
      %v2183 = vstv %s2182
      %v2184 = vadd.s32 %v2183, 1
      %v2185 = vadd.s32 %v2183, 2
      %v2186 = vadd.s32 %v2183, 3
      %v2187 = vadd.s32 %v2183, 4
      %v2188 = vadd.s32 %v2183, 5
      %v2189 = vadd.s32 %v2183, 6
      %v2190 = vadd.s32 %v2183, 7
      %v2191 = vadd.s32 %v2183, 8
      %v2192 = vadd.s32 %v2183, 9
      %vm2193 = vcmp.ge.s32.totalorder %v2183, 0
      %vm2194 = vcmp.ge.s32.totalorder %v2184, 0
      %vm2195 = vcmp.ge.s32.totalorder %v2185, 0
      %vm2196 = vcmp.ge.s32.totalorder %v2186, 0
      %vm2197 = vcmp.ge.s32.totalorder %v2187, 0
      %vm2198 = vcmp.ge.s32.totalorder %v2188, 0
      %vm2199 = vcmp.ge.s32.totalorder %v2189, 0
      %vm2200 = vcmp.ge.s32.totalorder %v2190, 0
      %vm2201 = vcmp.ge.s32.totalorder %v2191, 0
      %vm2202 = vcmp.ge.s32.totalorder %v2192, 0
      %vm2203 = vcmp.lt.s32.totalorder %v2183, 16
      %vm2204 = vcmp.lt.s32.totalorder %v2184, 16
      %vm2205 = vcmp.lt.s32.totalorder %v2185, 16
      %vm2206 = vcmp.lt.s32.totalorder %v2186, 16
      %vm2207 = vcmp.lt.s32.totalorder %v2187, 16
      %vm2208 = vcmp.lt.s32.totalorder %v2188, 16
      %vm2209 = vcmp.lt.s32.totalorder %v2189, 16
      %vm2210 = vcmp.lt.s32.totalorder %v2190, 16
      %vm2211 = vcmp.lt.s32.totalorder %v2191, 16
      %vm2212 = vcmp.lt.s32.totalorder %v2192, 16
      %vm2213 = vmand %vm2193, %vm2203
      %vm2214 = vmand %vm2194, %vm2204
      %vm2215 = vmand %vm2195, %vm2205
      %vm2216 = vmand %vm2196, %vm2206
      %vm2217 = vmand %vm2197, %vm2207
      %vm2218 = vmand %vm2198, %vm2208
      %vm2219 = vmand %vm2199, %vm2209
      %vm2220 = vmand %vm2200, %vm2210
      %vm2221 = vmand %vm2201, %vm2211
      %vm2222 = vmand %vm2202, %vm2212
      %v2223 = vsel %vm2213, 1, 0
      %v2224 = vsel %vm2214, 1, 0
      %v2225 = vsel %vm2215, 1, 0
      %v2226 = vsel %vm2216, 1, 0
      %v2227 = vsel %vm2217, 1, 0
      %v2228 = vsel %vm2218, 1, 0
      %v2229 = vsel %vm2219, 1, 0
      %v2230 = vsel %vm2220, 1, 0
      %v2231 = vsel %vm2221, 1, 0
      %v2232 = vsel %vm2222, 1, 0
      %vm2233 = vcmp.eq.s32.totalorder %v2223, 1
      %vm2234 = vcmp.eq.s32.totalorder %v2224, 1
      %vm2235 = vcmp.eq.s32.totalorder %v2225, 1
      %vm2236 = vcmp.eq.s32.totalorder %v2226, 1
      %vm2237 = vcmp.eq.s32.totalorder %v2227, 1
      %vm2238 = vcmp.eq.s32.totalorder %v2228, 1
      %vm2239 = vcmp.eq.s32.totalorder %v2229, 1
      %vm2240 = vcmp.eq.s32.totalorder %v2230, 1
      %vm2241 = vcmp.eq.s32.totalorder %v2231, 1
      %vm2242 = vcmp.eq.s32.totalorder %v2232, 1
      %v2243 = vsel %vm2233, %v2162, 0.0
      %v2244 = vsel %vm2233, %v2163, 0.0
      %v2245 = vsel %vm2234, %v2164, 0.0
      %v2246 = vsel %vm2234, %v2165, 0.0
      %v2247 = vsel %vm2235, %v2166, 0.0
      %v2248 = vsel %vm2235, %v2167, 0.0
      %v2249 = vsel %vm2236, %v2168, 0.0
      %v2250 = vsel %vm2236, %v2169, 0.0
      %v2251 = vsel %vm2237, %v2170, 0.0
      %v2252 = vsel %vm2237, %v2171, 0.0
      %v2253 = vsel %vm2238, %v2172, 0.0
      %v2254 = vsel %vm2238, %v2173, 0.0
      %v2255 = vsel %vm2239, %v2174, 0.0
      %v2256 = vsel %vm2239, %v2175, 0.0
      %v2257 = vsel %vm2240, %v2176, 0.0
      %v2258 = vsel %vm2240, %v2177, 0.0
      %v2259 = vsel %vm2241, %v2178, 0.0
      %v2260 = vsel %vm2241, %v2179, 0.0
      %v2261 = vsel %vm2242, %v2180, 0.0
      %v2262 = vsel %vm2242, %v2181, 0.0
      %vm2263 = vcmask 122880
      %2264 = vst.msk [vmem:[#allocation2] sm:$0x1] %vm2263, 0.0
      %2265 = vst.msk [vmem:[#allocation2 + $0x18] sm:$0x1] %vm2263, 0.0
      %2266 = vst.msk [vmem:[#allocation2 + $0x30] sm:$0x1] %vm2263, 0.0
      %2267 = vst.msk [vmem:[#allocation2 + $0x48] sm:$0x1] %vm2263, 0.0
      %2268 = vst.msk [vmem:[#allocation2 + $0x60] sm:$0x1] %vm2263, 0.0
      %2269 = vst.msk [vmem:[#allocation2 + $0x78] sm:$0x1] %vm2263, 0.0
      %2270 = vst.msk [vmem:[#allocation2 + $0x90] sm:$0x1] %vm2263, 0.0
      %2271 = vst.msk [vmem:[#allocation2 + $0xa8] sm:$0x1] %vm2263, 0.0
      %2272 = vst.msk [vmem:[#allocation2 + $0xc0] sm:$0x1] %vm2263, 0.0
      %2273 = vst.msk [vmem:[#allocation2 + $0xd8] sm:$0x1] %vm2263, 0.0
      %2274 = vst.msk [vmem:[#allocation2 + $0x11] sm:$0x1] %vm2263, 0.0
      %2275 = vst.msk [vmem:[#allocation2 + $0x29] sm:$0x1] %vm2263, 0.0
      %2276 = vst.msk [vmem:[#allocation2 + $0x41] sm:$0x1] %vm2263, 0.0
      %2277 = vst.msk [vmem:[#allocation2 + $0x59] sm:$0x1] %vm2263, 0.0
      %2278 = vst.msk [vmem:[#allocation2 + $0x71] sm:$0x1] %vm2263, 0.0
      %2279 = vst.msk [vmem:[#allocation2 + $0x89] sm:$0x1] %vm2263, 0.0
      %2280 = vst.msk [vmem:[#allocation2 + $0xa1] sm:$0x1] %vm2263, 0.0
      %2281 = vst.msk [vmem:[#allocation2 + $0xb9] sm:$0x1] %vm2263, 0.0
      %2282 = vst.msk [vmem:[#allocation2 + $0xd1] sm:$0x1] %vm2263, 0.0
      %2283 = vst.msk [vmem:[#allocation2 + $0xe9] sm:$0x1] %vm2263, 0.0
      %2284 = vst.msk [vmem:[#allocation2 + $0x1] sm:$0xff] %vm1980, %v2243
      %2285 = vst.msk [vmem:[#allocation2 + $0x9] sm:$0xff] %vm1980, %v2244
      %2286 = vst.msk [vmem:[#allocation2 + $0x19] sm:$0xff] %vm1980, %v2245
      %2287 = vst.msk [vmem:[#allocation2 + $0x21] sm:$0xff] %vm1980, %v2246
      %2288 = vst.msk [vmem:[#allocation2 + $0x31] sm:$0xff] %vm1980, %v2247
      %2289 = vst.msk [vmem:[#allocation2 + $0x39] sm:$0xff] %vm1980, %v2248
      %2290 = vst.msk [vmem:[#allocation2 + $0x49] sm:$0xff] %vm1980, %v2249
      %2291 = vst.msk [vmem:[#allocation2 + $0x51] sm:$0xff] %vm1980, %v2250
      %2292 = vst.msk [vmem:[#allocation2 + $0x61] sm:$0xff] %vm1980, %v2251
      %2293 = vst.msk [vmem:[#allocation2 + $0x69] sm:$0xff] %vm1980, %v2252
      %2294 = vst.msk [vmem:[#allocation2 + $0x79] sm:$0xff] %vm1980, %v2253
      %2295 = vst.msk [vmem:[#allocation2 + $0x81] sm:$0xff] %vm1980, %v2254
      %2296 = vst.msk [vmem:[#allocation2 + $0x91] sm:$0xff] %vm1980, %v2255
      %2297 = vst.msk [vmem:[#allocation2 + $0x99] sm:$0xff] %vm1980, %v2256
      %2298 = vst.msk [vmem:[#allocation2 + $0xa9] sm:$0xff] %vm1980, %v2257
      %2299 = vst.msk [vmem:[#allocation2 + $0xb1] sm:$0xff] %vm1980, %v2258
      %2300 = vst.msk [vmem:[#allocation2 + $0xc1] sm:$0xff] %vm1980, %v2259
      %2301 = vst.msk [vmem:[#allocation2 + $0xc9] sm:$0xff] %vm1980, %v2260
      %2302 = vst.msk [vmem:[#allocation2 + $0xd9] sm:$0xff] %vm1980, %v2261
      %2303 = vst.msk [vmem:[#allocation2 + $0xe1] sm:$0xff] %vm1980, %v2262
      %v2304 = vld [vmem:[#allocation2] sm:$0xff]
      %v2305 = vld [vmem:[#allocation2 + $0x8] sm:$0xff]
      %v2306 = vld [vmem:[#allocation2 + $0x18] sm:$0xff]
      %v2307 = vld [vmem:[#allocation2 + $0x20] sm:$0xff]
      %v2308 = vld [vmem:[#allocation2 + $0x30] sm:$0xff]
      %v2309 = vld [vmem:[#allocation2 + $0x38] sm:$0xff]
      %v2310 = vld [vmem:[#allocation2 + $0x48] sm:$0xff]
      %v2311 = vld [vmem:[#allocation2 + $0x50] sm:$0xff]
      %v2312 = vld [vmem:[#allocation2 + $0x60] sm:$0xff]
      %v2313 = vld [vmem:[#allocation2 + $0x68] sm:$0xff]
      %v2314 = vld [vmem:[#allocation2 + $0x78] sm:$0xff]
      %v2315 = vld [vmem:[#allocation2 + $0x80] sm:$0xff]
      %v2316 = vld [vmem:[#allocation2 + $0x90] sm:$0xff]
      %v2317 = vld [vmem:[#allocation2 + $0x98] sm:$0xff]
      %v2318 = vld [vmem:[#allocation2 + $0xa8] sm:$0xff]
      %v2319 = vld [vmem:[#allocation2 + $0xb0] sm:$0xff]
      %v2320 = vld [vmem:[%s4] sm:$0xf]
      %v2321 = vld [vmem:[%s4 + $0x4] sm:$0xf]
      %v2322 = vpack.c.bf16 %v2305, %v2304
      %v2323 = vpack.c.bf16 %v2307, %v2306
      %v2324 = vpack.c.bf16 %v2309, %v2308
      %v2325 = vpack.c.bf16 %v2311, %v2310
      %v2326 = vpack.c.bf16 %v2313, %v2312
      %v2327 = vpack.c.bf16 %v2315, %v2314
      %v2328 = vpack.c.bf16 %v2317, %v2316
      %v2329 = vpack.c.bf16 %v2319, %v2318
      %v2330 = vld [vmem:[#allocation2 + $0x1] sm:$0xff]
      %v2331 = vld [vmem:[#allocation2 + $0x9] sm:$0xff]
      %v2332 = vld [vmem:[#allocation2 + $0x19] sm:$0xff]
      %v2333 = vld [vmem:[#allocation2 + $0x21] sm:$0xff]
      %v2334 = vld [vmem:[#allocation2 + $0x31] sm:$0xff]
      %v2335 = vld [vmem:[#allocation2 + $0x39] sm:$0xff]
      %v2336 = vld [vmem:[#allocation2 + $0x49] sm:$0xff]
      %v2337 = vld [vmem:[#allocation2 + $0x51] sm:$0xff]
      %v2338 = vld [vmem:[#allocation2 + $0x61] sm:$0xff]
      %v2339 = vld [vmem:[#allocation2 + $0x69] sm:$0xff]
      %v2340 = vld [vmem:[#allocation2 + $0x79] sm:$0xff]
      %v2341 = vld [vmem:[#allocation2 + $0x81] sm:$0xff]
      %v2342 = vld [vmem:[#allocation2 + $0x91] sm:$0xff]
      %v2343 = vld [vmem:[#allocation2 + $0x99] sm:$0xff]
      %v2344 = vld [vmem:[#allocation2 + $0xa9] sm:$0xff]
      %v2345 = vld [vmem:[#allocation2 + $0xb1] sm:$0xff]
      %v2346 = vld [vmem:[%s4 + $0x8] sm:$0xf]
      %v2347 = vld [vmem:[%s4 + $0xc] sm:$0xf]
      %v2348 = vpack.c.bf16 %v2331, %v2330
      %v2349 = vpack.c.bf16 %v2333, %v2332
      %v2350 = vpack.c.bf16 %v2335, %v2334
      %v2351 = vpack.c.bf16 %v2337, %v2336
      %v2352 = vpack.c.bf16 %v2339, %v2338
      %v2353 = vpack.c.bf16 %v2341, %v2340
      %v2354 = vpack.c.bf16 %v2343, %v2342
      %v2355 = vpack.c.bf16 %v2345, %v2344
      %v2358 = vunpack.c.l.b16 %v2346
      %v2359 = vunpack.c.l.b16 %v2347
      %v2360 = vpack.c.b16 %v2359, %v2358
      %v2363 = vsel %vm1980, %v2348, 0
      %v2366 = vsel %vm1980, %v2349, 0
      %v2369 = vsel %vm1980, %v2350, 0
      %v2372 = vsel %vm1980, %v2351, 0
      %v2375 = vsel %vm1980, %v2352, 0
      %v2378 = vsel %vm1980, %v2353, 0
      %v2381 = vsel %vm1980, %v2354, 0
      %v2384 = vsel %vm1980, %v2355, 0
      %2386 = vmatprep.subr.bf16.mxu0 0
      %2387 = vmatpush1.bf16.msra.mxu0 %v2360
      %2388 = vmatprep.subr.bf16.mxu0 0
      %2389 = vmatpush1.bf16.msra.mxu0 0
      %2390 = vmatprep.subr.bf16.mxu0 0
      %2391 = vmatpush1.bf16.msra.mxu0 0
      %2392 = vmatprep.subr.bf16.mxu0 0
      %2393 = vmatpush1.bf16.msra.mxu0 0
      %2394 = vmatprep.subr.bf16.mxu0 0
      %2395 = vmatpush1.bf16.msra.mxu0 0
      %2396 = vmatprep.subr.bf16.mxu0 0
      %2397 = vmatpush1.bf16.msra.mxu0 0
      %2398 = vmatprep.subr.bf16.mxu0 0
      %2399 = vmatpush1.bf16.msra.mxu0 0
      %2400 = vmatprep.subr.bf16.mxu0 0
      %2401 = vmatpush1.bf16.msra.mxu0 0
      %2402 = vmatprep.subr.bf16.mxu0 0
      %2403 = vmatpush1.bf16.msra.mxu0 0
      %2404 = vmatprep.subr.bf16.mxu0 0
      %2405 = vmatpush1.bf16.msra.mxu0 0
      %2406 = vmatprep.subr.bf16.mxu0 0
      %2407 = vmatpush1.bf16.msra.mxu0 0
      %2408 = vmatprep.subr.bf16.mxu0 0
      %2409 = vmatpush1.bf16.msra.mxu0 0
      %2410 = vmatprep.subr.bf16.mxu0 0
      %2411 = vmatpush1.bf16.msra.mxu0 0
      %2412 = vmatprep.subr.bf16.mxu0 0
      %2413 = vmatpush1.bf16.msra.mxu0 0
      %2414 = vmatprep.subr.bf16.mxu0 0
      %2415 = vmatpush1.bf16.msra.mxu0 0
      %2416 = vmatprep.subr.bf16.mxu0 0
      %2417 = vmatpush1.bf16.msra.mxu0 0
      %2418 = vmatprep.mubr.bf16.mxu0 0
      %2419 = vmatmul.mubr.bf16.gmra.mrb[0].mxu0 %v2363
      %v2420 = vpop.f32.mrb[0].mxu0
      %v2421 = vadd.f32 0.0, %v2420
      %v2422 = vpop.f32.mrb[0].mxu0
      %v2423 = vpop.f32.mrb[0].mxu0
      %v2424 = vadd.f32 0.0, %v2423
      %v2425 = vpop.f32.mrb[0].mxu0
      %2426 = vmatprep.mubr.bf16.mxu0 0
      %2427 = vmatmul.mubr.bf16.gmra.mrb[0].mxu0 %v2366
      %v2428 = vpop.f32.mrb[0].mxu0
      %v2429 = vadd.f32 0.0, %v2428
      %v2430 = vpop.f32.mrb[0].mxu0
      %v2431 = vpop.f32.mrb[0].mxu0
      %v2432 = vadd.f32 0.0, %v2431
      %v2433 = vpop.f32.mrb[0].mxu0
      %2434 = vmatprep.mubr.bf16.mxu0 0
      %2435 = vmatmul.mubr.bf16.gmra.mrb[0].mxu0 %v2369
      %v2436 = vpop.f32.mrb[0].mxu0
      %v2437 = vadd.f32 0.0, %v2436
      %v2438 = vpop.f32.mrb[0].mxu0
      %v2439 = vpop.f32.mrb[0].mxu0
      %v2440 = vadd.f32 0.0, %v2439
      %v2441 = vpop.f32.mrb[0].mxu0
      %2442 = vmatprep.mubr.bf16.mxu0 0
      %2443 = vmatmul.mubr.bf16.gmra.mrb[0].mxu0 %v2372
      %v2444 = vpop.f32.mrb[0].mxu0
      %v2445 = vadd.f32 0.0, %v2444
      %v2446 = vpop.f32.mrb[0].mxu0
      %v2447 = vpop.f32.mrb[0].mxu0
      %v2448 = vadd.f32 0.0, %v2447
      %v2449 = vpop.f32.mrb[0].mxu0
      %2450 = vmatprep.mubr.bf16.mxu0 0
      %2451 = vmatmul.mubr.bf16.gmra.mrb[0].mxu0 %v2375
      %v2452 = vpop.f32.mrb[0].mxu0
      %v2453 = vadd.f32 0.0, %v2452
      %v2454 = vpop.f32.mrb[0].mxu0
      %v2455 = vpop.f32.mrb[0].mxu0
      %v2456 = vadd.f32 0.0, %v2455
      %v2457 = vpop.f32.mrb[0].mxu0
      %2458 = vmatprep.mubr.bf16.mxu0 0
      %2459 = vmatmul.mubr.bf16.gmra.mrb[0].mxu0 %v2378
      %v2460 = vpop.f32.mrb[0].mxu0
      %v2461 = vadd.f32 0.0, %v2460
      %v2462 = vpop.f32.mrb[0].mxu0
      %v2463 = vpop.f32.mrb[0].mxu0
      %v2464 = vadd.f32 0.0, %v2463
      %v2465 = vpop.f32.mrb[0].mxu0
      %2466 = vmatprep.mubr.bf16.mxu0 0
      %2467 = vmatmul.mubr.bf16.gmra.mrb[0].mxu0 %v2381
      %v2468 = vpop.f32.mrb[0].mxu0
      %v2469 = vadd.f32 0.0, %v2468
      %v2470 = vpop.f32.mrb[0].mxu0
      %v2471 = vpop.f32.mrb[0].mxu0
      %v2472 = vadd.f32 0.0, %v2471
      %v2473 = vpop.f32.mrb[0].mxu0
      %2474 = vmatprep.mubr.bf16.mxu0 0
      %2475 = vmatmul.mubr.bf16.gmra.mrb[0].mxu0 %v2384
      %v2476 = vpop.f32.mrb[0].mxu0
      %v2477 = vadd.f32 0.0, %v2476
      %v2478 = vpop.f32.mrb[0].mxu0
      %v2479 = vpop.f32.mrb[0].mxu0
      %v2480 = vadd.f32 0.0, %v2479
      %v2481 = vpop.f32.mrb[0].mxu0
      %2482 = vdwg.mxu0
      %v2485 = vunpack.c.l.b16 %v2320
      %v2486 = vunpack.c.l.b16 %v2321
      %v2487 = vpack.c.b16 %v2486, %v2485
      %v2490 = vsel %vm1980, %v2322, 0
      %v2493 = vsel %vm1980, %v2323, 0
      %v2496 = vsel %vm1980, %v2324, 0
      %v2499 = vsel %vm1980, %v2325, 0
      %v2502 = vsel %vm1980, %v2326, 0
      %v2505 = vsel %vm1980, %v2327, 0
      %v2508 = vsel %vm1980, %v2328, 0
      %v2511 = vsel %vm1980, %v2329, 0
      %2513 = vmatprep.subr.bf16.mxu0 0
      %2514 = vmatpush1.bf16.msra.mxu0 %v2487
      %2515 = vmatprep.subr.bf16.mxu0 0
      %2516 = vmatpush1.bf16.msra.mxu0 0
      %2517 = vmatprep.subr.bf16.mxu0 0
      %2518 = vmatpush1.bf16.msra.mxu0 0
      %2519 = vmatprep.subr.bf16.mxu0 0
      %2520 = vmatpush1.bf16.msra.mxu0 0
      %2521 = vmatprep.subr.bf16.mxu0 0
      %2522 = vmatpush1.bf16.msra.mxu0 0
      %2523 = vmatprep.subr.bf16.mxu0 0
      %2524 = vmatpush1.bf16.msra.mxu0 0
      %2525 = vmatprep.subr.bf16.mxu0 0
      %2526 = vmatpush1.bf16.msra.mxu0 0
      %2527 = vmatprep.subr.bf16.mxu0 0
      %2528 = vmatpush1.bf16.msra.mxu0 0
      %2529 = vmatprep.subr.bf16.mxu0 0
      %2530 = vmatpush1.bf16.msra.mxu0 0
      %2531 = vmatprep.subr.bf16.mxu0 0
      %2532 = vmatpush1.bf16.msra.mxu0 0
      %2533 = vmatprep.subr.bf16.mxu0 0
      %2534 = vmatpush1.bf16.msra.mxu0 0
      %2535 = vmatprep.subr.bf16.mxu0 0
      %2536 = vmatpush1.bf16.msra.mxu0 0
      %2537 = vmatprep.subr.bf16.mxu0 0
      %2538 = vmatpush1.bf16.msra.mxu0 0
      %2539 = vmatprep.subr.bf16.mxu0 0
      %2540 = vmatpush1.bf16.msra.mxu0 0
      %2541 = vmatprep.subr.bf16.mxu0 0
      %2542 = vmatpush1.bf16.msra.mxu0 0
      %2543 = vmatprep.subr.bf16.mxu0 0
      %2544 = vmatpush1.bf16.msra.mxu0 0
      %2545 = vmatprep.mubr.bf16.mxu0 0
      %2546 = vmatmul.mubr.bf16.gmra.mrb[0].mxu0 %v2490
      %v2547 = vpop.f32.mrb[0].mxu0
      %v2548 = vadd.f32 %v2421, %v2547
      %v2549 = vpop.f32.mrb[0].mxu0
      %v2550 = vpop.f32.mrb[0].mxu0
      %v2551 = vadd.f32 %v2424, %v2550
      %v2552 = vpop.f32.mrb[0].mxu0
      %2553 = vmatprep.mubr.bf16.mxu0 0
      %2554 = vmatmul.mubr.bf16.gmra.mrb[0].mxu0 %v2493
      %v2555 = vpop.f32.mrb[0].mxu0
      %v2556 = vadd.f32 %v2429, %v2555
      %v2557 = vpop.f32.mrb[0].mxu0
      %v2558 = vpop.f32.mrb[0].mxu0
      %v2559 = vadd.f32 %v2432, %v2558
      %v2560 = vpop.f32.mrb[0].mxu0
      %2561 = vmatprep.mubr.bf16.mxu0 0
      %2562 = vmatmul.mubr.bf16.gmra.mrb[0].mxu0 %v2496
      %v2563 = vpop.f32.mrb[0].mxu0
      %v2564 = vadd.f32 %v2437, %v2563
      %v2565 = vpop.f32.mrb[0].mxu0
      %v2566 = vpop.f32.mrb[0].mxu0
      %v2567 = vadd.f32 %v2440, %v2566
      %v2568 = vpop.f32.mrb[0].mxu0
      %2569 = vmatprep.mubr.bf16.mxu0 0
      %2570 = vmatmul.mubr.bf16.gmra.mrb[0].mxu0 %v2499
      %v2571 = vpop.f32.mrb[0].mxu0
      %v2572 = vadd.f32 %v2445, %v2571
      %v2573 = vpop.f32.mrb[0].mxu0
      %v2574 = vpop.f32.mrb[0].mxu0
      %v2575 = vadd.f32 %v2448, %v2574
      %v2576 = vpop.f32.mrb[0].mxu0
      %2577 = vmatprep.mubr.bf16.mxu0 0
      %2578 = vmatmul.mubr.bf16.gmra.mrb[0].mxu0 %v2502
      %v2579 = vpop.f32.mrb[0].mxu0
      %v2580 = vadd.f32 %v2453, %v2579
      %v2581 = vpop.f32.mrb[0].mxu0
      %v2582 = vpop.f32.mrb[0].mxu0
      %v2583 = vadd.f32 %v2456, %v2582
      %v2584 = vpop.f32.mrb[0].mxu0
      %2585 = vmatprep.mubr.bf16.mxu0 0
      %2586 = vmatmul.mubr.bf16.gmra.mrb[0].mxu0 %v2505
      %v2587 = vpop.f32.mrb[0].mxu0
      %v2588 = vadd.f32 %v2461, %v2587
      %v2589 = vpop.f32.mrb[0].mxu0
      %v2590 = vpop.f32.mrb[0].mxu0
      %v2591 = vadd.f32 %v2464, %v2590
      %v2592 = vpop.f32.mrb[0].mxu0
      %2593 = vmatprep.mubr.bf16.mxu0 0
      %2594 = vmatmul.mubr.bf16.gmra.mrb[0].mxu0 %v2508
      %v2595 = vpop.f32.mrb[0].mxu0
      %v2596 = vadd.f32 %v2469, %v2595
      %v2597 = vpop.f32.mrb[0].mxu0
      %v2598 = vpop.f32.mrb[0].mxu0
      %v2599 = vadd.f32 %v2472, %v2598
      %v2600 = vpop.f32.mrb[0].mxu0
      %2601 = vmatprep.mubr.bf16.mxu0 0
      %2602 = vmatmul.mubr.bf16.gmra.mrb[0].mxu0 %v2511
      %v2603 = vpop.f32.mrb[0].mxu0
      %v2604 = vadd.f32 %v2477, %v2603
      %v2605 = vpop.f32.mrb[0].mxu0
      %v2606 = vpop.f32.mrb[0].mxu0
      %v2607 = vadd.f32 %v2480, %v2606
      %v2608 = vpop.f32.mrb[0].mxu0
      %2609 = vdwg.mxu0
      %v2610 = vld [vmem:[#allocation2 + $0x2] sm:$0xff]
      %v2611 = vld [vmem:[#allocation2 + $0xa] sm:$0xff]
      %v2612 = vld [vmem:[#allocation2 + $0x1a] sm:$0xff]
      %v2613 = vld [vmem:[#allocation2 + $0x22] sm:$0xff]
      %v2614 = vld [vmem:[#allocation2 + $0x32] sm:$0xff]
      %v2615 = vld [vmem:[#allocation2 + $0x3a] sm:$0xff]
      %v2616 = vld [vmem:[#allocation2 + $0x4a] sm:$0xff]
      %v2617 = vld [vmem:[#allocation2 + $0x52] sm:$0xff]
      %v2618 = vld [vmem:[#allocation2 + $0x62] sm:$0xff]
      %v2619 = vld [vmem:[#allocation2 + $0x6a] sm:$0xff]
      %v2620 = vld [vmem:[#allocation2 + $0x7a] sm:$0xff]
      %v2621 = vld [vmem:[#allocation2 + $0x82] sm:$0xff]
      %v2622 = vld [vmem:[#allocation2 + $0x92] sm:$0xff]
      %v2623 = vld [vmem:[#allocation2 + $0x9a] sm:$0xff]
      %v2624 = vld [vmem:[#allocation2 + $0xaa] sm:$0xff]
      %v2625 = vld [vmem:[#allocation2 + $0xb2] sm:$0xff]
      %v2626 = vld [vmem:[%s4 + $0x10] sm:$0xf]
      %v2627 = vld [vmem:[%s4 + $0x14] sm:$0xf]
      %v2628 = vpack.c.bf16 %v2611, %v2610
      %v2629 = vpack.c.bf16 %v2613, %v2612
      %v2630 = vpack.c.bf16 %v2615, %v2614
      %v2631 = vpack.c.bf16 %v2617, %v2616
      %v2632 = vpack.c.bf16 %v2619, %v2618
      %v2633 = vpack.c.bf16 %v2621, %v2620
      %v2634 = vpack.c.bf16 %v2623, %v2622
      %v2635 = vpack.c.bf16 %v2625, %v2624
      %v2638 = vunpack.c.l.b16 %v2626
      %v2639 = vunpack.c.l.b16 %v2627
      %v2640 = vpack.c.b16 %v2639, %v2638
      %v2643 = vsel %vm1980, %v2628, 0
      %v2646 = vsel %vm1980, %v2629, 0
      %v2649 = vsel %vm1980, %v2630, 0
      %v2652 = vsel %vm1980, %v2631, 0
      %v2655 = vsel %vm1980, %v2632, 0
      %v2658 = vsel %vm1980, %v2633, 0
      %v2661 = vsel %vm1980, %v2634, 0
      %v2664 = vsel %vm1980, %v2635, 0
      %2666 = vmatprep.subr.bf16.mxu0 0
      %2667 = vmatpush1.bf16.msra.mxu0 %v2640
      %2668 = vmatprep.subr.bf16.mxu0 0
      %2669 = vmatpush1.bf16.msra.mxu0 0
      %2670 = vmatprep.subr.bf16.mxu0 0
      %2671 = vmatpush1.bf16.msra.mxu0 0
      %2672 = vmatprep.subr.bf16.mxu0 0
      %2673 = vmatpush1.bf16.msra.mxu0 0
      %2674 = vmatprep.subr.bf16.mxu0 0
      %2675 = vmatpush1.bf16.msra.mxu0 0
      %2676 = vmatprep.subr.bf16.mxu0 0
      %2677 = vmatpush1.bf16.msra.mxu0 0
      %2678 = vmatprep.subr.bf16.mxu0 0
      %2679 = vmatpush1.bf16.msra.mxu0 0
      %2680 = vmatprep.subr.bf16.mxu0 0
      %2681 = vmatpush1.bf16.msra.mxu0 0
      %2682 = vmatprep.subr.bf16.mxu0 0
      %2683 = vmatpush1.bf16.msra.mxu0 0
      %2684 = vmatprep.subr.bf16.mxu0 0
      %2685 = vmatpush1.bf16.msra.mxu0 0
      %2686 = vmatprep.subr.bf16.mxu0 0
      %2687 = vmatpush1.bf16.msra.mxu0 0
      %2688 = vmatprep.subr.bf16.mxu0 0
      %2689 = vmatpush1.bf16.msra.mxu0 0
      %2690 = vmatprep.subr.bf16.mxu0 0
      %2691 = vmatpush1.bf16.msra.mxu0 0
      %2692 = vmatprep.subr.bf16.mxu0 0
      %2693 = vmatpush1.bf16.msra.mxu0 0
      %2694 = vmatprep.subr.bf16.mxu0 0
      %2695 = vmatpush1.bf16.msra.mxu0 0
      %2696 = vmatprep.subr.bf16.mxu0 0
      %2697 = vmatpush1.bf16.msra.mxu0 0
      %2698 = vmatprep.mubr.bf16.mxu0 0
      %2699 = vmatmul.mubr.bf16.gmra.mrb[0].mxu0 %v2643
      %v2700 = vpop.f32.mrb[0].mxu0
      %v2701 = vadd.f32 0.0, %v2700
      %v2702 = vpop.f32.mrb[0].mxu0
      %v2703 = vpop.f32.mrb[0].mxu0
      %v2704 = vadd.f32 0.0, %v2703
      %v2705 = vpop.f32.mrb[0].mxu0
      %2706 = vmatprep.mubr.bf16.mxu0 0
      %2707 = vmatmul.mubr.bf16.gmra.mrb[0].mxu0 %v2646
      %v2708 = vpop.f32.mrb[0].mxu0
      %v2709 = vadd.f32 0.0, %v2708
      %v2710 = vpop.f32.mrb[0].mxu0
      %v2711 = vpop.f32.mrb[0].mxu0
      %v2712 = vadd.f32 0.0, %v2711
      %v2713 = vpop.f32.mrb[0].mxu0
      %2714 = vmatprep.mubr.bf16.mxu0 0
      %2715 = vmatmul.mubr.bf16.gmra.mrb[0].mxu0 %v2649
      %v2716 = vpop.f32.mrb[0].mxu0
      %v2717 = vadd.f32 0.0, %v2716
      %v2718 = vpop.f32.mrb[0].mxu0
      %v2719 = vpop.f32.mrb[0].mxu0
      %v2720 = vadd.f32 0.0, %v2719
      %v2721 = vpop.f32.mrb[0].mxu0
      %2722 = vmatprep.mubr.bf16.mxu0 0
      %2723 = vmatmul.mubr.bf16.gmra.mrb[0].mxu0 %v2652
      %v2724 = vpop.f32.mrb[0].mxu0
      %v2725 = vadd.f32 0.0, %v2724
      %v2726 = vpop.f32.mrb[0].mxu0
      %v2727 = vpop.f32.mrb[0].mxu0
      %v2728 = vadd.f32 0.0, %v2727
      %v2729 = vpop.f32.mrb[0].mxu0
      %2730 = vmatprep.mubr.bf16.mxu0 0
      %2731 = vmatmul.mubr.bf16.gmra.mrb[0].mxu0 %v2655
      %v2732 = vpop.f32.mrb[0].mxu0
      %v2733 = vadd.f32 0.0, %v2732
      %v2734 = vpop.f32.mrb[0].mxu0
      %v2735 = vpop.f32.mrb[0].mxu0
      %v2736 = vadd.f32 0.0, %v2735
      %v2737 = vpop.f32.mrb[0].mxu0
      %2738 = vmatprep.mubr.bf16.mxu0 0
      %2739 = vmatmul.mubr.bf16.gmra.mrb[0].mxu0 %v2658
      %v2740 = vpop.f32.mrb[0].mxu0
      %v2741 = vadd.f32 0.0, %v2740
      %v2742 = vpop.f32.mrb[0].mxu0
      %v2743 = vpop.f32.mrb[0].mxu0
      %v2744 = vadd.f32 0.0, %v2743
      %v2745 = vpop.f32.mrb[0].mxu0
      %2746 = vmatprep.mubr.bf16.mxu0 0
      %2747 = vmatmul.mubr.bf16.gmra.mrb[0].mxu0 %v2661
      %v2748 = vpop.f32.mrb[0].mxu0
      %v2749 = vadd.f32 0.0, %v2748
      %v2750 = vpop.f32.mrb[0].mxu0
      %v2751 = vpop.f32.mrb[0].mxu0
      %v2752 = vadd.f32 0.0, %v2751
      %v2753 = vpop.f32.mrb[0].mxu0
      %2754 = vmatprep.mubr.bf16.mxu0 0
      %2755 = vmatmul.mubr.bf16.gmra.mrb[0].mxu0 %v2664
      %v2756 = vpop.f32.mrb[0].mxu0
      %v2757 = vadd.f32 0.0, %v2756
      %v2758 = vpop.f32.mrb[0].mxu0
      %v2759 = vpop.f32.mrb[0].mxu0
      %v2760 = vadd.f32 0.0, %v2759
      %v2761 = vpop.f32.mrb[0].mxu0
      %2762 = vdwg.mxu0
      %v2763 = vadd.f32 %v2548, %v2701
      %v2764 = vadd.f32 %v2551, %v2704
      %v2765 = vadd.f32 %v2556, %v2709
      %v2766 = vadd.f32 %v2559, %v2712
      %v2767 = vadd.f32 %v2564, %v2717
      %v2768 = vadd.f32 %v2567, %v2720
      %v2769 = vadd.f32 %v2572, %v2725
      %v2770 = vadd.f32 %v2575, %v2728
      %v2771 = vadd.f32 %v2580, %v2733
      %v2772 = vadd.f32 %v2583, %v2736
      %v2773 = vadd.f32 %v2588, %v2741
      %v2774 = vadd.f32 %v2591, %v2744
      %v2775 = vadd.f32 %v2596, %v2749
      %v2776 = vadd.f32 %v2599, %v2752
      %v2777 = vadd.f32 %v2604, %v2757
      %v2778 = vadd.f32 %v2607, %v2760
      %s2779 = scalar_lea.vmem [#allocation2], 24
      %v2780 = vld [vmem:[%s2779] sm:$0xff]
      %v2781 = vld [vmem:[%s2779 + $0x8] sm:$0xff]
      %v2782 = vld [vmem:[%s2779 + $0x18] sm:$0xff]
      %v2783 = vld [vmem:[%s2779 + $0x20] sm:$0xff]
      %v2784 = vld [vmem:[%s2779 + $0x30] sm:$0xff]
      %v2785 = vld [vmem:[%s2779 + $0x38] sm:$0xff]
      %v2786 = vld [vmem:[%s2779 + $0x48] sm:$0xff]
      %v2787 = vld [vmem:[%s2779 + $0x50] sm:$0xff]
      %v2788 = vld [vmem:[%s2779 + $0x60] sm:$0xff]
      %v2789 = vld [vmem:[%s2779 + $0x68] sm:$0xff]
      %v2790 = vld [vmem:[%s2779 + $0x78] sm:$0xff]
      %v2791 = vld [vmem:[%s2779 + $0x80] sm:$0xff]
      %v2792 = vld [vmem:[%s2779 + $0x90] sm:$0xff]
      %v2793 = vld [vmem:[%s2779 + $0x98] sm:$0xff]
      %v2794 = vld [vmem:[%s2779 + $0xa8] sm:$0xff]
      %v2795 = vld [vmem:[%s2779 + $0xb0] sm:$0xff]
      %v2796 = vld [vmem:[%s4 + $0x18] sm:$0xf]
      %v2797 = vld [vmem:[%s4 + $0x1c] sm:$0xf]
      %v2798 = vpack.c.bf16 %v2781, %v2780
      %v2799 = vpack.c.bf16 %v2783, %v2782
      %v2800 = vpack.c.bf16 %v2785, %v2784
      %v2801 = vpack.c.bf16 %v2787, %v2786
      %v2802 = vpack.c.bf16 %v2789, %v2788
      %v2803 = vpack.c.bf16 %v2791, %v2790
      %v2804 = vpack.c.bf16 %v2793, %v2792
      %v2805 = vpack.c.bf16 %v2795, %v2794
      %v2808 = vunpack.c.l.b16 %v2796
      %v2809 = vunpack.c.l.b16 %v2797
      %v2810 = vpack.c.b16 %v2809, %v2808
      %v2813 = vsel %vm1980, %v2798, 0
      %v2816 = vsel %vm1980, %v2799, 0
      %v2819 = vsel %vm1980, %v2800, 0
      %v2822 = vsel %vm1980, %v2801, 0
      %v2825 = vsel %vm1980, %v2802, 0
      %v2828 = vsel %vm1980, %v2803, 0
      %v2831 = vsel %vm1980, %v2804, 0
      %v2834 = vsel %vm1980, %v2805, 0
      %2836 = vmatprep.subr.bf16.mxu0 0
      %2837 = vmatpush1.bf16.msra.mxu0 %v2810
      %2838 = vmatprep.subr.bf16.mxu0 0
      %2839 = vmatpush1.bf16.msra.mxu0 0
      %2840 = vmatprep.subr.bf16.mxu0 0
      %2841 = vmatpush1.bf16.msra.mxu0 0
      %2842 = vmatprep.subr.bf16.mxu0 0
      %2843 = vmatpush1.bf16.msra.mxu0 0
      %2844 = vmatprep.subr.bf16.mxu0 0
      %2845 = vmatpush1.bf16.msra.mxu0 0
      %2846 = vmatprep.subr.bf16.mxu0 0
      %2847 = vmatpush1.bf16.msra.mxu0 0
      %2848 = vmatprep.subr.bf16.mxu0 0
      %2849 = vmatpush1.bf16.msra.mxu0 0
      %2850 = vmatprep.subr.bf16.mxu0 0
      %2851 = vmatpush1.bf16.msra.mxu0 0
      %2852 = vmatprep.subr.bf16.mxu0 0
      %2853 = vmatpush1.bf16.msra.mxu0 0
      %2854 = vmatprep.subr.bf16.mxu0 0
      %2855 = vmatpush1.bf16.msra.mxu0 0
      %2856 = vmatprep.subr.bf16.mxu0 0
      %2857 = vmatpush1.bf16.msra.mxu0 0
      %2858 = vmatprep.subr.bf16.mxu0 0
      %2859 = vmatpush1.bf16.msra.mxu0 0
      %2860 = vmatprep.subr.bf16.mxu0 0
      %2861 = vmatpush1.bf16.msra.mxu0 0
      %2862 = vmatprep.subr.bf16.mxu0 0
      %2863 = vmatpush1.bf16.msra.mxu0 0
      %2864 = vmatprep.subr.bf16.mxu0 0
      %2865 = vmatpush1.bf16.msra.mxu0 0
      %2866 = vmatprep.subr.bf16.mxu0 0
      %2867 = vmatpush1.bf16.msra.mxu0 0
      %2868 = vmatprep.mubr.bf16.mxu0 0
      %2869 = vmatmul.mubr.bf16.gmra.mrb[0].mxu0 %v2813
      %v2870 = vpop.f32.mrb[0].mxu0
      %v2871 = vadd.f32 0.0, %v2870
      %v2872 = vpop.f32.mrb[0].mxu0
      %v2873 = vpop.f32.mrb[0].mxu0
      %v2874 = vadd.f32 0.0, %v2873
      %v2875 = vpop.f32.mrb[0].mxu0
      %2876 = vmatprep.mubr.bf16.mxu0 0
      %2877 = vmatmul.mubr.bf16.gmra.mrb[0].mxu0 %v2816
      %v2878 = vpop.f32.mrb[0].mxu0
      %v2879 = vadd.f32 0.0, %v2878
      %v2880 = vpop.f32.mrb[0].mxu0
      %v2881 = vpop.f32.mrb[0].mxu0
      %v2882 = vadd.f32 0.0, %v2881
      %v2883 = vpop.f32.mrb[0].mxu0
      %2884 = vmatprep.mubr.bf16.mxu0 0
      %2885 = vmatmul.mubr.bf16.gmra.mrb[0].mxu0 %v2819
      %v2886 = vpop.f32.mrb[0].mxu0
      %v2887 = vadd.f32 0.0, %v2886
      %v2888 = vpop.f32.mrb[0].mxu0
      %v2889 = vpop.f32.mrb[0].mxu0
      %v2890 = vadd.f32 0.0, %v2889
      %v2891 = vpop.f32.mrb[0].mxu0
      %2892 = vmatprep.mubr.bf16.mxu0 0
      %2893 = vmatmul.mubr.bf16.gmra.mrb[0].mxu0 %v2822
      %v2894 = vpop.f32.mrb[0].mxu0
      %v2895 = vadd.f32 0.0, %v2894
      %v2896 = vpop.f32.mrb[0].mxu0
      %v2897 = vpop.f32.mrb[0].mxu0
      %v2898 = vadd.f32 0.0, %v2897
      %v2899 = vpop.f32.mrb[0].mxu0
      %2900 = vmatprep.mubr.bf16.mxu0 0
      %2901 = vmatmul.mubr.bf16.gmra.mrb[0].mxu0 %v2825
      %v2902 = vpop.f32.mrb[0].mxu0
      %v2903 = vadd.f32 0.0, %v2902
      %v2904 = vpop.f32.mrb[0].mxu0
      %v2905 = vpop.f32.mrb[0].mxu0
      %v2906 = vadd.f32 0.0, %v2905
      %v2907 = vpop.f32.mrb[0].mxu0
      %2908 = vmatprep.mubr.bf16.mxu0 0
      %2909 = vmatmul.mubr.bf16.gmra.mrb[0].mxu0 %v2828
      %v2910 = vpop.f32.mrb[0].mxu0
      %v2911 = vadd.f32 0.0, %v2910
      %v2912 = vpop.f32.mrb[0].mxu0
      %v2913 = vpop.f32.mrb[0].mxu0
      %v2914 = vadd.f32 0.0, %v2913
      %v2915 = vpop.f32.mrb[0].mxu0
      %2916 = vmatprep.mubr.bf16.mxu0 0
      %2917 = vmatmul.mubr.bf16.gmra.mrb[0].mxu0 %v2831
      %v2918 = vpop.f32.mrb[0].mxu0
      %v2919 = vadd.f32 0.0, %v2918
      %v2920 = vpop.f32.mrb[0].mxu0
      %v2921 = vpop.f32.mrb[0].mxu0
      %v2922 = vadd.f32 0.0, %v2921
      %v2923 = vpop.f32.mrb[0].mxu0
      %2924 = vmatprep.mubr.bf16.mxu0 0
      %2925 = vmatmul.mubr.bf16.gmra.mrb[0].mxu0 %v2834
      %v2926 = vpop.f32.mrb[0].mxu0
      %v2927 = vadd.f32 0.0, %v2926
      %v2928 = vpop.f32.mrb[0].mxu0
      %v2929 = vpop.f32.mrb[0].mxu0
      %v2930 = vadd.f32 0.0, %v2929
      %v2931 = vpop.f32.mrb[0].mxu0
      %2932 = vdwg.mxu0
      %v2933 = vadd.f32 %v2763, %v2871
      %v2934 = vadd.f32 %v2764, %v2874
      %v2935 = vadd.f32 %v2765, %v2879
      %v2936 = vadd.f32 %v2766, %v2882
      %v2937 = vadd.f32 %v2767, %v2887
      %v2938 = vadd.f32 %v2768, %v2890
      %v2939 = vadd.f32 %v2769, %v2895
      %v2940 = vadd.f32 %v2770, %v2898
      %v2941 = vadd.f32 %v2771, %v2903
      %v2942 = vadd.f32 %v2772, %v2906
      %v2943 = vadd.f32 %v2773, %v2911
      %v2944 = vadd.f32 %v2774, %v2914
      %v2945 = vadd.f32 %v2775, %v2919
      %v2946 = vadd.f32 %v2776, %v2922
      %v2947 = vadd.f32 %v2777, %v2927
      %v2948 = vadd.f32 %v2778, %v2930
      %v2949 = vld [vmem:[%s2779 + $0x1] sm:$0xff]
      %v2950 = vld [vmem:[%s2779 + $0x9] sm:$0xff]
      %v2951 = vld [vmem:[%s2779 + $0x19] sm:$0xff]
      %v2952 = vld [vmem:[%s2779 + $0x21] sm:$0xff]
      %v2953 = vld [vmem:[%s2779 + $0x31] sm:$0xff]
      %v2954 = vld [vmem:[%s2779 + $0x39] sm:$0xff]
      %v2955 = vld [vmem:[%s2779 + $0x49] sm:$0xff]
      %v2956 = vld [vmem:[%s2779 + $0x51] sm:$0xff]
      %v2957 = vld [vmem:[%s2779 + $0x61] sm:$0xff]
      %v2958 = vld [vmem:[%s2779 + $0x69] sm:$0xff]
      %v2959 = vld [vmem:[%s2779 + $0x79] sm:$0xff]
      %v2960 = vld [vmem:[%s2779 + $0x81] sm:$0xff]
      %v2961 = vld [vmem:[%s2779 + $0x91] sm:$0xff]
      %v2962 = vld [vmem:[%s2779 + $0x99] sm:$0xff]
      %v2963 = vld [vmem:[%s2779 + $0xa9] sm:$0xff]
      %v2964 = vld [vmem:[%s2779 + $0xb1] sm:$0xff]
      %v2965 = vld [vmem:[%s4 + $0x20] sm:$0xf]
      %v2966 = vld [vmem:[%s4 + $0x24] sm:$0xf]
      %v2967 = vpack.c.bf16 %v2950, %v2949
      %v2968 = vpack.c.bf16 %v2952, %v2951
      %v2969 = vpack.c.bf16 %v2954, %v2953
      %v2970 = vpack.c.bf16 %v2956, %v2955
      %v2971 = vpack.c.bf16 %v2958, %v2957
      %v2972 = vpack.c.bf16 %v2960, %v2959
      %v2973 = vpack.c.bf16 %v2962, %v2961
      %v2974 = vpack.c.bf16 %v2964, %v2963
      %v2977 = vunpack.c.l.b16 %v2965
      %v2978 = vunpack.c.l.b16 %v2966
      %v2979 = vpack.c.b16 %v2978, %v2977
      %v2982 = vsel %vm1980, %v2967, 0
      %v2985 = vsel %vm1980, %v2968, 0
      %v2988 = vsel %vm1980, %v2969, 0
      %v2991 = vsel %vm1980, %v2970, 0
      %v2994 = vsel %vm1980, %v2971, 0
      %v2997 = vsel %vm1980, %v2972, 0
      %v3000 = vsel %vm1980, %v2973, 0
      %v3003 = vsel %vm1980, %v2974, 0
      %3005 = vmatprep.subr.bf16.mxu0 0
      %3006 = vmatpush1.bf16.msra.mxu0 %v2979
      %3007 = vmatprep.subr.bf16.mxu0 0
      %3008 = vmatpush1.bf16.msra.mxu0 0
      %3009 = vmatprep.subr.bf16.mxu0 0
      %3010 = vmatpush1.bf16.msra.mxu0 0
      %3011 = vmatprep.subr.bf16.mxu0 0
      %3012 = vmatpush1.bf16.msra.mxu0 0
      %3013 = vmatprep.subr.bf16.mxu0 0
      %3014 = vmatpush1.bf16.msra.mxu0 0
      %3015 = vmatprep.subr.bf16.mxu0 0
      %3016 = vmatpush1.bf16.msra.mxu0 0
      %3017 = vmatprep.subr.bf16.mxu0 0
      %3018 = vmatpush1.bf16.msra.mxu0 0
      %3019 = vmatprep.subr.bf16.mxu0 0
      %3020 = vmatpush1.bf16.msra.mxu0 0
      %3021 = vmatprep.subr.bf16.mxu0 0
      %3022 = vmatpush1.bf16.msra.mxu0 0
      %3023 = vmatprep.subr.bf16.mxu0 0
      %3024 = vmatpush1.bf16.msra.mxu0 0
      %3025 = vmatprep.subr.bf16.mxu0 0
      %3026 = vmatpush1.bf16.msra.mxu0 0
      %3027 = vmatprep.subr.bf16.mxu0 0
      %3028 = vmatpush1.bf16.msra.mxu0 0
      %3029 = vmatprep.subr.bf16.mxu0 0
      %3030 = vmatpush1.bf16.msra.mxu0 0
      %3031 = vmatprep.subr.bf16.mxu0 0
      %3032 = vmatpush1.bf16.msra.mxu0 0
      %3033 = vmatprep.subr.bf16.mxu0 0
      %3034 = vmatpush1.bf16.msra.mxu0 0
      %3035 = vmatprep.subr.bf16.mxu0 0
      %3036 = vmatpush1.bf16.msra.mxu0 0
      %3037 = vmatprep.mubr.bf16.mxu0 0
      %3038 = vmatmul.mubr.bf16.gmra.mrb[0].mxu0 %v2982
      %v3039 = vpop.f32.mrb[0].mxu0
      %v3040 = vadd.f32 0.0, %v3039
      %v3041 = vpop.f32.mrb[0].mxu0
      %v3042 = vpop.f32.mrb[0].mxu0
      %v3043 = vadd.f32 0.0, %v3042
      %v3044 = vpop.f32.mrb[0].mxu0
      %3045 = vmatprep.mubr.bf16.mxu0 0
      %3046 = vmatmul.mubr.bf16.gmra.mrb[0].mxu0 %v2985
      %v3047 = vpop.f32.mrb[0].mxu0
      %v3048 = vadd.f32 0.0, %v3047
      %v3049 = vpop.f32.mrb[0].mxu0
      %v3050 = vpop.f32.mrb[0].mxu0
      %v3051 = vadd.f32 0.0, %v3050
      %v3052 = vpop.f32.mrb[0].mxu0
      %3053 = vmatprep.mubr.bf16.mxu0 0
      %3054 = vmatmul.mubr.bf16.gmra.mrb[0].mxu0 %v2988
      %v3055 = vpop.f32.mrb[0].mxu0
      %v3056 = vadd.f32 0.0, %v3055
      %v3057 = vpop.f32.mrb[0].mxu0
      %v3058 = vpop.f32.mrb[0].mxu0
      %v3059 = vadd.f32 0.0, %v3058
      %v3060 = vpop.f32.mrb[0].mxu0
      %3061 = vmatprep.mubr.bf16.mxu0 0
      %3062 = vmatmul.mubr.bf16.gmra.mrb[0].mxu0 %v2991
      %v3063 = vpop.f32.mrb[0].mxu0
      %v3064 = vadd.f32 0.0, %v3063
      %v3065 = vpop.f32.mrb[0].mxu0
      %v3066 = vpop.f32.mrb[0].mxu0
      %v3067 = vadd.f32 0.0, %v3066
      %v3068 = vpop.f32.mrb[0].mxu0
      %3069 = vmatprep.mubr.bf16.mxu0 0
      %3070 = vmatmul.mubr.bf16.gmra.mrb[0].mxu0 %v2994
      %v3071 = vpop.f32.mrb[0].mxu0
      %v3072 = vadd.f32 0.0, %v3071
      %v3073 = vpop.f32.mrb[0].mxu0
      %v3074 = vpop.f32.mrb[0].mxu0
      %v3075 = vadd.f32 0.0, %v3074
      %v3076 = vpop.f32.mrb[0].mxu0
      %3077 = vmatprep.mubr.bf16.mxu0 0
      %3078 = vmatmul.mubr.bf16.gmra.mrb[0].mxu0 %v2997
      %v3079 = vpop.f32.mrb[0].mxu0
      %v3080 = vadd.f32 0.0, %v3079
      %v3081 = vpop.f32.mrb[0].mxu0
      %v3082 = vpop.f32.mrb[0].mxu0
      %v3083 = vadd.f32 0.0, %v3082
      %v3084 = vpop.f32.mrb[0].mxu0
      %3085 = vmatprep.mubr.bf16.mxu0 0
      %3086 = vmatmul.mubr.bf16.gmra.mrb[0].mxu0 %v3000
      %v3087 = vpop.f32.mrb[0].mxu0
      %v3088 = vadd.f32 0.0, %v3087
      %v3089 = vpop.f32.mrb[0].mxu0
      %v3090 = vpop.f32.mrb[0].mxu0
      %v3091 = vadd.f32 0.0, %v3090
      %v3092 = vpop.f32.mrb[0].mxu0
      %3093 = vmatprep.mubr.bf16.mxu0 0
      %3094 = vmatmul.mubr.bf16.gmra.mrb[0].mxu0 %v3003
      %v3095 = vpop.f32.mrb[0].mxu0
      %v3096 = vadd.f32 0.0, %v3095
      %v3097 = vpop.f32.mrb[0].mxu0
      %v3098 = vpop.f32.mrb[0].mxu0
      %v3099 = vadd.f32 0.0, %v3098
      %v3100 = vpop.f32.mrb[0].mxu0
      %3101 = vdwg.mxu0
      %v3102 = vadd.f32 %v2933, %v3040
      %v3103 = vadd.f32 %v2934, %v3043
      %v3104 = vadd.f32 %v2935, %v3048
      %v3105 = vadd.f32 %v2936, %v3051
      %v3106 = vadd.f32 %v2937, %v3056
      %v3107 = vadd.f32 %v2938, %v3059
      %v3108 = vadd.f32 %v2939, %v3064
      %v3109 = vadd.f32 %v2940, %v3067
      %v3110 = vadd.f32 %v2941, %v3072
      %v3111 = vadd.f32 %v2942, %v3075
      %v3112 = vadd.f32 %v2943, %v3080
      %v3113 = vadd.f32 %v2944, %v3083
      %v3114 = vadd.f32 %v2945, %v3088
      %v3115 = vadd.f32 %v2946, %v3091
      %v3116 = vadd.f32 %v2947, %v3096
      %v3117 = vadd.f32 %v2948, %v3099
      %v3118 = vld [vmem:[%s2779 + $0x2] sm:$0xff]
      %v3119 = vld [vmem:[%s2779 + $0xa] sm:$0xff]
      %v3120 = vld [vmem:[%s2779 + $0x1a] sm:$0xff]
      %v3121 = vld [vmem:[%s2779 + $0x22] sm:$0xff]
      %v3122 = vld [vmem:[%s2779 + $0x32] sm:$0xff]
      %v3123 = vld [vmem:[%s2779 + $0x3a] sm:$0xff]
      %v3124 = vld [vmem:[%s2779 + $0x4a] sm:$0xff]
      %v3125 = vld [vmem:[%s2779 + $0x52] sm:$0xff]
      %v3126 = vld [vmem:[%s2779 + $0x62] sm:$0xff]
      %v3127 = vld [vmem:[%s2779 + $0x6a] sm:$0xff]
      %v3128 = vld [vmem:[%s2779 + $0x7a] sm:$0xff]
      %v3129 = vld [vmem:[%s2779 + $0x82] sm:$0xff]
      %v3130 = vld [vmem:[%s2779 + $0x92] sm:$0xff]
      %v3131 = vld [vmem:[%s2779 + $0x9a] sm:$0xff]
      %v3132 = vld [vmem:[%s2779 + $0xaa] sm:$0xff]
      %v3133 = vld [vmem:[%s2779 + $0xb2] sm:$0xff]
      %v3134 = vld [vmem:[%s4 + $0x28] sm:$0xf]
      %v3135 = vld [vmem:[%s4 + $0x2c] sm:$0xf]
      %v3136 = vpack.c.bf16 %v3119, %v3118
      %v3137 = vpack.c.bf16 %v3121, %v3120
      %v3138 = vpack.c.bf16 %v3123, %v3122
      %v3139 = vpack.c.bf16 %v3125, %v3124
      %v3140 = vpack.c.bf16 %v3127, %v3126
      %v3141 = vpack.c.bf16 %v3129, %v3128
      %v3142 = vpack.c.bf16 %v3131, %v3130
      %v3143 = vpack.c.bf16 %v3133, %v3132
      %v3146 = vunpack.c.l.b16 %v3134
      %v3147 = vunpack.c.l.b16 %v3135
      %v3148 = vpack.c.b16 %v3147, %v3146
      %v3151 = vsel %vm1980, %v3136, 0
      %v3154 = vsel %vm1980, %v3137, 0
      %v3157 = vsel %vm1980, %v3138, 0
      %v3160 = vsel %vm1980, %v3139, 0
      %v3163 = vsel %vm1980, %v3140, 0
      %v3166 = vsel %vm1980, %v3141, 0
      %v3169 = vsel %vm1980, %v3142, 0
      %v3172 = vsel %vm1980, %v3143, 0
      %3174 = vmatprep.subr.bf16.mxu0 0
      %3175 = vmatpush1.bf16.msra.mxu0 %v3148
      %3176 = vmatprep.subr.bf16.mxu0 0
      %3177 = vmatpush1.bf16.msra.mxu0 0
      %3178 = vmatprep.subr.bf16.mxu0 0
      %3179 = vmatpush1.bf16.msra.mxu0 0
      %3180 = vmatprep.subr.bf16.mxu0 0
      %3181 = vmatpush1.bf16.msra.mxu0 0
      %3182 = vmatprep.subr.bf16.mxu0 0
      %3183 = vmatpush1.bf16.msra.mxu0 0
      %3184 = vmatprep.subr.bf16.mxu0 0
      %3185 = vmatpush1.bf16.msra.mxu0 0
      %3186 = vmatprep.subr.bf16.mxu0 0
      %3187 = vmatpush1.bf16.msra.mxu0 0
      %3188 = vmatprep.subr.bf16.mxu0 0
      %3189 = vmatpush1.bf16.msra.mxu0 0
      %3190 = vmatprep.subr.bf16.mxu0 0
      %3191 = vmatpush1.bf16.msra.mxu0 0
      %3192 = vmatprep.subr.bf16.mxu0 0
      %3193 = vmatpush1.bf16.msra.mxu0 0
      %3194 = vmatprep.subr.bf16.mxu0 0
      %3195 = vmatpush1.bf16.msra.mxu0 0
      %3196 = vmatprep.subr.bf16.mxu0 0
      %3197 = vmatpush1.bf16.msra.mxu0 0
      %3198 = vmatprep.subr.bf16.mxu0 0
      %3199 = vmatpush1.bf16.msra.mxu0 0
      %3200 = vmatprep.subr.bf16.mxu0 0
      %3201 = vmatpush1.bf16.msra.mxu0 0
      %3202 = vmatprep.subr.bf16.mxu0 0
      %3203 = vmatpush1.bf16.msra.mxu0 0
      %3204 = vmatprep.subr.bf16.mxu0 0
      %3205 = vmatpush1.bf16.msra.mxu0 0
      %3206 = vmatprep.mubr.bf16.mxu0 0
      %3207 = vmatmul.mubr.bf16.gmra.mrb[0].mxu0 %v3151
      %v3208 = vpop.f32.mrb[0].mxu0
      %v3209 = vadd.f32 0.0, %v3208
      %v3210 = vpop.f32.mrb[0].mxu0
      %v3211 = vpop.f32.mrb[0].mxu0
      %v3212 = vadd.f32 0.0, %v3211
      %v3213 = vpop.f32.mrb[0].mxu0
      %3214 = vmatprep.mubr.bf16.mxu0 0
      %3215 = vmatmul.mubr.bf16.gmra.mrb[0].mxu0 %v3154
      %v3216 = vpop.f32.mrb[0].mxu0
      %v3217 = vadd.f32 0.0, %v3216
      %v3218 = vpop.f32.mrb[0].mxu0
      %v3219 = vpop.f32.mrb[0].mxu0
      %v3220 = vadd.f32 0.0, %v3219
      %v3221 = vpop.f32.mrb[0].mxu0
      %3222 = vmatprep.mubr.bf16.mxu0 0
      %3223 = vmatmul.mubr.bf16.gmra.mrb[0].mxu0 %v3157
      %v3224 = vpop.f32.mrb[0].mxu0
      %v3225 = vadd.f32 0.0, %v3224
      %v3226 = vpop.f32.mrb[0].mxu0
      %v3227 = vpop.f32.mrb[0].mxu0
      %v3228 = vadd.f32 0.0, %v3227
      %v3229 = vpop.f32.mrb[0].mxu0
      %3230 = vmatprep.mubr.bf16.mxu0 0
      %3231 = vmatmul.mubr.bf16.gmra.mrb[0].mxu0 %v3160
      %v3232 = vpop.f32.mrb[0].mxu0
      %v3233 = vadd.f32 0.0, %v3232
      %v3234 = vpop.f32.mrb[0].mxu0
      %v3235 = vpop.f32.mrb[0].mxu0
      %v3236 = vadd.f32 0.0, %v3235
      %v3237 = vpop.f32.mrb[0].mxu0
      %3238 = vmatprep.mubr.bf16.mxu0 0
      %3239 = vmatmul.mubr.bf16.gmra.mrb[0].mxu0 %v3163
      %v3240 = vpop.f32.mrb[0].mxu0
      %v3241 = vadd.f32 0.0, %v3240
      %v3242 = vpop.f32.mrb[0].mxu0
      %v3243 = vpop.f32.mrb[0].mxu0
      %v3244 = vadd.f32 0.0, %v3243
      %v3245 = vpop.f32.mrb[0].mxu0
      %3246 = vmatprep.mubr.bf16.mxu0 0
      %3247 = vmatmul.mubr.bf16.gmra.mrb[0].mxu0 %v3166
      %v3248 = vpop.f32.mrb[0].mxu0
      %v3249 = vadd.f32 0.0, %v3248
      %v3250 = vpop.f32.mrb[0].mxu0
      %v3251 = vpop.f32.mrb[0].mxu0
      %v3252 = vadd.f32 0.0, %v3251
      %v3253 = vpop.f32.mrb[0].mxu0
      %3254 = vmatprep.mubr.bf16.mxu0 0
      %3255 = vmatmul.mubr.bf16.gmra.mrb[0].mxu0 %v3169
      %v3256 = vpop.f32.mrb[0].mxu0
      %v3257 = vadd.f32 0.0, %v3256
      %v3258 = vpop.f32.mrb[0].mxu0
      %v3259 = vpop.f32.mrb[0].mxu0
      %v3260 = vadd.f32 0.0, %v3259
      %v3261 = vpop.f32.mrb[0].mxu0
      %3262 = vmatprep.mubr.bf16.mxu0 0
      %3263 = vmatmul.mubr.bf16.gmra.mrb[0].mxu0 %v3172
      %v3264 = vpop.f32.mrb[0].mxu0
      %v3265 = vadd.f32 0.0, %v3264
      %v3266 = vpop.f32.mrb[0].mxu0
      %v3267 = vpop.f32.mrb[0].mxu0
      %v3268 = vadd.f32 0.0, %v3267
      %v3269 = vpop.f32.mrb[0].mxu0
      %3270 = vdwg.mxu0
      %v3271 = vadd.f32 %v3102, %v3209
      %v3272 = vadd.f32 %v3103, %v3212
      %v3273 = vadd.f32 %v3104, %v3217
      %v3274 = vadd.f32 %v3105, %v3220
      %v3275 = vadd.f32 %v3106, %v3225
      %v3276 = vadd.f32 %v3107, %v3228
      %v3277 = vadd.f32 %v3108, %v3233
      %v3278 = vadd.f32 %v3109, %v3236
      %v3279 = vadd.f32 %v3110, %v3241
      %v3280 = vadd.f32 %v3111, %v3244
      %v3281 = vadd.f32 %v3112, %v3249
      %v3282 = vadd.f32 %v3113, %v3252
      %v3283 = vadd.f32 %v3114, %v3257
      %v3284 = vadd.f32 %v3115, %v3260
      %v3285 = vadd.f32 %v3116, %v3265
      %v3286 = vadd.f32 %v3117, %v3268
      %s3287 = scalar_lea.vmem [#allocation2], 48
      %v3288 = vld [vmem:[%s3287] sm:$0xff]
      %v3289 = vld [vmem:[%s3287 + $0x8] sm:$0xff]
      %v3290 = vld [vmem:[%s3287 + $0x18] sm:$0xff]
      %v3291 = vld [vmem:[%s3287 + $0x20] sm:$0xff]
      %v3292 = vld [vmem:[%s3287 + $0x30] sm:$0xff]
      %v3293 = vld [vmem:[%s3287 + $0x38] sm:$0xff]
      %v3294 = vld [vmem:[%s3287 + $0x48] sm:$0xff]
      %v3295 = vld [vmem:[%s3287 + $0x50] sm:$0xff]
      %v3296 = vld [vmem:[%s3287 + $0x60] sm:$0xff]
      %v3297 = vld [vmem:[%s3287 + $0x68] sm:$0xff]
      %v3298 = vld [vmem:[%s3287 + $0x78] sm:$0xff]
      %v3299 = vld [vmem:[%s3287 + $0x80] sm:$0xff]
      %v3300 = vld [vmem:[%s3287 + $0x90] sm:$0xff]
      %v3301 = vld [vmem:[%s3287 + $0x98] sm:$0xff]
      %v3302 = vld [vmem:[%s3287 + $0xa8] sm:$0xff]
      %v3303 = vld [vmem:[%s3287 + $0xb0] sm:$0xff]
      %v3304 = vld [vmem:[%s4 + $0x30] sm:$0xf]
      %v3305 = vld [vmem:[%s4 + $0x34] sm:$0xf]
      %v3306 = vpack.c.bf16 %v3289, %v3288
      %v3307 = vpack.c.bf16 %v3291, %v3290
      %v3308 = vpack.c.bf16 %v3293, %v3292
      %v3309 = vpack.c.bf16 %v3295, %v3294
      %v3310 = vpack.c.bf16 %v3297, %v3296
      %v3311 = vpack.c.bf16 %v3299, %v3298
      %v3312 = vpack.c.bf16 %v3301, %v3300
      %v3313 = vpack.c.bf16 %v3303, %v3302
      %v3316 = vunpack.c.l.b16 %v3304
      %v3317 = vunpack.c.l.b16 %v3305
      %v3318 = vpack.c.b16 %v3317, %v3316
      %v3321 = vsel %vm1980, %v3306, 0
      %v3324 = vsel %vm1980, %v3307, 0
      %v3327 = vsel %vm1980, %v3308, 0
      %v3330 = vsel %vm1980, %v3309, 0
      %v3333 = vsel %vm1980, %v3310, 0
      %v3336 = vsel %vm1980, %v3311, 0
      %v3339 = vsel %vm1980, %v3312, 0
      %v3342 = vsel %vm1980, %v3313, 0
      %3344 = vmatprep.subr.bf16.mxu0 0
      %3345 = vmatpush1.bf16.msra.mxu0 %v3318
      %3346 = vmatprep.subr.bf16.mxu0 0
      %3347 = vmatpush1.bf16.msra.mxu0 0
      %3348 = vmatprep.subr.bf16.mxu0 0
      %3349 = vmatpush1.bf16.msra.mxu0 0
      %3350 = vmatprep.subr.bf16.mxu0 0
      %3351 = vmatpush1.bf16.msra.mxu0 0
      %3352 = vmatprep.subr.bf16.mxu0 0
      %3353 = vmatpush1.bf16.msra.mxu0 0
      %3354 = vmatprep.subr.bf16.mxu0 0
      %3355 = vmatpush1.bf16.msra.mxu0 0
      %3356 = vmatprep.subr.bf16.mxu0 0
      %3357 = vmatpush1.bf16.msra.mxu0 0
      %3358 = vmatprep.subr.bf16.mxu0 0
      %3359 = vmatpush1.bf16.msra.mxu0 0
      %3360 = vmatprep.subr.bf16.mxu0 0
      %3361 = vmatpush1.bf16.msra.mxu0 0
      %3362 = vmatprep.subr.bf16.mxu0 0
      %3363 = vmatpush1.bf16.msra.mxu0 0
      %3364 = vmatprep.subr.bf16.mxu0 0
      %3365 = vmatpush1.bf16.msra.mxu0 0
      %3366 = vmatprep.subr.bf16.mxu0 0
      %3367 = vmatpush1.bf16.msra.mxu0 0
      %3368 = vmatprep.subr.bf16.mxu0 0
      %3369 = vmatpush1.bf16.msra.mxu0 0
      %3370 = vmatprep.subr.bf16.mxu0 0
      %3371 = vmatpush1.bf16.msra.mxu0 0
      %3372 = vmatprep.subr.bf16.mxu0 0
      %3373 = vmatpush1.bf16.msra.mxu0 0
      %3374 = vmatprep.subr.bf16.mxu0 0
      %3375 = vmatpush1.bf16.msra.mxu0 0
      %3376 = vmatprep.mubr.bf16.mxu0 0
      %3377 = vmatmul.mubr.bf16.gmra.mrb[0].mxu0 %v3321
      %v3378 = vpop.f32.mrb[0].mxu0
      %v3379 = vadd.f32 0.0, %v3378
      %v3380 = vpop.f32.mrb[0].mxu0
      %v3381 = vpop.f32.mrb[0].mxu0
      %v3382 = vadd.f32 0.0, %v3381
      %v3383 = vpop.f32.mrb[0].mxu0
      %3384 = vmatprep.mubr.bf16.mxu0 0
      %3385 = vmatmul.mubr.bf16.gmra.mrb[0].mxu0 %v3324
      %v3386 = vpop.f32.mrb[0].mxu0
      %v3387 = vadd.f32 0.0, %v3386
      %v3388 = vpop.f32.mrb[0].mxu0
      %v3389 = vpop.f32.mrb[0].mxu0
      %v3390 = vadd.f32 0.0, %v3389
      %v3391 = vpop.f32.mrb[0].mxu0
      %3392 = vmatprep.mubr.bf16.mxu0 0
      %3393 = vmatmul.mubr.bf16.gmra.mrb[0].mxu0 %v3327
      %v3394 = vpop.f32.mrb[0].mxu0
      %v3395 = vadd.f32 0.0, %v3394
      %v3396 = vpop.f32.mrb[0].mxu0
      %v3397 = vpop.f32.mrb[0].mxu0
      %v3398 = vadd.f32 0.0, %v3397
      %v3399 = vpop.f32.mrb[0].mxu0
      %3400 = vmatprep.mubr.bf16.mxu0 0
      %3401 = vmatmul.mubr.bf16.gmra.mrb[0].mxu0 %v3330
      %v3402 = vpop.f32.mrb[0].mxu0
      %v3403 = vadd.f32 0.0, %v3402
      %v3404 = vpop.f32.mrb[0].mxu0
      %v3405 = vpop.f32.mrb[0].mxu0
      %v3406 = vadd.f32 0.0, %v3405
      %v3407 = vpop.f32.mrb[0].mxu0
      %3408 = vmatprep.mubr.bf16.mxu0 0
      %3409 = vmatmul.mubr.bf16.gmra.mrb[0].mxu0 %v3333
      %v3410 = vpop.f32.mrb[0].mxu0
      %v3411 = vadd.f32 0.0, %v3410
      %v3412 = vpop.f32.mrb[0].mxu0
      %v3413 = vpop.f32.mrb[0].mxu0
      %v3414 = vadd.f32 0.0, %v3413
      %v3415 = vpop.f32.mrb[0].mxu0
      %3416 = vmatprep.mubr.bf16.mxu0 0
      %3417 = vmatmul.mubr.bf16.gmra.mrb[0].mxu0 %v3336
      %v3418 = vpop.f32.mrb[0].mxu0
      %v3419 = vadd.f32 0.0, %v3418
      %v3420 = vpop.f32.mrb[0].mxu0
      %v3421 = vpop.f32.mrb[0].mxu0
      %v3422 = vadd.f32 0.0, %v3421
      %v3423 = vpop.f32.mrb[0].mxu0
      %3424 = vmatprep.mubr.bf16.mxu0 0
      %3425 = vmatmul.mubr.bf16.gmra.mrb[0].mxu0 %v3339
      %v3426 = vpop.f32.mrb[0].mxu0
      %v3427 = vadd.f32 0.0, %v3426
      %v3428 = vpop.f32.mrb[0].mxu0
      %v3429 = vpop.f32.mrb[0].mxu0
      %v3430 = vadd.f32 0.0, %v3429
      %v3431 = vpop.f32.mrb[0].mxu0
      %3432 = vmatprep.mubr.bf16.mxu0 0
      %3433 = vmatmul.mubr.bf16.gmra.mrb[0].mxu0 %v3342
      %v3434 = vpop.f32.mrb[0].mxu0
      %v3435 = vadd.f32 0.0, %v3434
      %v3436 = vpop.f32.mrb[0].mxu0
      %v3437 = vpop.f32.mrb[0].mxu0
      %v3438 = vadd.f32 0.0, %v3437
      %v3439 = vpop.f32.mrb[0].mxu0
      %3440 = vdwg.mxu0
      %v3441 = vadd.f32 %v3271, %v3379
      %v3442 = vadd.f32 %v3272, %v3382
      %v3443 = vadd.f32 %v3273, %v3387
      %v3444 = vadd.f32 %v3274, %v3390
      %v3445 = vadd.f32 %v3275, %v3395
      %v3446 = vadd.f32 %v3276, %v3398
      %v3447 = vadd.f32 %v3277, %v3403
      %v3448 = vadd.f32 %v3278, %v3406
      %v3449 = vadd.f32 %v3279, %v3411
      %v3450 = vadd.f32 %v3280, %v3414
      %v3451 = vadd.f32 %v3281, %v3419
      %v3452 = vadd.f32 %v3282, %v3422
      %v3453 = vadd.f32 %v3283, %v3427
      %v3454 = vadd.f32 %v3284, %v3430
      %v3455 = vadd.f32 %v3285, %v3435
      %v3456 = vadd.f32 %v3286, %v3438
      %v3457 = vld [vmem:[%s3287 + $0x1] sm:$0xff]
      %v3458 = vld [vmem:[%s3287 + $0x9] sm:$0xff]
      %v3459 = vld [vmem:[%s3287 + $0x19] sm:$0xff]
      %v3460 = vld [vmem:[%s3287 + $0x21] sm:$0xff]
      %v3461 = vld [vmem:[%s3287 + $0x31] sm:$0xff]
      %v3462 = vld [vmem:[%s3287 + $0x39] sm:$0xff]
      %v3463 = vld [vmem:[%s3287 + $0x49] sm:$0xff]
      %v3464 = vld [vmem:[%s3287 + $0x51] sm:$0xff]
      %v3465 = vld [vmem:[%s3287 + $0x61] sm:$0xff]
      %v3466 = vld [vmem:[%s3287 + $0x69] sm:$0xff]
      %v3467 = vld [vmem:[%s3287 + $0x79] sm:$0xff]
      %v3468 = vld [vmem:[%s3287 + $0x81] sm:$0xff]
      %v3469 = vld [vmem:[%s3287 + $0x91] sm:$0xff]
      %v3470 = vld [vmem:[%s3287 + $0x99] sm:$0xff]
      %v3471 = vld [vmem:[%s3287 + $0xa9] sm:$0xff]
      %v3472 = vld [vmem:[%s3287 + $0xb1] sm:$0xff]
      %v3473 = vld [vmem:[%s4 + $0x38] sm:$0xf]
      %v3474 = vld [vmem:[%s4 + $0x3c] sm:$0xf]
      %v3475 = vpack.c.bf16 %v3458, %v3457
      %v3476 = vpack.c.bf16 %v3460, %v3459
      %v3477 = vpack.c.bf16 %v3462, %v3461
      %v3478 = vpack.c.bf16 %v3464, %v3463
      %v3479 = vpack.c.bf16 %v3466, %v3465
      %v3480 = vpack.c.bf16 %v3468, %v3467
      %v3481 = vpack.c.bf16 %v3470, %v3469
      %v3482 = vpack.c.bf16 %v3472, %v3471
      %v3485 = vunpack.c.l.b16 %v3473
      %v3486 = vunpack.c.l.b16 %v3474
      %v3487 = vpack.c.b16 %v3486, %v3485
      %v3490 = vsel %vm1980, %v3475, 0
      %v3493 = vsel %vm1980, %v3476, 0
      %v3496 = vsel %vm1980, %v3477, 0
      %v3499 = vsel %vm1980, %v3478, 0
      %v3502 = vsel %vm1980, %v3479, 0
      %v3505 = vsel %vm1980, %v3480, 0
      %v3508 = vsel %vm1980, %v3481, 0
      %v3511 = vsel %vm1980, %v3482, 0
      %3513 = vmatprep.subr.bf16.mxu0 0
      %3514 = vmatpush1.bf16.msra.mxu0 %v3487
      %3515 = vmatprep.subr.bf16.mxu0 0
      %3516 = vmatpush1.bf16.msra.mxu0 0
      %3517 = vmatprep.subr.bf16.mxu0 0
      %3518 = vmatpush1.bf16.msra.mxu0 0
      %3519 = vmatprep.subr.bf16.mxu0 0
      %3520 = vmatpush1.bf16.msra.mxu0 0
      %3521 = vmatprep.subr.bf16.mxu0 0
      %3522 = vmatpush1.bf16.msra.mxu0 0
      %3523 = vmatprep.subr.bf16.mxu0 0
      %3524 = vmatpush1.bf16.msra.mxu0 0
      %3525 = vmatprep.subr.bf16.mxu0 0
      %3526 = vmatpush1.bf16.msra.mxu0 0
      %3527 = vmatprep.subr.bf16.mxu0 0
      %3528 = vmatpush1.bf16.msra.mxu0 0
      %3529 = vmatprep.subr.bf16.mxu0 0
      %3530 = vmatpush1.bf16.msra.mxu0 0
      %3531 = vmatprep.subr.bf16.mxu0 0
      %3532 = vmatpush1.bf16.msra.mxu0 0
      %3533 = vmatprep.subr.bf16.mxu0 0
      %3534 = vmatpush1.bf16.msra.mxu0 0
      %3535 = vmatprep.subr.bf16.mxu0 0
      %3536 = vmatpush1.bf16.msra.mxu0 0
      %3537 = vmatprep.subr.bf16.mxu0 0
      %3538 = vmatpush1.bf16.msra.mxu0 0
      %3539 = vmatprep.subr.bf16.mxu0 0
      %3540 = vmatpush1.bf16.msra.mxu0 0
      %3541 = vmatprep.subr.bf16.mxu0 0
      %3542 = vmatpush1.bf16.msra.mxu0 0
      %3543 = vmatprep.subr.bf16.mxu0 0
      %3544 = vmatpush1.bf16.msra.mxu0 0
      %3545 = vmatprep.mubr.bf16.mxu0 0
      %3546 = vmatmul.mubr.bf16.gmra.mrb[0].mxu0 %v3490
      %v3547 = vpop.f32.mrb[0].mxu0
      %v3548 = vadd.f32 0.0, %v3547
      %v3549 = vpop.f32.mrb[0].mxu0
      %v3550 = vpop.f32.mrb[0].mxu0
      %v3551 = vadd.f32 0.0, %v3550
      %v3552 = vpop.f32.mrb[0].mxu0
      %3553 = vmatprep.mubr.bf16.mxu0 0
      %3554 = vmatmul.mubr.bf16.gmra.mrb[0].mxu0 %v3493
      %v3555 = vpop.f32.mrb[0].mxu0
      %v3556 = vadd.f32 0.0, %v3555
      %v3557 = vpop.f32.mrb[0].mxu0
      %v3558 = vpop.f32.mrb[0].mxu0
      %v3559 = vadd.f32 0.0, %v3558
      %v3560 = vpop.f32.mrb[0].mxu0
      %3561 = vmatprep.mubr.bf16.mxu0 0
      %3562 = vmatmul.mubr.bf16.gmra.mrb[0].mxu0 %v3496
      %v3563 = vpop.f32.mrb[0].mxu0
      %v3564 = vadd.f32 0.0, %v3563
      %v3565 = vpop.f32.mrb[0].mxu0
      %v3566 = vpop.f32.mrb[0].mxu0
      %v3567 = vadd.f32 0.0, %v3566
      %v3568 = vpop.f32.mrb[0].mxu0
      %3569 = vmatprep.mubr.bf16.mxu0 0
      %3570 = vmatmul.mubr.bf16.gmra.mrb[0].mxu0 %v3499
      %v3571 = vpop.f32.mrb[0].mxu0
      %v3572 = vadd.f32 0.0, %v3571
      %v3573 = vpop.f32.mrb[0].mxu0
      %v3574 = vpop.f32.mrb[0].mxu0
      %v3575 = vadd.f32 0.0, %v3574
      %v3576 = vpop.f32.mrb[0].mxu0
      %3577 = vmatprep.mubr.bf16.mxu0 0
      %3578 = vmatmul.mubr.bf16.gmra.mrb[0].mxu0 %v3502
      %v3579 = vpop.f32.mrb[0].mxu0
      %v3580 = vadd.f32 0.0, %v3579
      %v3581 = vpop.f32.mrb[0].mxu0
      %v3582 = vpop.f32.mrb[0].mxu0
      %v3583 = vadd.f32 0.0, %v3582
      %v3584 = vpop.f32.mrb[0].mxu0
      %3585 = vmatprep.mubr.bf16.mxu0 0
      %3586 = vmatmul.mubr.bf16.gmra.mrb[0].mxu0 %v3505
      %v3587 = vpop.f32.mrb[0].mxu0
      %v3588 = vadd.f32 0.0, %v3587
      %v3589 = vpop.f32.mrb[0].mxu0
      %v3590 = vpop.f32.mrb[0].mxu0
      %v3591 = vadd.f32 0.0, %v3590
      %v3592 = vpop.f32.mrb[0].mxu0
      %3593 = vmatprep.mubr.bf16.mxu0 0
      %3594 = vmatmul.mubr.bf16.gmra.mrb[0].mxu0 %v3508
      %v3595 = vpop.f32.mrb[0].mxu0
      %v3596 = vadd.f32 0.0, %v3595
      %v3597 = vpop.f32.mrb[0].mxu0
      %v3598 = vpop.f32.mrb[0].mxu0
      %v3599 = vadd.f32 0.0, %v3598
      %v3600 = vpop.f32.mrb[0].mxu0
      %3601 = vmatprep.mubr.bf16.mxu0 0
      %3602 = vmatmul.mubr.bf16.gmra.mrb[0].mxu0 %v3511
      %v3603 = vpop.f32.mrb[0].mxu0
      %v3604 = vadd.f32 0.0, %v3603
      %v3605 = vpop.f32.mrb[0].mxu0
      %v3606 = vpop.f32.mrb[0].mxu0
      %v3607 = vadd.f32 0.0, %v3606
      %v3608 = vpop.f32.mrb[0].mxu0
      %3609 = vdwg.mxu0
      %v3610 = vadd.f32 %v3441, %v3548
      %v3611 = vadd.f32 %v3442, %v3551
      %v3612 = vadd.f32 %v3443, %v3556
      %v3613 = vadd.f32 %v3444, %v3559
      %v3614 = vadd.f32 %v3445, %v3564
      %v3615 = vadd.f32 %v3446, %v3567
      %v3616 = vadd.f32 %v3447, %v3572
      %v3617 = vadd.f32 %v3448, %v3575
      %v3618 = vadd.f32 %v3449, %v3580
      %v3619 = vadd.f32 %v3450, %v3583
      %v3620 = vadd.f32 %v3451, %v3588
      %v3621 = vadd.f32 %v3452, %v3591
      %v3622 = vadd.f32 %v3453, %v3596
      %v3623 = vadd.f32 %v3454, %v3599
      %v3624 = vadd.f32 %v3455, %v3604
      %v3625 = vadd.f32 %v3456, %v3607
      %v3626 = vld [vmem:[%s3287 + $0x2] sm:$0xff]
      %v3627 = vld [vmem:[%s3287 + $0xa] sm:$0xff]
      %v3628 = vld [vmem:[%s3287 + $0x1a] sm:$0xff]
      %v3629 = vld [vmem:[%s3287 + $0x22] sm:$0xff]
      %v3630 = vld [vmem:[%s3287 + $0x32] sm:$0xff]
      %v3631 = vld [vmem:[%s3287 + $0x3a] sm:$0xff]
      %v3632 = vld [vmem:[%s3287 + $0x4a] sm:$0xff]
      %v3633 = vld [vmem:[%s3287 + $0x52] sm:$0xff]
      %v3634 = vld [vmem:[%s3287 + $0x62] sm:$0xff]
      %v3635 = vld [vmem:[%s3287 + $0x6a] sm:$0xff]
      %v3636 = vld [vmem:[%s3287 + $0x7a] sm:$0xff]
      %v3637 = vld [vmem:[%s3287 + $0x82] sm:$0xff]
      %v3638 = vld [vmem:[%s3287 + $0x92] sm:$0xff]
      %v3639 = vld [vmem:[%s3287 + $0x9a] sm:$0xff]
      %v3640 = vld [vmem:[%s3287 + $0xaa] sm:$0xff]
      %v3641 = vld [vmem:[%s3287 + $0xb2] sm:$0xff]
      %v3642 = vld [vmem:[%s4 + $0x40] sm:$0xf]
      %v3643 = vld [vmem:[%s4 + $0x44] sm:$0xf]
      %v3644 = vpack.c.bf16 %v3627, %v3626
      %v3645 = vpack.c.bf16 %v3629, %v3628
      %v3646 = vpack.c.bf16 %v3631, %v3630
      %v3647 = vpack.c.bf16 %v3633, %v3632
      %v3648 = vpack.c.bf16 %v3635, %v3634
      %v3649 = vpack.c.bf16 %v3637, %v3636
      %v3650 = vpack.c.bf16 %v3639, %v3638
      %v3651 = vpack.c.bf16 %v3641, %v3640
      %v3654 = vunpack.c.l.b16 %v3642
      %v3655 = vunpack.c.l.b16 %v3643
      %v3656 = vpack.c.b16 %v3655, %v3654
      %v3659 = vsel %vm1980, %v3644, 0
      %v3662 = vsel %vm1980, %v3645, 0
      %v3665 = vsel %vm1980, %v3646, 0
      %v3668 = vsel %vm1980, %v3647, 0
      %v3671 = vsel %vm1980, %v3648, 0
      %v3674 = vsel %vm1980, %v3649, 0
      %v3677 = vsel %vm1980, %v3650, 0
      %v3680 = vsel %vm1980, %v3651, 0
      %3682 = vmatprep.subr.bf16.mxu0 0
      %3683 = vmatpush1.bf16.msra.mxu0 %v3656
      %3684 = vmatprep.subr.bf16.mxu0 0
      %3685 = vmatpush1.bf16.msra.mxu0 0
      %3686 = vmatprep.subr.bf16.mxu0 0
      %3687 = vmatpush1.bf16.msra.mxu0 0
      %3688 = vmatprep.subr.bf16.mxu0 0
      %3689 = vmatpush1.bf16.msra.mxu0 0
      %3690 = vmatprep.subr.bf16.mxu0 0
      %3691 = vmatpush1.bf16.msra.mxu0 0
      %3692 = vmatprep.subr.bf16.mxu0 0
      %3693 = vmatpush1.bf16.msra.mxu0 0
      %3694 = vmatprep.subr.bf16.mxu0 0
      %3695 = vmatpush1.bf16.msra.mxu0 0
      %3696 = vmatprep.subr.bf16.mxu0 0
      %3697 = vmatpush1.bf16.msra.mxu0 0
      %3698 = vmatprep.subr.bf16.mxu0 0
      %3699 = vmatpush1.bf16.msra.mxu0 0
      %3700 = vmatprep.subr.bf16.mxu0 0
      %3701 = vmatpush1.bf16.msra.mxu0 0
      %3702 = vmatprep.subr.bf16.mxu0 0
      %3703 = vmatpush1.bf16.msra.mxu0 0
      %3704 = vmatprep.subr.bf16.mxu0 0
      %3705 = vmatpush1.bf16.msra.mxu0 0
      %3706 = vmatprep.subr.bf16.mxu0 0
      %3707 = vmatpush1.bf16.msra.mxu0 0
      %3708 = vmatprep.subr.bf16.mxu0 0
      %3709 = vmatpush1.bf16.msra.mxu0 0
      %3710 = vmatprep.subr.bf16.mxu0 0
      %3711 = vmatpush1.bf16.msra.mxu0 0
      %3712 = vmatprep.subr.bf16.mxu0 0
      %3713 = vmatpush1.bf16.msra.mxu0 0
      %3714 = vmatprep.mubr.bf16.mxu0 0
      %3715 = vmatmul.mubr.bf16.gmra.mrb[0].mxu0 %v3659
      %v3716 = vpop.f32.mrb[0].mxu0
      %v3717 = vadd.f32 0.0, %v3716
      %v3718 = vpop.f32.mrb[0].mxu0
      %v3719 = vpop.f32.mrb[0].mxu0
      %v3720 = vadd.f32 0.0, %v3719
      %v3721 = vpop.f32.mrb[0].mxu0
      %3722 = vmatprep.mubr.bf16.mxu0 0
      %3723 = vmatmul.mubr.bf16.gmra.mrb[0].mxu0 %v3662
      %v3724 = vpop.f32.mrb[0].mxu0
      %v3725 = vadd.f32 0.0, %v3724
      %v3726 = vpop.f32.mrb[0].mxu0
      %v3727 = vpop.f32.mrb[0].mxu0
      %v3728 = vadd.f32 0.0, %v3727
      %v3729 = vpop.f32.mrb[0].mxu0
      %3730 = vmatprep.mubr.bf16.mxu0 0
      %3731 = vmatmul.mubr.bf16.gmra.mrb[0].mxu0 %v3665
      %v3732 = vpop.f32.mrb[0].mxu0
      %v3733 = vadd.f32 0.0, %v3732
      %v3734 = vpop.f32.mrb[0].mxu0
      %v3735 = vpop.f32.mrb[0].mxu0
      %v3736 = vadd.f32 0.0, %v3735
      %v3737 = vpop.f32.mrb[0].mxu0
      %3738 = vmatprep.mubr.bf16.mxu0 0
      %3739 = vmatmul.mubr.bf16.gmra.mrb[0].mxu0 %v3668
      %v3740 = vpop.f32.mrb[0].mxu0
      %v3741 = vadd.f32 0.0, %v3740
      %v3742 = vpop.f32.mrb[0].mxu0
      %v3743 = vpop.f32.mrb[0].mxu0
      %v3744 = vadd.f32 0.0, %v3743
      %v3745 = vpop.f32.mrb[0].mxu0
      %3746 = vmatprep.mubr.bf16.mxu0 0
      %3747 = vmatmul.mubr.bf16.gmra.mrb[0].mxu0 %v3671
      %v3748 = vpop.f32.mrb[0].mxu0
      %v3749 = vadd.f32 0.0, %v3748
      %v3750 = vpop.f32.mrb[0].mxu0
      %v3751 = vpop.f32.mrb[0].mxu0
      %v3752 = vadd.f32 0.0, %v3751
      %v3753 = vpop.f32.mrb[0].mxu0
      %3754 = vmatprep.mubr.bf16.mxu0 0
      %3755 = vmatmul.mubr.bf16.gmra.mrb[0].mxu0 %v3674
      %v3756 = vpop.f32.mrb[0].mxu0
      %v3757 = vadd.f32 0.0, %v3756
      %v3758 = vpop.f32.mrb[0].mxu0
      %v3759 = vpop.f32.mrb[0].mxu0
      %v3760 = vadd.f32 0.0, %v3759
      %v3761 = vpop.f32.mrb[0].mxu0
      %3762 = vmatprep.mubr.bf16.mxu0 0
      %3763 = vmatmul.mubr.bf16.gmra.mrb[0].mxu0 %v3677
      %v3764 = vpop.f32.mrb[0].mxu0
      %v3765 = vadd.f32 0.0, %v3764
      %v3766 = vpop.f32.mrb[0].mxu0
      %v3767 = vpop.f32.mrb[0].mxu0
      %v3768 = vadd.f32 0.0, %v3767
      %v3769 = vpop.f32.mrb[0].mxu0
      %3770 = vmatprep.mubr.bf16.mxu0 0
      %3771 = vmatmul.mubr.bf16.gmra.mrb[0].mxu0 %v3680
      %v3772 = vpop.f32.mrb[0].mxu0
      %v3773 = vadd.f32 0.0, %v3772
      %v3774 = vpop.f32.mrb[0].mxu0
      %v3775 = vpop.f32.mrb[0].mxu0
      %v3776 = vadd.f32 0.0, %v3775
      %v3777 = vpop.f32.mrb[0].mxu0
      %3778 = vdwg.mxu0
      %v3779 = vadd.f32 %v3610, %v3717
      %v3780 = vadd.f32 %v3611, %v3720
      %v3781 = vadd.f32 %v3612, %v3725
      %v3782 = vadd.f32 %v3613, %v3728
      %v3783 = vadd.f32 %v3614, %v3733
      %v3784 = vadd.f32 %v3615, %v3736
      %v3785 = vadd.f32 %v3616, %v3741
      %v3786 = vadd.f32 %v3617, %v3744
      %v3787 = vadd.f32 %v3618, %v3749
      %v3788 = vadd.f32 %v3619, %v3752
      %v3789 = vadd.f32 %v3620, %v3757
      %v3790 = vadd.f32 %v3621, %v3760
      %v3791 = vadd.f32 %v3622, %v3765
      %v3792 = vadd.f32 %v3623, %v3768
      %v3793 = vadd.f32 %v3624, %v3773
      %v3794 = vadd.f32 %v3625, %v3776
      %v3795 = vld [vmem:[%s5] sm:$0x1]
      %v3797 = vlaneseq
      %v3798 = vshrl.u32 %v3797, 7
      %v3799 = vsub.s32 0, %v3798
      %v3800 = vrot.slane %v3795, %v3799
      %v3802 = vadd.f32 %v3779, %v3800
      %v3803 = vadd.f32 %v3780, %v3800
      %v3804 = vadd.f32 %v3781, %v3800
      %v3805 = vadd.f32 %v3782, %v3800
      %v3806 = vadd.f32 %v3783, %v3800
      %v3807 = vadd.f32 %v3784, %v3800
      %v3808 = vadd.f32 %v3785, %v3800
      %v3809 = vadd.f32 %v3786, %v3800
      %v3810 = vadd.f32 %v3787, %v3800
      %v3811 = vadd.f32 %v3788, %v3800
      %v3812 = vadd.f32 %v3789, %v3800
      %v3813 = vadd.f32 %v3790, %v3800
      %v3814 = vadd.f32 %v3791, %v3800
      %v3815 = vadd.f32 %v3792, %v3800
      %v3816 = vadd.f32 %v3793, %v3800
      %v3817 = vadd.f32 %v3794, %v3800
      %v3818 = vmul.f32 %v3802, %v3802
      %v3819 = vmul.f32 %v3803, %v3803
      %v3820 = vmul.f32 %v3804, %v3804
      %v3821 = vmul.f32 %v3805, %v3805
      %v3822 = vmul.f32 %v3806, %v3806
      %v3823 = vmul.f32 %v3807, %v3807
      %v3824 = vmul.f32 %v3808, %v3808
      %v3825 = vmul.f32 %v3809, %v3809
      %v3826 = vmul.f32 %v3810, %v3810
      %v3827 = vmul.f32 %v3811, %v3811
      %v3828 = vmul.f32 %v3812, %v3812
      %v3829 = vmul.f32 %v3813, %v3813
      %v3830 = vmul.f32 %v3814, %v3814
      %v3831 = vmul.f32 %v3815, %v3815
      %v3832 = vmul.f32 %v3816, %v3816
      %v3833 = vmul.f32 %v3817, %v3817
      %v3834 = vsel %vm1980, %v3818, 0.0
      %3835 = vadd.xlane.f32.xlu0 %v3834
      %v3836 = vpop.xlane.xlu0 %3835
      %v3837 = vsel %vm1980, %v3819, 0.0
      %3838 = vadd.xlane.f32.xlu0 %v3837
      %v3839 = vpop.xlane.xlu0 %3838
      %v3840 = vsel %vm1980, %v3820, 0.0
      %3841 = vadd.xlane.f32.xlu0 %v3840
      %v3842 = vpop.xlane.xlu0 %3841
      %v3843 = vsel %vm1980, %v3821, 0.0
      %3844 = vadd.xlane.f32.xlu0 %v3843
      %v3845 = vpop.xlane.xlu0 %3844
      %v3846 = vsel %vm1980, %v3822, 0.0
      %3847 = vadd.xlane.f32.xlu0 %v3846
      %v3848 = vpop.xlane.xlu0 %3847
      %v3849 = vsel %vm1980, %v3823, 0.0
      %3850 = vadd.xlane.f32.xlu0 %v3849
      %v3851 = vpop.xlane.xlu0 %3850
      %v3852 = vsel %vm1980, %v3824, 0.0
      %3853 = vadd.xlane.f32.xlu0 %v3852
      %v3854 = vpop.xlane.xlu0 %3853
      %v3855 = vsel %vm1980, %v3825, 0.0
      %3856 = vadd.xlane.f32.xlu0 %v3855
      %v3857 = vpop.xlane.xlu0 %3856
      %v3858 = vsel %vm1980, %v3826, 0.0
      %3859 = vadd.xlane.f32.xlu0 %v3858
      %v3860 = vpop.xlane.xlu0 %3859
      %v3861 = vsel %vm1980, %v3827, 0.0
      %3862 = vadd.xlane.f32.xlu0 %v3861
      %v3863 = vpop.xlane.xlu0 %3862
      %v3864 = vsel %vm1980, %v3828, 0.0
      %3865 = vadd.xlane.f32.xlu0 %v3864
      %v3866 = vpop.xlane.xlu0 %3865
      %v3867 = vsel %vm1980, %v3829, 0.0
      %3868 = vadd.xlane.f32.xlu0 %v3867
      %v3869 = vpop.xlane.xlu0 %3868
      %v3870 = vsel %vm1980, %v3830, 0.0
      %3871 = vadd.xlane.f32.xlu0 %v3870
      %v3872 = vpop.xlane.xlu0 %3871
      %v3873 = vsel %vm1980, %v3831, 0.0
      %3874 = vadd.xlane.f32.xlu0 %v3873
      %v3875 = vpop.xlane.xlu0 %3874
      %v3876 = vsel %vm1980, %v3832, 0.0
      %3877 = vadd.xlane.f32.xlu0 %v3876
      %v3878 = vpop.xlane.xlu0 %3877
      %v3879 = vsel %vm1980, %v3833, 0.0
      %3880 = vadd.xlane.f32.xlu0 %v3879
      %v3881 = vpop.xlane.xlu0 %3880
      %v3882 = vmul.f32 %v3836, %v2041
      %v3883 = vmul.f32 %v3839, %v2041
      %v3884 = vmul.f32 %v3842, %v2041
      %v3885 = vmul.f32 %v3845, %v2041
      %v3886 = vmul.f32 %v3848, %v2041
      %v3887 = vmul.f32 %v3851, %v2041
      %v3888 = vmul.f32 %v3854, %v2041
      %v3889 = vmul.f32 %v3857, %v2041
      %v3890 = vmul.f32 %v3860, %v2041
      %v3891 = vmul.f32 %v3863, %v2041
      %v3892 = vmul.f32 %v3866, %v2041
      %v3893 = vmul.f32 %v3869, %v2041
      %v3894 = vmul.f32 %v3872, %v2041
      %v3895 = vmul.f32 %v3875, %v2041
      %v3896 = vmul.f32 %v3878, %v2041
      %v3897 = vmul.f32 %v3881, %v2041
      %v3898 = vadd.f32 %v3882, 1e-08
      %v3899 = vadd.f32 %v3883, 1e-08
      %v3900 = vadd.f32 %v3884, 1e-08
      %v3901 = vadd.f32 %v3885, 1e-08
      %v3902 = vadd.f32 %v3886, 1e-08
      %v3903 = vadd.f32 %v3887, 1e-08
      %v3904 = vadd.f32 %v3888, 1e-08
      %v3905 = vadd.f32 %v3889, 1e-08
      %v3906 = vadd.f32 %v3890, 1e-08
      %v3907 = vadd.f32 %v3891, 1e-08
      %v3908 = vadd.f32 %v3892, 1e-08
      %v3909 = vadd.f32 %v3893, 1e-08
      %v3910 = vadd.f32 %v3894, 1e-08
      %v3911 = vadd.f32 %v3895, 1e-08
      %v3912 = vadd.f32 %v3896, 1e-08
      %v3913 = vadd.f32 %v3897, 1e-08
      %v3914 = vrsqrt.pop %v3898
      %v3915 = vrsqrt.pop %v3899
      %v3916 = vrsqrt.pop %v3900
      %v3917 = vrsqrt.pop %v3901
      %v3918 = vrsqrt.pop %v3902
      %v3919 = vrsqrt.pop %v3903
      %v3920 = vrsqrt.pop %v3904
      %v3921 = vrsqrt.pop %v3905
      %v3922 = vrsqrt.pop %v3906
      %v3923 = vrsqrt.pop %v3907
      %v3924 = vrsqrt.pop %v3908
      %v3925 = vrsqrt.pop %v3909
      %v3926 = vrsqrt.pop %v3910
      %v3927 = vrsqrt.pop %v3911
      %v3928 = vrsqrt.pop %v3912
      %v3929 = vrsqrt.pop %v3913
      %v3930 = vmul.f32 %v3802, %v3914
      %v3931 = vmul.f32 %v3803, %v3915
      %v3932 = vmul.f32 %v3804, %v3916
      %v3933 = vmul.f32 %v3805, %v3917
      %v3934 = vmul.f32 %v3806, %v3918
      %v3935 = vmul.f32 %v3807, %v3919
      %v3936 = vmul.f32 %v3808, %v3920
      %v3937 = vmul.f32 %v3809, %v3921
      %v3938 = vmul.f32 %v3810, %v3922
      %v3939 = vmul.f32 %v3811, %v3923
      %v3940 = vmul.f32 %v3812, %v3924
      %v3941 = vmul.f32 %v3813, %v3925
      %v3942 = vmul.f32 %v3814, %v3926
      %v3943 = vmul.f32 %v3815, %v3927
      %v3944 = vmul.f32 %v3816, %v3928
      %v3945 = vmul.f32 %v3817, %v3929
      %vm3946 = vcmp.ge.f32.partialorder %v3930, 0.0
      %vm3947 = vcmp.ge.f32.partialorder %v3931, 0.0
      %vm3948 = vcmp.ge.f32.partialorder %v3932, 0.0
      %vm3949 = vcmp.ge.f32.partialorder %v3933, 0.0
      %vm3950 = vcmp.ge.f32.partialorder %v3934, 0.0
      %vm3951 = vcmp.ge.f32.partialorder %v3935, 0.0
      %vm3952 = vcmp.ge.f32.partialorder %v3936, 0.0
      %vm3953 = vcmp.ge.f32.partialorder %v3937, 0.0
      %vm3954 = vcmp.ge.f32.partialorder %v3938, 0.0
      %vm3955 = vcmp.ge.f32.partialorder %v3939, 0.0
      %vm3956 = vcmp.ge.f32.partialorder %v3940, 0.0
      %vm3957 = vcmp.ge.f32.partialorder %v3941, 0.0
      %vm3958 = vcmp.ge.f32.partialorder %v3942, 0.0
      %vm3959 = vcmp.ge.f32.partialorder %v3943, 0.0
      %vm3960 = vcmp.ge.f32.partialorder %v3944, 0.0
      %vm3961 = vcmp.ge.f32.partialorder %v3945, 0.0
      %v3962 = vmul.f32 %v3930, 0.2
      %v3963 = vmul.f32 %v3931, 0.2
      %v3964 = vmul.f32 %v3932, 0.2
      %v3965 = vmul.f32 %v3933, 0.2
      %v3966 = vmul.f32 %v3934, 0.2
      %v3967 = vmul.f32 %v3935, 0.2
      %v3968 = vmul.f32 %v3936, 0.2
      %v3969 = vmul.f32 %v3937, 0.2
      %v3970 = vmul.f32 %v3938, 0.2
      %v3971 = vmul.f32 %v3939, 0.2
      %v3972 = vmul.f32 %v3940, 0.2
      %v3973 = vmul.f32 %v3941, 0.2
      %v3974 = vmul.f32 %v3942, 0.2
      %v3975 = vmul.f32 %v3943, 0.2
      %v3976 = vmul.f32 %v3944, 0.2
      %v3977 = vmul.f32 %v3945, 0.2
      %v3978 = vsel %vm3946, %v3930, %v3962
      %v3979 = vsel %vm3947, %v3931, %v3963
      %v3980 = vsel %vm3948, %v3932, %v3964
      %v3981 = vsel %vm3949, %v3933, %v3965
      %v3982 = vsel %vm3950, %v3934, %v3966
      %v3983 = vsel %vm3951, %v3935, %v3967
      %v3984 = vsel %vm3952, %v3936, %v3968
      %v3985 = vsel %vm3953, %v3937, %v3969
      %v3986 = vsel %vm3954, %v3938, %v3970
      %v3987 = vsel %vm3955, %v3939, %v3971
      %v3988 = vsel %vm3956, %v3940, %v3972
      %v3989 = vsel %vm3957, %v3941, %v3973
      %v3990 = vsel %vm3958, %v3942, %v3974
      %v3991 = vsel %vm3959, %v3943, %v3975
      %v3992 = vsel %vm3960, %v3944, %v3976
      %v3993 = vsel %vm3961, %v3945, %v3977
      %3994 = vst.msk [vmem:[%s372] sm:$0xff] %vm1980, %v3978
      %3995 = vst.msk [vmem:[%s372 + $0x8] sm:$0xff] %vm1980, %v3979
      %3996 = vst.msk [vmem:[%s372 + $0x10] sm:$0xff] %vm1980, %v3980
      %3997 = vst.msk [vmem:[%s372 + $0x18] sm:$0xff] %vm1980, %v3981
      %3998 = vst.msk [vmem:[%s372 + $0x20] sm:$0xff] %vm1980, %v3982
      %3999 = vst.msk [vmem:[%s372 + $0x28] sm:$0xff] %vm1980, %v3983
      %4000 = vst.msk [vmem:[%s372 + $0x30] sm:$0xff] %vm1980, %v3984
      %4001 = vst.msk [vmem:[%s372 + $0x38] sm:$0xff] %vm1980, %v3985
      %4002 = vst.msk [vmem:[%s372 + $0x40] sm:$0xff] %vm1980, %v3986
      %4003 = vst.msk [vmem:[%s372 + $0x48] sm:$0xff] %vm1980, %v3987
      %4004 = vst.msk [vmem:[%s372 + $0x50] sm:$0xff] %vm1980, %v3988
      %4005 = vst.msk [vmem:[%s372 + $0x58] sm:$0xff] %vm1980, %v3989
      %4006 = vst.msk [vmem:[%s372 + $0x60] sm:$0xff] %vm1980, %v3990
      %4007 = vst.msk [vmem:[%s372 + $0x68] sm:$0xff] %vm1980, %v3991
      %4008 = vst.msk [vmem:[%s372 + $0x70] sm:$0xff] %vm1980, %v3992
      %4009 = vst.msk [vmem:[%s372 + $0x78] sm:$0xff] %vm1980, %v3993
      %s4010 = smul.u32 8, %s22
      %p4011 = scmp.lt.s32.totalorder %s21, 1
      %s4012 = scalar_select %p4011, %s21, 1
      %p4013 = scmp.lt.s32.totalorder %s4010, 15
      %s4014 = scalar_select %p4013, %s4010, 15
      %s4015 = smul.addr %s4014, 2
      %s4016 = smul.addr %s4012, 32
      %s4017 = sadd.s32 %s4015, %s4016
      %s4018 = smul.addr %s4017, 8
      %s4019 = scalar_lea.vmem %s6, %s4018
      // Predicated region
      $region45: #{resl_block_forward.1} parent=43 // pred_check
        %p4020 = pneg %p193
      $region46: #{resl_block_forward.1} parent=43 // pred_check_branch
        %4022 = sbr.rel (%p4020) target = $region48
      $region47: #{resl_block_forward.1} parent=43 // pred_region
        %s4023 = smul.u32 8, %s22
      $region48: #{resl_block_forward.1} parent=43 // pred_fallthru
        _
    $region44: #{resl_block_forward.1} parent=5 // pred_fallthru
      _
    %p4024 = scmp.le.s32.totalorder 2, %s12
    // Predicated region
    $region49: #{resl_block_forward.1} parent=5 // pred_check
      %p4025 = pneg %p4024
    $region50: #{resl_block_forward.1} parent=5 // pred_check_branch
      %4027 = sbr.rel (%p4025) target = $region52
    $region51: #{resl_block_forward.1} parent=5 // pred_region
      %s4028 = ssub.s32 %s12, 2
      // Predicated region
      $region53: #{resl_block_forward.1} parent=51 // pred_check
        %p4029 = pneg %p199
      $region54: #{resl_block_forward.1} parent=51 // pred_check_branch
        %4031 = sbr.rel (%p4029) target = $region56
      $region55: #{resl_block_forward.1} parent=51 // pred_region
        %s4032 = smul.u32 8, %s24
        %p4033 = scmp.lt.s32.totalorder %s23, 1
        %s4034 = scalar_select %p4033, %s23, 1
        %p4035 = scmp.lt.s32.totalorder %s4032, 15
        %s4036 = scalar_select %p4035, %s4032, 15
        %s4037 = smul.addr %s4036, 2
        %s4038 = smul.addr %s4034, 32
        %s4039 = sadd.s32 %s4037, %s4038
        %s4040 = smul.addr %s4039, 8
        %s4041 = scalar_lea.vmem %s6, %s4040
      $region56: #{resl_block_forward.1} parent=51 // pred_fallthru
        _
    $region52: #{resl_block_forward.1} parent=5 // pred_fallthru
      _
  $region6: #{resl_block_forward.1} parent=0 // loop_footer
    %s16 = sadd.s32 1, %s12
  $region7: #{resl_block_forward.1} parent=0 // loop_footer_branch
    %11 = sbr.rel target = $region3
  $region8: #{resl_block_forward.1} parent=0 // loop_exit
    _

</llo_original>
